<compile_context>
chip_gen: v5e
topology: v5e:2x2
jax: 0.10.0
libtpu: 0.0.40
codegen_flags: <defaults>
</compile_context>

<pallas_src>
import functools

import jax
import jax.numpy as jnp
from jax.experimental import pallas as pl
from jax.experimental.pallas import tpu as pltpu


# ----------------------------- Pallas kernel -------------------------------- #
def decoder_rnn_kernel(
    enc_ref, start_ref,
    w_emb_ref, b_emb_ref,
    w_enc_ref, b_enc_ref,
    w_ihg_ref, w_hhg_ref, b_gates_ref,
    w_seqout_ref, b_seqout_ref,
    w_seq2_ref, b_seq2_ref,
    w_mass2_ref, b_mass2_ref,
    w_mass3_ref, b_mass3_ref,
    seq_ref, h_ref, c_ref, heads_ref,
    *, seq_len,
):
    def dot(a, b):  # default precision, f32 accumulate on the MXU
        return jnp.dot(a, b, preferred_element_type=jnp.float32)

    def lrelu(x):   # LeakyReLU(0.01)
        return jnp.where(x > 0, x, 0.01 * x)

    def sig(x):     # sigmoid as ONE native EUP tanh (vs exp + reciprocal + selects)
        return 0.5 * jnp.tanh(0.5 * x) + 0.5

    enc = enc_ref[...]                       # (Bb, L)
    Bb = enc.shape[0]
    HP = w_ihg_ref.shape[0]                  # lane-padded hidden width (128)

    # --- fused encoder-side projections: [lat2hid | lat2hid2 | fc_seq | fc_mass]
    t = lrelu(dot(enc, w_enc_ref[...]) + b_enc_ref[...])     # (Bb, 4*HP)
    h = t[:, 0 * HP:1 * HP]                                  # initial hidden   (lane-aligned)
    c = t[:, 1 * HP:2 * HP]                                  # initial cell
    seq_h = t[:, 2 * HP:3 * HP]                              # length-head features
    mass_h = t[:, 3 * HP:4 * HP]                             # mass-head features

    # --- start token embedding, broadcast over the batch block
    x0 = dot(start_ref[...], w_emb_ref[...]) + b_emb_ref[...]   # (1, HP), pad lanes = 0
    x = jnp.broadcast_to(x0, (Bb, HP))

    w_ihg = w_ihg_ref[...]                   # (HP, 4*HP), gate k at cols [k*HP, k*HP+H)
    w_hhg = w_hhg_ref[...]                   # (HP, 4*HP)
    # hoisted bias broadcast: the static unroll would otherwise re-emit it seq_len times
    b_gates = jnp.broadcast_to(b_gates_ref[...], (Bb, 4 * HP))

    # --- statically unrolled sequential decode loop (seq_len is compile-time)
    hs = []
    for _ in range(seq_len):
        xr = jnp.maximum(x, 0.0)                             # relu on the decoder input
        # two lane-aligned dots (no per-step concat/copy on the recurrence)
        g = dot(xr, w_ihg) + dot(h, w_hhg) + b_gates         # (Bb, 4*HP)
        i_g = sig(g[:, 0 * HP:1 * HP])                       # lane-aligned 128-wide slices
        f_g = sig(g[:, 1 * HP:2 * HP])
        g_g = jnp.tanh(g[:, 2 * HP:3 * HP])
        o_g = sig(g[:, 3 * HP:4 * HP])
        c = f_g * c + i_g * g_g                              # pad lanes stay exactly 0
        h = o_g * jnp.tanh(c)
        hs.append(h)                                         # keep h_t; out-proj hoisted below
        x = h                                                # next decoder input

    # --- output projection OFF the serial chain: one matmul vs block-diag(W_out) x T
    h_all = jnp.concatenate(hs, axis=-1)                     # (Bb, T*HP), lane-aligned slabs
    seq_ref[...] = dot(h_all, w_seqout_ref[...]) + b_seqout_ref[...]   # (Bb, T*O) lane-dense
    h_ref[...] = h                                           # (Bb, HP) lane-dense
    c_ref[...] = c

    # --- length head: (already lrelu'd) fc_seq -> fc_seq2 -> ReLU
    num = jnp.maximum(dot(seq_h, w_seq2_ref[...]) + b_seq2_ref[...], 0.0)   # (Bb, 1)

    # --- mass head: (already lrelu'd) fc_mass -> fc_mass2 -> LeakyReLU -> fc_mass3 -> softmax
    m = lrelu(dot(mass_h, w_mass2_ref[...]) + b_mass2_ref[...])
    m = dot(m, w_mass3_ref[...]) + b_mass3_ref[...]                         # (Bb, P)
    m = m - jnp.max(m, axis=-1, keepdims=True)
    e = jnp.exp(m)
    mass = e / jnp.sum(e, axis=-1, keepdims=True)            # exact recip; off crit path

    # --- tiny heads: zero the slab, then one offset-0 masked store of [num | mass]
    heads_ref[...] = jnp.zeros_like(heads_ref)
    nm = jnp.concatenate([num, mass], axis=-1)               # (Bb, 1+P)
    heads_ref[:, 0:nm.shape[1]] = nm


# ------------------------------ JAX wrapper ---------------------------------- #
def decoder_rnn_forward(encoder_hidden, params, seq_len, block_b=None):
    B, L = encoder_hidden.shape
    H = params["w_hh"].shape[0]
    O = params["w_out"].shape[1]
    P = params["w_mass3"].shape[1]
    HP = max(128, ((H + 127) // 128) * 128)             # lane-padded hidden width
    HEADW = ((1 + P + 127) // 128) * 128                # packed [num|mass] slab width
    f32 = jnp.float32

    def padc(w, n):  # pad columns (lanes) with zeros
        return jnp.pad(w, ((0, 0), (0, n - w.shape[1])))

    def padr(w, n):  # pad rows with zeros
        return jnp.pad(w, ((0, n - w.shape[0]), (0, 0)))

    def padb(w, nr, nc):
        return jnp.pad(w, ((0, nr - w.shape[0]), (0, nc - w.shape[1])))

    # fused encoder-side projection [lat2hid | lat2hid2 | fc_seq | fc_mass], lane-padded blocks
    w_enc = jnp.concatenate([padc(params["w_l2h"], HP), padc(params["w_l2h2"], HP),
                             padc(params["w_seq"], HP), padc(params["w_mass"], HP)], axis=1)
    b_enc = jnp.concatenate([padc(params["b_l2h"], HP), padc(params["b_l2h2"], HP),
                             padc(params["b_seq"], HP), padc(params["b_mass"], HP)], axis=1)

    # lane-aligned LSTM gate weights: gate k at cols [k*HP, k*HP+H); kept as separate
    # W_ih / W_hh halves so the kernel uses two dots (no per-step [x|h] concat/copy).
    def gate_blocks(w):  # (H, 4H) -> (HP, 4*HP)
        return jnp.concatenate(
            [padb(w[:, k * H:(k + 1) * H], HP, HP) for k in range(4)], axis=1)

    w_ihg = gate_blocks(params["w_ih"])                                   # (HP, 4*HP)
    w_hhg = gate_blocks(params["w_hh"])                                   # (HP, 4*HP)
    b_sum = params["b_ih"] + params["b_hh"]
    b_gates = jnp.concatenate(
        [padc(b_sum[:, k * H:(k + 1) * H], HP) for k in range(4)], axis=1)  # (1, 4*HP)

    # block-diagonal output weight: ONE post-loop matmul replaces T per-step out-projections
    w_out_p = padr(params["w_out"], HP)                                   # (HP, O), pad rows = 0
    w_seqout = jax.scipy.linalg.block_diag(*([w_out_p] * seq_len))        # (T*HP, T*O)
    b_seqout = jnp.tile(params["b_out"], (1, seq_len))                    # (1, T*O)

    args = (
        encoder_hidden, params["start_token"],
        padc(params["w_emb"], HP), padc(params["b_emb"], HP),
        w_enc, b_enc,
        w_ihg, w_hhg, b_gates,
        w_seqout, b_seqout,
        padr(params["w_seq2"], HP), params["b_seq2"],
        padb(params["w_mass2"], HP, HP), padc(params["b_mass2"], HP),
        padr(params["w_mass3"], HP), params["b_mass3"],
    )

    if block_b is None:
        # Small batches: one full block (grid=1, latency-bound anyway).
        # Larger batches: multiple-of-8 block that divides B and gives grid >= 2, so the
        # "parallel" batch axis can use the second TensorCore on v7x. Keeping blocks
        # modest (<=64 rows) also keeps the T=8 unroll's live h_t slabs register-resident.
        block_b = B
        if B >= 16 and B % 8 == 0:
            cand = min(64, max(8, ((B // 2 + 7) // 8) * 8))
            for bb in range(cand, 7, -8):
                if B % bb == 0:
                    block_b = bb
                    break
    grid = (pl.cdiv(B, block_b),)

    def batch_spec(cols):
        return pl.BlockSpec((block_b, cols), lambda i: (i, 0))

    def full_spec(shape):
        return pl.BlockSpec(shape, lambda i, _n=len(shape): (0,) * _n)

    in_specs = [batch_spec(L)] + [full_spec(a.shape) for a in args[1:]]

    out_shapes = (
        jax.ShapeDtypeStruct((B, seq_len * O), f32),   # lane-dense sequence slab
        jax.ShapeDtypeStruct((B, HP), f32),            # final h (lane padded)
        jax.ShapeDtypeStruct((B, HP), f32),            # final c (lane padded)
        jax.ShapeDtypeStruct((B, HEADW), f32),         # packed [num | mass | 0...]
    )
    out_specs = (
        batch_spec(seq_len * O),
        batch_spec(HP),
        batch_spec(HP),
        batch_spec(HEADW),
    )

    kernel = functools.partial(decoder_rnn_kernel, seq_len=seq_len)
    seq, h, c, heads = pl.pallas_call(
        kernel,
        out_shape=out_shapes,
        grid=grid,
        in_specs=in_specs,
        out_specs=out_specs,
        compiler_params=pltpu.CompilerParams(dimension_semantics=("parallel",)),
    )(*args)

    seq = seq.reshape(B, seq_len, O)                  # -> (B, seq_len, O), PyTorch convention
    h = h[:, :H]
    c = c[:, :H]
    num = heads[:, :1]
    mass = heads[:, 1:1 + P]
    return seq, (h[None], c[None]), num, mass         # hidden as (1, B, H) like nn.LSTM


# ---------------------------- pure-JAX reference ------------------------------ #
def decoder_rnn_reference(encoder_hidden, params, seq_len):
    lrelu = lambda x: jnp.where(x > 0, x, 0.01 * x)
    B = encoder_hidden.shape[0]
    H = params["w_hh"].shape[0]
    enc = encoder_hidden

    h = lrelu(enc @ params["w_l2h"] + params["b_l2h"])
    c = lrelu(enc @ params["w_l2h2"] + params["b_l2h2"])
    x = jnp.broadcast_to(params["start_token"] @ params["w_emb"] + params["b_emb"], (B, H))

    outs = []
    for _ in range(seq_len):
        xr = jnp.maximum(x, 0.0)
        g = xr @ params["w_ih"] + params["b_ih"] + h @ params["w_hh"] + params["b_hh"]
        i_g = jax.nn.sigmoid(g[:, :H])
        f_g = jax.nn.sigmoid(g[:, H:2 * H])
        g_g = jnp.tanh(g[:, 2 * H:3 * H])
        o_g = jax.nn.sigmoid(g[:, 3 * H:])
        c = f_g * c + i_g * g_g
        h = o_g * jnp.tanh(c)
        x = h
        outs.append(h @ params["w_out"] + params["b_out"])
    seq = jnp.stack(outs, axis=1)

    num = lrelu(enc @ params["w_seq"] + params["b_seq"])
    num = jnp.maximum(num @ params["w_seq2"] + params["b_seq2"], 0.0)

    m = lrelu(enc @ params["w_mass"] + params["b_mass"])
    m = lrelu(m @ params["w_mass2"] + params["b_mass2"])
    m = m @ params["w_mass3"] + params["b_mass3"]
    mass = jax.nn.softmax(m, axis=-1)
    return seq, (h[None], c[None]), num, mass


# ----------------------------- parameter init --------------------------------- #
def init_params(key, latent_dim, hidden_size, output_size, num_part):
    keys = iter(jax.random.split(key, 32))

    def lin(din, dout, scale=0.3):
        w = jax.random.uniform(next(keys), (din, dout), jnp.float32, -scale, scale)
        b = jax.random.uniform(next(keys), (1, dout), jnp.float32, -scale, scale)
        return w, b

    p = {}
    p["start_token"] = jax.random.normal(next(keys), (1, output_size), jnp.float32)
    p["w_emb"], p["b_emb"] = lin(output_size, hidden_size)
    p["w_l2h"], p["b_l2h"] = lin(latent_dim, hidden_size)
    p["w_l2h2"], p["b_l2h2"] = lin(latent_dim, hidden_size)
    p["w_ih"], p["b_ih"] = lin(hidden_size, 4 * hidden_size, scale=1.0 / hidden_size ** 0.5)
    p["w_hh"], p["b_hh"] = lin(hidden_size, 4 * hidden_size, scale=1.0 / hidden_size ** 0.5)
    p["w_out"], p["b_out"] = lin(hidden_size, output_size)
    p["w_seq"], p["b_seq"] = lin(latent_dim, hidden_size)
    p["w_seq2"], p["b_seq2"] = lin(hidden_size, 1)
    p["w_mass"], p["b_mass"] = lin(latent_dim, hidden_size)
    p["w_mass2"], p["b_mass2"] = lin(hidden_size, hidden_size)
    p["w_mass3"], p["b_mass3"] = lin(hidden_size, num_part)
    return p


# ---------------------------------- main -------------------------------------- #
if __name__ == "__main__":
    import numpy as np

    latent_dim, hidden_size, output_size, num_part = 8, 32, 16, 2
    batch, seq_len = 2, 8

    key = jax.random.PRNGKey(0)
    k_param, k_enc = jax.random.split(key)
    params = init_params(k_param, latent_dim, hidden_size, output_size, num_part)
    encoder_hidden = jax.random.normal(k_enc, (batch, latent_dim), jnp.float32)

    fwd = jax.jit(functools.partial(decoder_rnn_forward, seq_len=seq_len))
    seq, (h, c), num, mass = fwd(encoder_hidden, params)
    jax.block_until_ready((seq, h, c, num, mass))

    seq_r, (h_r, c_r), num_r, mass_r = decoder_rnn_reference(encoder_hidden, params, seq_len)

    np.testing.assert_allclose(np.asarray(seq), np.asarray(seq_r), rtol=1e-2, atol=1e-2)
    np.testing.assert_allclose(np.asarray(h), np.asarray(h_r), rtol=1e-2, atol=1e-2)
    np.testing.assert_allclose(np.asarray(c), np.asarray(c_r), rtol=1e-2, atol=1e-2)
    np.testing.assert_allclose(np.asarray(num), np.asarray(num_r), rtol=1e-2, atol=1e-2)
    np.testing.assert_allclose(np.asarray(mass), np.asarray(mass_r), rtol=1e-2, atol=1e-2)

    assert seq.shape == (batch, seq_len, output_size)
    assert h.shape == (1, batch, hidden_size) and c.shape == (1, batch, hidden_size)
    assert num.shape == (batch, 1) and mass.shape == (batch, num_part)

    print("KERNEL_OK")
</pallas_src>

<mosaic_0001>
module attributes {stable_mosaic.version = 11 : i64} {
  func.func @decoder_rnn_kernel(%arg0: i32, %arg1: memref<2x8xf32, #tpu.memory_space<vmem>>, %arg2: memref<1x16xf32, #tpu.memory_space<vmem>>, %arg3: memref<16x128xf32, #tpu.memory_space<vmem>>, %arg4: memref<1x128xf32, #tpu.memory_space<vmem>>, %arg5: memref<8x512xf32, #tpu.memory_space<vmem>>, %arg6: memref<1x512xf32, #tpu.memory_space<vmem>>, %arg7: memref<128x512xf32, #tpu.memory_space<vmem>>, %arg8: memref<128x512xf32, #tpu.memory_space<vmem>>, %arg9: memref<1x512xf32, #tpu.memory_space<vmem>>, %arg10: memref<1024x128xf32, #tpu.memory_space<vmem>>, %arg11: memref<1x128xf32, #tpu.memory_space<vmem>>, %arg12: memref<128x1xf32, #tpu.memory_space<vmem>>, %arg13: memref<1x1xf32, #tpu.memory_space<vmem>>, %arg14: memref<128x128xf32, #tpu.memory_space<vmem>>, %arg15: memref<1x128xf32, #tpu.memory_space<vmem>>, %arg16: memref<128x2xf32, #tpu.memory_space<vmem>>, %arg17: memref<1x2xf32, #tpu.memory_space<vmem>>, %arg18: memref<2x128xf32, #tpu.memory_space<vmem>>, %arg19: memref<2x128xf32, #tpu.memory_space<vmem>>, %arg20: memref<2x128xf32, #tpu.memory_space<vmem>>, %arg21: memref<2x128xf32, #tpu.memory_space<vmem>>) attributes {dimension_semantics = [#tpu.dimension_semantics<parallel>], iteration_bounds = array<i64: 1>, scalar_prefetch = 0 : i64, scratch_operands = 0 : i64, tpu.core_type = #tpu.core_type<tc>, window_params = [{transform_indices = @transform_0, window_bounds = array<i64: 2, 8>}, {pipeline_mode = #tpu.pipeline_mode<synchronous>, transform_indices = @transform_1, window_bounds = array<i64: 1, 16>}, {pipeline_mode = #tpu.pipeline_mode<synchronous>, transform_indices = @transform_2, window_bounds = array<i64: 16, 128>}, {pipeline_mode = #tpu.pipeline_mode<synchronous>, transform_indices = @transform_3, window_bounds = array<i64: 1, 128>}, {pipeline_mode = #tpu.pipeline_mode<synchronous>, transform_indices = @transform_4, window_bounds = array<i64: 8, 512>}, {pipeline_mode = #tpu.pipeline_mode<synchronous>, transform_indices = @transform_5, window_bounds = array<i64: 1, 512>}, {pipeline_mode = #tpu.pipeline_mode<synchronous>, transform_indices = @transform_6, window_bounds = array<i64: 128, 512>}, {pipeline_mode = #tpu.pipeline_mode<synchronous>, transform_indices = @transform_7, window_bounds = array<i64: 128, 512>}, {pipeline_mode = #tpu.pipeline_mode<synchronous>, transform_indices = @transform_8, window_bounds = array<i64: 1, 512>}, {pipeline_mode = #tpu.pipeline_mode<synchronous>, transform_indices = @transform_9, window_bounds = array<i64: 1024, 128>}, {pipeline_mode = #tpu.pipeline_mode<synchronous>, transform_indices = @transform_10, window_bounds = array<i64: 1, 128>}, {pipeline_mode = #tpu.pipeline_mode<synchronous>, transform_indices = @transform_11, window_bounds = array<i64: 128, 1>}, {pipeline_mode = #tpu.pipeline_mode<synchronous>, transform_indices = @transform_12, window_bounds = array<i64: 1, 1>}, {pipeline_mode = #tpu.pipeline_mode<synchronous>, transform_indices = @transform_13, window_bounds = array<i64: 128, 128>}, {pipeline_mode = #tpu.pipeline_mode<synchronous>, transform_indices = @transform_14, window_bounds = array<i64: 1, 128>}, {pipeline_mode = #tpu.pipeline_mode<synchronous>, transform_indices = @transform_15, window_bounds = array<i64: 128, 2>}, {pipeline_mode = #tpu.pipeline_mode<synchronous>, transform_indices = @transform_16, window_bounds = array<i64: 1, 2>}, {transform_indices = @transform_17, window_bounds = array<i64: 2, 128>}, {transform_indices = @transform_18, window_bounds = array<i64: 2, 128>}, {transform_indices = @transform_19, window_bounds = array<i64: 2, 128>}, {transform_indices = @transform_20, window_bounds = array<i64: 2, 128>}]} {
    %c0 = arith.constant 0 : index
    %c0_0 = arith.constant 0 : index
    %0 = vector.load %arg1[%c0, %c0_0] : memref<2x8xf32, #tpu.memory_space<vmem>>, vector<2x8xf32>
    %c0_1 = arith.constant 0 : index
    %c0_2 = arith.constant 0 : index
    %1 = vector.load %arg5[%c0_1, %c0_2] : memref<8x512xf32, #tpu.memory_space<vmem>>, vector<8x512xf32>
    %cst = arith.constant dense<0.000000e+00> : vector<2x512xf32>
    %2 = tpu.matmul %0, %1, %cst {dimension_numbers = #tpu.dot_dimension_numbers<[1], [0], [0], [1], [0, 0, 1, 1], [], []>} : vector<2x8xf32>, vector<8x512xf32>, vector<2x512xf32> -> vector<2x512xf32>
    %c0_3 = arith.constant 0 : index
    %c0_4 = arith.constant 0 : index
    %3 = vector.load %arg6[%c0_3, %c0_4] : memref<1x512xf32, #tpu.memory_space<vmem>>, vector<1x512xf32>
    %4 = vector.broadcast %3 : vector<1x512xf32> to vector<2x512xf32>
    %5 = arith.addf %2, %4 : vector<2x512xf32>
    %cst_5 = arith.constant 0.000000e+00 : f32
    %6 = vector.broadcast %cst_5 : f32 to vector<2x512xf32>
    %7 = arith.cmpf ogt, %5, %6 : vector<2x512xf32>
    %cst_6 = arith.constant 0.00999999977 : f32
    %8 = vector.broadcast %cst_6 : f32 to vector<2x512xf32>
    %9 = arith.mulf %8, %5 : vector<2x512xf32>
    %10 = arith.select %7, %5, %9 : vector<2x512xi1>, vector<2x512xf32>
    %11 = vector.extract_strided_slice %10 {offsets = [0, 0], sizes = [2, 128], strides = [1, 1]} : vector<2x512xf32> to vector<2x128xf32>
    %12 = vector.extract_strided_slice %10 {offsets = [0, 128], sizes = [2, 128], strides = [1, 1]} : vector<2x512xf32> to vector<2x128xf32>
    %13 = vector.extract_strided_slice %10 {offsets = [0, 256], sizes = [2, 128], strides = [1, 1]} : vector<2x512xf32> to vector<2x128xf32>
    %14 = vector.extract_strided_slice %10 {offsets = [0, 384], sizes = [2, 128], strides = [1, 1]} : vector<2x512xf32> to vector<2x128xf32>
    %c0_7 = arith.constant 0 : index
    %c0_8 = arith.constant 0 : index
    %15 = vector.load %arg2[%c0_7, %c0_8] : memref<1x16xf32, #tpu.memory_space<vmem>>, vector<1x16xf32>
    %c0_9 = arith.constant 0 : index
    %c0_10 = arith.constant 0 : index
    %16 = vector.load %arg3[%c0_9, %c0_10] : memref<16x128xf32, #tpu.memory_space<vmem>>, vector<16x128xf32>
    %cst_11 = arith.constant dense<0.000000e+00> : vector<1x128xf32>
    %17 = tpu.matmul %15, %16, %cst_11 {dimension_numbers = #tpu.dot_dimension_numbers<[1], [0], [0], [1], [0, 0, 1, 1], [], []>} : vector<1x16xf32>, vector<16x128xf32>, vector<1x128xf32> -> vector<1x128xf32>
    %c0_12 = arith.constant 0 : index
    %c0_13 = arith.constant 0 : index
    %18 = vector.load %arg4[%c0_12, %c0_13] : memref<1x128xf32, #tpu.memory_space<vmem>>, vector<1x128xf32>
    %19 = arith.addf %17, %18 : vector<1x128xf32>
    %20 = vector.shape_cast %19 : vector<1x128xf32> to vector<1x128xf32>
    %21 = vector.broadcast %20 : vector<1x128xf32> to vector<2x128xf32>
    %c0_14 = arith.constant 0 : index
    %c0_15 = arith.constant 0 : index
    %22 = vector.load %arg7[%c0_14, %c0_15] : memref<128x512xf32, #tpu.memory_space<vmem>>, vector<128x512xf32>
    %c0_16 = arith.constant 0 : index
    %c0_17 = arith.constant 0 : index
    %23 = vector.load %arg8[%c0_16, %c0_17] : memref<128x512xf32, #tpu.memory_space<vmem>>, vector<128x512xf32>
    %c0_18 = arith.constant 0 : index
    %c0_19 = arith.constant 0 : index
    %24 = vector.load %arg9[%c0_18, %c0_19] : memref<1x512xf32, #tpu.memory_space<vmem>>, vector<1x512xf32>
    %25 = vector.shape_cast %24 : vector<1x512xf32> to vector<1x512xf32>
    %26 = vector.broadcast %25 : vector<1x512xf32> to vector<2x512xf32>
    %cst_20 = arith.constant 0.000000e+00 : f32
    %27 = vector.broadcast %cst_20 : f32 to vector<2x128xf32>
    %28 = arith.maximumf %21, %27 : vector<2x128xf32>
    %cst_21 = arith.constant dense<0.000000e+00> : vector<2x512xf32>
    %29 = tpu.matmul %28, %22, %cst_21 {dimension_numbers = #tpu.dot_dimension_numbers<[1], [0], [0], [1], [0, 0, 1, 1], [], []>} : vector<2x128xf32>, vector<128x512xf32>, vector<2x512xf32> -> vector<2x512xf32>
    %cst_22 = arith.constant dense<0.000000e+00> : vector<2x512xf32>
    %30 = tpu.matmul %11, %23, %cst_22 {dimension_numbers = #tpu.dot_dimension_numbers<[1], [0], [0], [1], [0, 0, 1, 1], [], []>} : vector<2x128xf32>, vector<128x512xf32>, vector<2x512xf32> -> vector<2x512xf32>
    %31 = arith.addf %29, %30 : vector<2x512xf32>
    %32 = arith.addf %31, %26 : vector<2x512xf32>
    %33 = vector.extract_strided_slice %32 {offsets = [0, 0], sizes = [2, 128], strides = [1, 1]} : vector<2x512xf32> to vector<2x128xf32>
    %cst_23 = arith.constant 5.000000e-01 : f32
    %34 = vector.broadcast %cst_23 : f32 to vector<2x128xf32>
    %35 = arith.mulf %34, %33 : vector<2x128xf32>
    %36 = math.tanh %35 : vector<2x128xf32>
    %cst_24 = arith.constant 5.000000e-01 : f32
    %37 = vector.broadcast %cst_24 : f32 to vector<2x128xf32>
    %38 = arith.mulf %37, %36 : vector<2x128xf32>
    %cst_25 = arith.constant 5.000000e-01 : f32
    %39 = vector.broadcast %cst_25 : f32 to vector<2x128xf32>
    %40 = arith.addf %38, %39 : vector<2x128xf32>
    %41 = vector.extract_strided_slice %32 {offsets = [0, 128], sizes = [2, 128], strides = [1, 1]} : vector<2x512xf32> to vector<2x128xf32>
    %cst_26 = arith.constant 5.000000e-01 : f32
    %42 = vector.broadcast %cst_26 : f32 to vector<2x128xf32>
    %43 = arith.mulf %42, %41 : vector<2x128xf32>
    %44 = math.tanh %43 : vector<2x128xf32>
    %cst_27 = arith.constant 5.000000e-01 : f32
    %45 = vector.broadcast %cst_27 : f32 to vector<2x128xf32>
    %46 = arith.mulf %45, %44 : vector<2x128xf32>
    %cst_28 = arith.constant 5.000000e-01 : f32
    %47 = vector.broadcast %cst_28 : f32 to vector<2x128xf32>
    %48 = arith.addf %46, %47 : vector<2x128xf32>
    %49 = vector.extract_strided_slice %32 {offsets = [0, 256], sizes = [2, 128], strides = [1, 1]} : vector<2x512xf32> to vector<2x128xf32>
    %50 = math.tanh %49 : vector<2x128xf32>
    %51 = vector.extract_strided_slice %32 {offsets = [0, 384], sizes = [2, 128], strides = [1, 1]} : vector<2x512xf32> to vector<2x128xf32>
    %cst_29 = arith.constant 5.000000e-01 : f32
    %52 = vector.broadcast %cst_29 : f32 to vector<2x128xf32>
    %53 = arith.mulf %52, %51 : vector<2x128xf32>
    %54 = math.tanh %53 : vector<2x128xf32>
    %cst_30 = arith.constant 5.000000e-01 : f32
    %55 = vector.broadcast %cst_30 : f32 to vector<2x128xf32>
    %56 = arith.mulf %55, %54 : vector<2x128xf32>
    %cst_31 = arith.constant 5.000000e-01 : f32
    %57 = vector.broadcast %cst_31 : f32 to vector<2x128xf32>
    %58 = arith.addf %56, %57 : vector<2x128xf32>
    %59 = arith.mulf %48, %12 : vector<2x128xf32>
    %60 = arith.mulf %40, %50 : vector<2x128xf32>
    %61 = arith.addf %59, %60 : vector<2x128xf32>
    %62 = math.tanh %61 : vector<2x128xf32>
    %63 = arith.mulf %58, %62 : vector<2x128xf32>
    %cst_32 = arith.constant 0.000000e+00 : f32
    %64 = vector.broadcast %cst_32 : f32 to vector<2x128xf32>
    %65 = arith.maximumf %63, %64 : vector<2x128xf32>
    %cst_33 = arith.constant dense<0.000000e+00> : vector<2x512xf32>
    %66 = tpu.matmul %65, %22, %cst_33 {dimension_numbers = #tpu.dot_dimension_numbers<[1], [0], [0], [1], [0, 0, 1, 1], [], []>} : vector<2x128xf32>, vector<128x512xf32>, vector<2x512xf32> -> vector<2x512xf32>
    %cst_34 = arith.constant dense<0.000000e+00> : vector<2x512xf32>
    %67 = tpu.matmul %63, %23, %cst_34 {dimension_numbers = #tpu.dot_dimension_numbers<[1], [0], [0], [1], [0, 0, 1, 1], [], []>} : vector<2x128xf32>, vector<128x512xf32>, vector<2x512xf32> -> vector<2x512xf32>
    %68 = arith.addf %66, %67 : vector<2x512xf32>
    %69 = arith.addf %68, %26 : vector<2x512xf32>
    %70 = vector.extract_strided_slice %69 {offsets = [0, 0], sizes = [2, 128], strides = [1, 1]} : vector<2x512xf32> to vector<2x128xf32>
    %cst_35 = arith.constant 5.000000e-01 : f32
    %71 = vector.broadcast %cst_35 : f32 to vector<2x128xf32>
    %72 = arith.mulf %71, %70 : vector<2x128xf32>
    %73 = math.tanh %72 : vector<2x128xf32>
    %cst_36 = arith.constant 5.000000e-01 : f32
    %74 = vector.broadcast %cst_36 : f32 to vector<2x128xf32>
    %75 = arith.mulf %74, %73 : vector<2x128xf32>
    %cst_37 = arith.constant 5.000000e-01 : f32
    %76 = vector.broadcast %cst_37 : f32 to vector<2x128xf32>
    %77 = arith.addf %75, %76 : vector<2x128xf32>
    %78 = vector.extract_strided_slice %69 {offsets = [0, 128], sizes = [2, 128], strides = [1, 1]} : vector<2x512xf32> to vector<2x128xf32>
    %cst_38 = arith.constant 5.000000e-01 : f32
    %79 = vector.broadcast %cst_38 : f32 to vector<2x128xf32>
    %80 = arith.mulf %79, %78 : vector<2x128xf32>
    %81 = math.tanh %80 : vector<2x128xf32>
    %cst_39 = arith.constant 5.000000e-01 : f32
    %82 = vector.broadcast %cst_39 : f32 to vector<2x128xf32>
    %83 = arith.mulf %82, %81 : vector<2x128xf32>
    %cst_40 = arith.constant 5.000000e-01 : f32
    %84 = vector.broadcast %cst_40 : f32 to vector<2x128xf32>
    %85 = arith.addf %83, %84 : vector<2x128xf32>
    %86 = vector.extract_strided_slice %69 {offsets = [0, 256], sizes = [2, 128], strides = [1, 1]} : vector<2x512xf32> to vector<2x128xf32>
    %87 = math.tanh %86 : vector<2x128xf32>
    %88 = vector.extract_strided_slice %69 {offsets = [0, 384], sizes = [2, 128], strides = [1, 1]} : vector<2x512xf32> to vector<2x128xf32>
    %cst_41 = arith.constant 5.000000e-01 : f32
    %89 = vector.broadcast %cst_41 : f32 to vector<2x128xf32>
    %90 = arith.mulf %89, %88 : vector<2x128xf32>
    %91 = math.tanh %90 : vector<2x128xf32>
    %cst_42 = arith.constant 5.000000e-01 : f32
    %92 = vector.broadcast %cst_42 : f32 to vector<2x128xf32>
    %93 = arith.mulf %92, %91 : vector<2x128xf32>
    %cst_43 = arith.constant 5.000000e-01 : f32
    %94 = vector.broadcast %cst_43 : f32 to vector<2x128xf32>
    %95 = arith.addf %93, %94 : vector<2x128xf32>
    %96 = arith.mulf %85, %61 : vector<2x128xf32>
    %97 = arith.mulf %77, %87 : vector<2x128xf32>
    %98 = arith.addf %96, %97 : vector<2x128xf32>
    %99 = math.tanh %98 : vector<2x128xf32>
    %100 = arith.mulf %95, %99 : vector<2x128xf32>
    %cst_44 = arith.constant 0.000000e+00 : f32
    %101 = vector.broadcast %cst_44 : f32 to vector<2x128xf32>
    %102 = arith.maximumf %100, %101 : vector<2x128xf32>
    %cst_45 = arith.constant dense<0.000000e+00> : vector<2x512xf32>
    %103 = tpu.matmul %102, %22, %cst_45 {dimension_numbers = #tpu.dot_dimension_numbers<[1], [0], [0], [1], [0, 0, 1, 1], [], []>} : vector<2x128xf32>, vector<128x512xf32>, vector<2x512xf32> -> vector<2x512xf32>
    %cst_46 = arith.constant dense<0.000000e+00> : vector<2x512xf32>
    %104 = tpu.matmul %100, %23, %cst_46 {dimension_numbers = #tpu.dot_dimension_numbers<[1], [0], [0], [1], [0, 0, 1, 1], [], []>} : vector<2x128xf32>, vector<128x512xf32>, vector<2x512xf32> -> vector<2x512xf32>
    %105 = arith.addf %103, %104 : vector<2x512xf32>
    %106 = arith.addf %105, %26 : vector<2x512xf32>
    %107 = vector.extract_strided_slice %106 {offsets = [0, 0], sizes = [2, 128], strides = [1, 1]} : vector<2x512xf32> to vector<2x128xf32>
    %cst_47 = arith.constant 5.000000e-01 : f32
    %108 = vector.broadcast %cst_47 : f32 to vector<2x128xf32>
    %109 = arith.mulf %108, %107 : vector<2x128xf32>
    %110 = math.tanh %109 : vector<2x128xf32>
    %cst_48 = arith.constant 5.000000e-01 : f32
    %111 = vector.broadcast %cst_48 : f32 to vector<2x128xf32>
    %112 = arith.mulf %111, %110 : vector<2x128xf32>
    %cst_49 = arith.constant 5.000000e-01 : f32
    %113 = vector.broadcast %cst_49 : f32 to vector<2x128xf32>
    %114 = arith.addf %112, %113 : vector<2x128xf32>
    %115 = vector.extract_strided_slice %106 {offsets = [0, 128], sizes = [2, 128], strides = [1, 1]} : vector<2x512xf32> to vector<2x128xf32>
    %cst_50 = arith.constant 5.000000e-01 : f32
    %116 = vector.broadcast %cst_50 : f32 to vector<2x128xf32>
    %117 = arith.mulf %116, %115 : vector<2x128xf32>
    %118 = math.tanh %117 : vector<2x128xf32>
    %cst_51 = arith.constant 5.000000e-01 : f32
    %119 = vector.broadcast %cst_51 : f32 to vector<2x128xf32>
    %120 = arith.mulf %119, %118 : vector<2x128xf32>
    %cst_52 = arith.constant 5.000000e-01 : f32
    %121 = vector.broadcast %cst_52 : f32 to vector<2x128xf32>
    %122 = arith.addf %120, %121 : vector<2x128xf32>
    %123 = vector.extract_strided_slice %106 {offsets = [0, 256], sizes = [2, 128], strides = [1, 1]} : vector<2x512xf32> to vector<2x128xf32>
    %124 = math.tanh %123 : vector<2x128xf32>
    %125 = vector.extract_strided_slice %106 {offsets = [0, 384], sizes = [2, 128], strides = [1, 1]} : vector<2x512xf32> to vector<2x128xf32>
    %cst_53 = arith.constant 5.000000e-01 : f32
    %126 = vector.broadcast %cst_53 : f32 to vector<2x128xf32>
    %127 = arith.mulf %126, %125 : vector<2x128xf32>
    %128 = math.tanh %127 : vector<2x128xf32>
    %cst_54 = arith.constant 5.000000e-01 : f32
    %129 = vector.broadcast %cst_54 : f32 to vector<2x128xf32>
    %130 = arith.mulf %129, %128 : vector<2x128xf32>
    %cst_55 = arith.constant 5.000000e-01 : f32
    %131 = vector.broadcast %cst_55 : f32 to vector<2x128xf32>
    %132 = arith.addf %130, %131 : vector<2x128xf32>
    %133 = arith.mulf %122, %98 : vector<2x128xf32>
    %134 = arith.mulf %114, %124 : vector<2x128xf32>
    %135 = arith.addf %133, %134 : vector<2x128xf32>
    %136 = math.tanh %135 : vector<2x128xf32>
    %137 = arith.mulf %132, %136 : vector<2x128xf32>
    %cst_56 = arith.constant 0.000000e+00 : f32
    %138 = vector.broadcast %cst_56 : f32 to vector<2x128xf32>
    %139 = arith.maximumf %137, %138 : vector<2x128xf32>
    %cst_57 = arith.constant dense<0.000000e+00> : vector<2x512xf32>
    %140 = tpu.matmul %139, %22, %cst_57 {dimension_numbers = #tpu.dot_dimension_numbers<[1], [0], [0], [1], [0, 0, 1, 1], [], []>} : vector<2x128xf32>, vector<128x512xf32>, vector<2x512xf32> -> vector<2x512xf32>
    %cst_58 = arith.constant dense<0.000000e+00> : vector<2x512xf32>
    %141 = tpu.matmul %137, %23, %cst_58 {dimension_numbers = #tpu.dot_dimension_numbers<[1], [0], [0], [1], [0, 0, 1, 1], [], []>} : vector<2x128xf32>, vector<128x512xf32>, vector<2x512xf32> -> vector<2x512xf32>
    %142 = arith.addf %140, %141 : vector<2x512xf32>
    %143 = arith.addf %142, %26 : vector<2x512xf32>
    %144 = vector.extract_strided_slice %143 {offsets = [0, 0], sizes = [2, 128], strides = [1, 1]} : vector<2x512xf32> to vector<2x128xf32>
    %cst_59 = arith.constant 5.000000e-01 : f32
    %145 = vector.broadcast %cst_59 : f32 to vector<2x128xf32>
    %146 = arith.mulf %145, %144 : vector<2x128xf32>
    %147 = math.tanh %146 : vector<2x128xf32>
    %cst_60 = arith.constant 5.000000e-01 : f32
    %148 = vector.broadcast %cst_60 : f32 to vector<2x128xf32>
    %149 = arith.mulf %148, %147 : vector<2x128xf32>
    %cst_61 = arith.constant 5.000000e-01 : f32
    %150 = vector.broadcast %cst_61 : f32 to vector<2x128xf32>
    %151 = arith.addf %149, %150 : vector<2x128xf32>
    %152 = vector.extract_strided_slice %143 {offsets = [0, 128], sizes = [2, 128], strides = [1, 1]} : vector<2x512xf32> to vector<2x128xf32>
    %cst_62 = arith.constant 5.000000e-01 : f32
    %153 = vector.broadcast %cst_62 : f32 to vector<2x128xf32>
    %154 = arith.mulf %153, %152 : vector<2x128xf32>
    %155 = math.tanh %154 : vector<2x128xf32>
    %cst_63 = arith.constant 5.000000e-01 : f32
    %156 = vector.broadcast %cst_63 : f32 to vector<2x128xf32>
    %157 = arith.mulf %156, %155 : vector<2x128xf32>
    %cst_64 = arith.constant 5.000000e-01 : f32
    %158 = vector.broadcast %cst_64 : f32 to vector<2x128xf32>
    %159 = arith.addf %157, %158 : vector<2x128xf32>
    %160 = vector.extract_strided_slice %143 {offsets = [0, 256], sizes = [2, 128], strides = [1, 1]} : vector<2x512xf32> to vector<2x128xf32>
    %161 = math.tanh %160 : vector<2x128xf32>
    %162 = vector.extract_strided_slice %143 {offsets = [0, 384], sizes = [2, 128], strides = [1, 1]} : vector<2x512xf32> to vector<2x128xf32>
    %cst_65 = arith.constant 5.000000e-01 : f32
    %163 = vector.broadcast %cst_65 : f32 to vector<2x128xf32>
    %164 = arith.mulf %163, %162 : vector<2x128xf32>
    %165 = math.tanh %164 : vector<2x128xf32>
    %cst_66 = arith.constant 5.000000e-01 : f32
    %166 = vector.broadcast %cst_66 : f32 to vector<2x128xf32>
    %167 = arith.mulf %166, %165 : vector<2x128xf32>
    %cst_67 = arith.constant 5.000000e-01 : f32
    %168 = vector.broadcast %cst_67 : f32 to vector<2x128xf32>
    %169 = arith.addf %167, %168 : vector<2x128xf32>
    %170 = arith.mulf %159, %135 : vector<2x128xf32>
    %171 = arith.mulf %151, %161 : vector<2x128xf32>
    %172 = arith.addf %170, %171 : vector<2x128xf32>
    %173 = math.tanh %172 : vector<2x128xf32>
    %174 = arith.mulf %169, %173 : vector<2x128xf32>
    %cst_68 = arith.constant 0.000000e+00 : f32
    %175 = vector.broadcast %cst_68 : f32 to vector<2x128xf32>
    %176 = arith.maximumf %174, %175 : vector<2x128xf32>
    %cst_69 = arith.constant dense<0.000000e+00> : vector<2x512xf32>
    %177 = tpu.matmul %176, %22, %cst_69 {dimension_numbers = #tpu.dot_dimension_numbers<[1], [0], [0], [1], [0, 0, 1, 1], [], []>} : vector<2x128xf32>, vector<128x512xf32>, vector<2x512xf32> -> vector<2x512xf32>
    %cst_70 = arith.constant dense<0.000000e+00> : vector<2x512xf32>
    %178 = tpu.matmul %174, %23, %cst_70 {dimension_numbers = #tpu.dot_dimension_numbers<[1], [0], [0], [1], [0, 0, 1, 1], [], []>} : vector<2x128xf32>, vector<128x512xf32>, vector<2x512xf32> -> vector<2x512xf32>
    %179 = arith.addf %177, %178 : vector<2x512xf32>
    %180 = arith.addf %179, %26 : vector<2x512xf32>
    %181 = vector.extract_strided_slice %180 {offsets = [0, 0], sizes = [2, 128], strides = [1, 1]} : vector<2x512xf32> to vector<2x128xf32>
    %cst_71 = arith.constant 5.000000e-01 : f32
    %182 = vector.broadcast %cst_71 : f32 to vector<2x128xf32>
    %183 = arith.mulf %182, %181 : vector<2x128xf32>
    %184 = math.tanh %183 : vector<2x128xf32>
    %cst_72 = arith.constant 5.000000e-01 : f32
    %185 = vector.broadcast %cst_72 : f32 to vector<2x128xf32>
    %186 = arith.mulf %185, %184 : vector<2x128xf32>
    %cst_73 = arith.constant 5.000000e-01 : f32
    %187 = vector.broadcast %cst_73 : f32 to vector<2x128xf32>
    %188 = arith.addf %186, %187 : vector<2x128xf32>
    %189 = vector.extract_strided_slice %180 {offsets = [0, 128], sizes = [2, 128], strides = [1, 1]} : vector<2x512xf32> to vector<2x128xf32>
    %cst_74 = arith.constant 5.000000e-01 : f32
    %190 = vector.broadcast %cst_74 : f32 to vector<2x128xf32>
    %191 = arith.mulf %190, %189 : vector<2x128xf32>
    %192 = math.tanh %191 : vector<2x128xf32>
    %cst_75 = arith.constant 5.000000e-01 : f32
    %193 = vector.broadcast %cst_75 : f32 to vector<2x128xf32>
    %194 = arith.mulf %193, %192 : vector<2x128xf32>
    %cst_76 = arith.constant 5.000000e-01 : f32
    %195 = vector.broadcast %cst_76 : f32 to vector<2x128xf32>
    %196 = arith.addf %194, %195 : vector<2x128xf32>
    %197 = vector.extract_strided_slice %180 {offsets = [0, 256], sizes = [2, 128], strides = [1, 1]} : vector<2x512xf32> to vector<2x128xf32>
    %198 = math.tanh %197 : vector<2x128xf32>
    %199 = vector.extract_strided_slice %180 {offsets = [0, 384], sizes = [2, 128], strides = [1, 1]} : vector<2x512xf32> to vector<2x128xf32>
    %cst_77 = arith.constant 5.000000e-01 : f32
    %200 = vector.broadcast %cst_77 : f32 to vector<2x128xf32>
    %201 = arith.mulf %200, %199 : vector<2x128xf32>
    %202 = math.tanh %201 : vector<2x128xf32>
    %cst_78 = arith.constant 5.000000e-01 : f32
    %203 = vector.broadcast %cst_78 : f32 to vector<2x128xf32>
    %204 = arith.mulf %203, %202 : vector<2x128xf32>
    %cst_79 = arith.constant 5.000000e-01 : f32
    %205 = vector.broadcast %cst_79 : f32 to vector<2x128xf32>
    %206 = arith.addf %204, %205 : vector<2x128xf32>
    %207 = arith.mulf %196, %172 : vector<2x128xf32>
    %208 = arith.mulf %188, %198 : vector<2x128xf32>
    %209 = arith.addf %207, %208 : vector<2x128xf32>
    %210 = math.tanh %209 : vector<2x128xf32>
    %211 = arith.mulf %206, %210 : vector<2x128xf32>
    %cst_80 = arith.constant 0.000000e+00 : f32
    %212 = vector.broadcast %cst_80 : f32 to vector<2x128xf32>
    %213 = arith.maximumf %211, %212 : vector<2x128xf32>
    %cst_81 = arith.constant dense<0.000000e+00> : vector<2x512xf32>
    %214 = tpu.matmul %213, %22, %cst_81 {dimension_numbers = #tpu.dot_dimension_numbers<[1], [0], [0], [1], [0, 0, 1, 1], [], []>} : vector<2x128xf32>, vector<128x512xf32>, vector<2x512xf32> -> vector<2x512xf32>
    %cst_82 = arith.constant dense<0.000000e+00> : vector<2x512xf32>
    %215 = tpu.matmul %211, %23, %cst_82 {dimension_numbers = #tpu.dot_dimension_numbers<[1], [0], [0], [1], [0, 0, 1, 1], [], []>} : vector<2x128xf32>, vector<128x512xf32>, vector<2x512xf32> -> vector<2x512xf32>
    %216 = arith.addf %214, %215 : vector<2x512xf32>
    %217 = arith.addf %216, %26 : vector<2x512xf32>
    %218 = vector.extract_strided_slice %217 {offsets = [0, 0], sizes = [2, 128], strides = [1, 1]} : vector<2x512xf32> to vector<2x128xf32>
    %cst_83 = arith.constant 5.000000e-01 : f32
    %219 = vector.broadcast %cst_83 : f32 to vector<2x128xf32>
    %220 = arith.mulf %219, %218 : vector<2x128xf32>
    %221 = math.tanh %220 : vector<2x128xf32>
    %cst_84 = arith.constant 5.000000e-01 : f32
    %222 = vector.broadcast %cst_84 : f32 to vector<2x128xf32>
    %223 = arith.mulf %222, %221 : vector<2x128xf32>
    %cst_85 = arith.constant 5.000000e-01 : f32
    %224 = vector.broadcast %cst_85 : f32 to vector<2x128xf32>
    %225 = arith.addf %223, %224 : vector<2x128xf32>
    %226 = vector.extract_strided_slice %217 {offsets = [0, 128], sizes = [2, 128], strides = [1, 1]} : vector<2x512xf32> to vector<2x128xf32>
    %cst_86 = arith.constant 5.000000e-01 : f32
    %227 = vector.broadcast %cst_86 : f32 to vector<2x128xf32>
    %228 = arith.mulf %227, %226 : vector<2x128xf32>
    %229 = math.tanh %228 : vector<2x128xf32>
    %cst_87 = arith.constant 5.000000e-01 : f32
    %230 = vector.broadcast %cst_87 : f32 to vector<2x128xf32>
    %231 = arith.mulf %230, %229 : vector<2x128xf32>
    %cst_88 = arith.constant 5.000000e-01 : f32
    %232 = vector.broadcast %cst_88 : f32 to vector<2x128xf32>
    %233 = arith.addf %231, %232 : vector<2x128xf32>
    %234 = vector.extract_strided_slice %217 {offsets = [0, 256], sizes = [2, 128], strides = [1, 1]} : vector<2x512xf32> to vector<2x128xf32>
    %235 = math.tanh %234 : vector<2x128xf32>
    %236 = vector.extract_strided_slice %217 {offsets = [0, 384], sizes = [2, 128], strides = [1, 1]} : vector<2x512xf32> to vector<2x128xf32>
    %cst_89 = arith.constant 5.000000e-01 : f32
    %237 = vector.broadcast %cst_89 : f32 to vector<2x128xf32>
    %238 = arith.mulf %237, %236 : vector<2x128xf32>
    %239 = math.tanh %238 : vector<2x128xf32>
    %cst_90 = arith.constant 5.000000e-01 : f32
    %240 = vector.broadcast %cst_90 : f32 to vector<2x128xf32>
    %241 = arith.mulf %240, %239 : vector<2x128xf32>
    %cst_91 = arith.constant 5.000000e-01 : f32
    %242 = vector.broadcast %cst_91 : f32 to vector<2x128xf32>
    %243 = arith.addf %241, %242 : vector<2x128xf32>
    %244 = arith.mulf %233, %209 : vector<2x128xf32>
    %245 = arith.mulf %225, %235 : vector<2x128xf32>
    %246 = arith.addf %244, %245 : vector<2x128xf32>
    %247 = math.tanh %246 : vector<2x128xf32>
    %248 = arith.mulf %243, %247 : vector<2x128xf32>
    %cst_92 = arith.constant 0.000000e+00 : f32
    %249 = vector.broadcast %cst_92 : f32 to vector<2x128xf32>
    %250 = arith.maximumf %248, %249 : vector<2x128xf32>
    %cst_93 = arith.constant dense<0.000000e+00> : vector<2x512xf32>
    %251 = tpu.matmul %250, %22, %cst_93 {dimension_numbers = #tpu.dot_dimension_numbers<[1], [0], [0], [1], [0, 0, 1, 1], [], []>} : vector<2x128xf32>, vector<128x512xf32>, vector<2x512xf32> -> vector<2x512xf32>
    %cst_94 = arith.constant dense<0.000000e+00> : vector<2x512xf32>
    %252 = tpu.matmul %248, %23, %cst_94 {dimension_numbers = #tpu.dot_dimension_numbers<[1], [0], [0], [1], [0, 0, 1, 1], [], []>} : vector<2x128xf32>, vector<128x512xf32>, vector<2x512xf32> -> vector<2x512xf32>
    %253 = arith.addf %251, %252 : vector<2x512xf32>
    %254 = arith.addf %253, %26 : vector<2x512xf32>
    %255 = vector.extract_strided_slice %254 {offsets = [0, 0], sizes = [2, 128], strides = [1, 1]} : vector<2x512xf32> to vector<2x128xf32>
    %cst_95 = arith.constant 5.000000e-01 : f32
    %256 = vector.broadcast %cst_95 : f32 to vector<2x128xf32>
    %257 = arith.mulf %256, %255 : vector<2x128xf32>
    %258 = math.tanh %257 : vector<2x128xf32>
    %cst_96 = arith.constant 5.000000e-01 : f32
    %259 = vector.broadcast %cst_96 : f32 to vector<2x128xf32>
    %260 = arith.mulf %259, %258 : vector<2x128xf32>
    %cst_97 = arith.constant 5.000000e-01 : f32
    %261 = vector.broadcast %cst_97 : f32 to vector<2x128xf32>
    %262 = arith.addf %260, %261 : vector<2x128xf32>
    %263 = vector.extract_strided_slice %254 {offsets = [0, 128], sizes = [2, 128], strides = [1, 1]} : vector<2x512xf32> to vector<2x128xf32>
    %cst_98 = arith.constant 5.000000e-01 : f32
    %264 = vector.broadcast %cst_98 : f32 to vector<2x128xf32>
    %265 = arith.mulf %264, %263 : vector<2x128xf32>
    %266 = math.tanh %265 : vector<2x128xf32>
    %cst_99 = arith.constant 5.000000e-01 : f32
    %267 = vector.broadcast %cst_99 : f32 to vector<2x128xf32>
    %268 = arith.mulf %267, %266 : vector<2x128xf32>
    %cst_100 = arith.constant 5.000000e-01 : f32
    %269 = vector.broadcast %cst_100 : f32 to vector<2x128xf32>
    %270 = arith.addf %268, %269 : vector<2x128xf32>
    %271 = vector.extract_strided_slice %254 {offsets = [0, 256], sizes = [2, 128], strides = [1, 1]} : vector<2x512xf32> to vector<2x128xf32>
    %272 = math.tanh %271 : vector<2x128xf32>
    %273 = vector.extract_strided_slice %254 {offsets = [0, 384], sizes = [2, 128], strides = [1, 1]} : vector<2x512xf32> to vector<2x128xf32>
    %cst_101 = arith.constant 5.000000e-01 : f32
    %274 = vector.broadcast %cst_101 : f32 to vector<2x128xf32>
    %275 = arith.mulf %274, %273 : vector<2x128xf32>
    %276 = math.tanh %275 : vector<2x128xf32>
    %cst_102 = arith.constant 5.000000e-01 : f32
    %277 = vector.broadcast %cst_102 : f32 to vector<2x128xf32>
    %278 = arith.mulf %277, %276 : vector<2x128xf32>
    %cst_103 = arith.constant 5.000000e-01 : f32
    %279 = vector.broadcast %cst_103 : f32 to vector<2x128xf32>
    %280 = arith.addf %278, %279 : vector<2x128xf32>
    %281 = arith.mulf %270, %246 : vector<2x128xf32>
    %282 = arith.mulf %262, %272 : vector<2x128xf32>
    %283 = arith.addf %281, %282 : vector<2x128xf32>
    %284 = math.tanh %283 : vector<2x128xf32>
    %285 = arith.mulf %280, %284 : vector<2x128xf32>
    %cst_104 = arith.constant 0.000000e+00 : f32
    %286 = vector.broadcast %cst_104 : f32 to vector<2x128xf32>
    %287 = arith.maximumf %285, %286 : vector<2x128xf32>
    %cst_105 = arith.constant dense<0.000000e+00> : vector<2x512xf32>
    %288 = tpu.matmul %287, %22, %cst_105 {dimension_numbers = #tpu.dot_dimension_numbers<[1], [0], [0], [1], [0, 0, 1, 1], [], []>} : vector<2x128xf32>, vector<128x512xf32>, vector<2x512xf32> -> vector<2x512xf32>
    %cst_106 = arith.constant dense<0.000000e+00> : vector<2x512xf32>
    %289 = tpu.matmul %285, %23, %cst_106 {dimension_numbers = #tpu.dot_dimension_numbers<[1], [0], [0], [1], [0, 0, 1, 1], [], []>} : vector<2x128xf32>, vector<128x512xf32>, vector<2x512xf32> -> vector<2x512xf32>
    %290 = arith.addf %288, %289 : vector<2x512xf32>
    %291 = arith.addf %290, %26 : vector<2x512xf32>
    %292 = vector.extract_strided_slice %291 {offsets = [0, 0], sizes = [2, 128], strides = [1, 1]} : vector<2x512xf32> to vector<2x128xf32>
    %cst_107 = arith.constant 5.000000e-01 : f32
    %293 = vector.broadcast %cst_107 : f32 to vector<2x128xf32>
    %294 = arith.mulf %293, %292 : vector<2x128xf32>
    %295 = math.tanh %294 : vector<2x128xf32>
    %cst_108 = arith.constant 5.000000e-01 : f32
    %296 = vector.broadcast %cst_108 : f32 to vector<2x128xf32>
    %297 = arith.mulf %296, %295 : vector<2x128xf32>
    %cst_109 = arith.constant 5.000000e-01 : f32
    %298 = vector.broadcast %cst_109 : f32 to vector<2x128xf32>
    %299 = arith.addf %297, %298 : vector<2x128xf32>
    %300 = vector.extract_strided_slice %291 {offsets = [0, 128], sizes = [2, 128], strides = [1, 1]} : vector<2x512xf32> to vector<2x128xf32>
    %cst_110 = arith.constant 5.000000e-01 : f32
    %301 = vector.broadcast %cst_110 : f32 to vector<2x128xf32>
    %302 = arith.mulf %301, %300 : vector<2x128xf32>
    %303 = math.tanh %302 : vector<2x128xf32>
    %cst_111 = arith.constant 5.000000e-01 : f32
    %304 = vector.broadcast %cst_111 : f32 to vector<2x128xf32>
    %305 = arith.mulf %304, %303 : vector<2x128xf32>
    %cst_112 = arith.constant 5.000000e-01 : f32
    %306 = vector.broadcast %cst_112 : f32 to vector<2x128xf32>
    %307 = arith.addf %305, %306 : vector<2x128xf32>
    %308 = vector.extract_strided_slice %291 {offsets = [0, 256], sizes = [2, 128], strides = [1, 1]} : vector<2x512xf32> to vector<2x128xf32>
    %309 = math.tanh %308 : vector<2x128xf32>
    %310 = vector.extract_strided_slice %291 {offsets = [0, 384], sizes = [2, 128], strides = [1, 1]} : vector<2x512xf32> to vector<2x128xf32>
    %cst_113 = arith.constant 5.000000e-01 : f32
    %311 = vector.broadcast %cst_113 : f32 to vector<2x128xf32>
    %312 = arith.mulf %311, %310 : vector<2x128xf32>
    %313 = math.tanh %312 : vector<2x128xf32>
    %cst_114 = arith.constant 5.000000e-01 : f32
    %314 = vector.broadcast %cst_114 : f32 to vector<2x128xf32>
    %315 = arith.mulf %314, %313 : vector<2x128xf32>
    %cst_115 = arith.constant 5.000000e-01 : f32
    %316 = vector.broadcast %cst_115 : f32 to vector<2x128xf32>
    %317 = arith.addf %315, %316 : vector<2x128xf32>
    %318 = arith.mulf %307, %283 : vector<2x128xf32>
    %319 = arith.mulf %299, %309 : vector<2x128xf32>
    %320 = arith.addf %318, %319 : vector<2x128xf32>
    %321 = math.tanh %320 : vector<2x128xf32>
    %322 = arith.mulf %317, %321 : vector<2x128xf32>
    %323 = tpu.concatenate %63, %100, %137, %174, %211, %248, %285, %322 in 1 : vector<2x128xf32>, vector<2x128xf32>, vector<2x128xf32>, vector<2x128xf32>, vector<2x128xf32>, vector<2x128xf32>, vector<2x128xf32>, vector<2x128xf32> -> vector<2x1024xf32>
    %c0_116 = arith.constant 0 : index
    %c0_117 = arith.constant 0 : index
    %324 = vector.load %arg10[%c0_116, %c0_117] : memref<1024x128xf32, #tpu.memory_space<vmem>>, vector<1024x128xf32>
    %cst_118 = arith.constant dense<0.000000e+00> : vector<2x128xf32>
    %325 = tpu.matmul %323, %324, %cst_118 {dimension_numbers = #tpu.dot_dimension_numbers<[1], [0], [0], [1], [0, 0, 1, 1], [], []>} : vector<2x1024xf32>, vector<1024x128xf32>, vector<2x128xf32> -> vector<2x128xf32>
    %c0_119 = arith.constant 0 : index
    %c0_120 = arith.constant 0 : index
    %326 = vector.load %arg11[%c0_119, %c0_120] : memref<1x128xf32, #tpu.memory_space<vmem>>, vector<1x128xf32>
    %327 = vector.broadcast %326 : vector<1x128xf32> to vector<2x128xf32>
    %328 = arith.addf %325, %327 : vector<2x128xf32>
    %c0_121 = arith.constant 0 : index
    %c0_122 = arith.constant 0 : index
    %329 = vector.load %arg18[%c0_121, %c0_122] : memref<2x128xf32, #tpu.memory_space<vmem>>, vector<2x128xf32>
    tpu.vector_store %arg18[%c0_121, %c0_122], %328 {strides = array<i32>} : memref<2x128xf32, #tpu.memory_space<vmem>>, vector<2x128xf32>,
    %c0_123 = arith.constant 0 : index
    %c0_124 = arith.constant 0 : index
    %330 = vector.load %arg19[%c0_123, %c0_124] : memref<2x128xf32, #tpu.memory_space<vmem>>, vector<2x128xf32>
    tpu.vector_store %arg19[%c0_123, %c0_124], %322 {strides = array<i32>} : memref<2x128xf32, #tpu.memory_space<vmem>>, vector<2x128xf32>,
    %c0_125 = arith.constant 0 : index
    %c0_126 = arith.constant 0 : index
    %331 = vector.load %arg20[%c0_125, %c0_126] : memref<2x128xf32, #tpu.memory_space<vmem>>, vector<2x128xf32>
    tpu.vector_store %arg20[%c0_125, %c0_126], %320 {strides = array<i32>} : memref<2x128xf32, #tpu.memory_space<vmem>>, vector<2x128xf32>,
    %c0_127 = arith.constant 0 : index
    %c0_128 = arith.constant 0 : index
    %332 = vector.load %arg12[%c0_127, %c0_128] : memref<128x1xf32, #tpu.memory_space<vmem>>, vector<128x1xf32>
    %cst_129 = arith.constant dense<0.000000e+00> : vector<2x1xf32>
    %333 = tpu.matmul %13, %332, %cst_129 {dimension_numbers = #tpu.dot_dimension_numbers<[1], [0], [0], [1], [0, 0, 1, 1], [], []>} : vector<2x128xf32>, vector<128x1xf32>, vector<2x1xf32> -> vector<2x1xf32>
    %c0_130 = arith.constant 0 : index
    %c0_131 = arith.constant 0 : index
    %334 = vector.load %arg13[%c0_130, %c0_131] : memref<1x1xf32, #tpu.memory_space<vmem>>, vector<1x1xf32>
    %335 = vector.broadcast %334 : vector<1x1xf32> to vector<2x1xf32>
    %336 = arith.addf %333, %335 : vector<2x1xf32>
    %cst_132 = arith.constant 0.000000e+00 : f32
    %337 = vector.broadcast %cst_132 : f32 to vector<2x1xf32>
    %338 = arith.maximumf %336, %337 : vector<2x1xf32>
    %c0_133 = arith.constant 0 : index
    %c0_134 = arith.constant 0 : index
    %339 = vector.load %arg14[%c0_133, %c0_134] : memref<128x128xf32, #tpu.memory_space<vmem>>, vector<128x128xf32>
    %cst_135 = arith.constant dense<0.000000e+00> : vector<2x128xf32>
    %340 = tpu.matmul %14, %339, %cst_135 {dimension_numbers = #tpu.dot_dimension_numbers<[1], [0], [0], [1], [0, 0, 1, 1], [], []>} : vector<2x128xf32>, vector<128x128xf32>, vector<2x128xf32> -> vector<2x128xf32>
    %c0_136 = arith.constant 0 : index
    %c0_137 = arith.constant 0 : index
    %341 = vector.load %arg15[%c0_136, %c0_137] : memref<1x128xf32, #tpu.memory_space<vmem>>, vector<1x128xf32>
    %342 = vector.broadcast %341 : vector<1x128xf32> to vector<2x128xf32>
    %343 = arith.addf %340, %342 : vector<2x128xf32>
    %cst_138 = arith.constant 0.000000e+00 : f32
    %344 = vector.broadcast %cst_138 : f32 to vector<2x128xf32>
    %345 = arith.cmpf ogt, %343, %344 : vector<2x128xf32>
    %cst_139 = arith.constant 0.00999999977 : f32
    %346 = vector.broadcast %cst_139 : f32 to vector<2x128xf32>
    %347 = arith.mulf %346, %343 : vector<2x128xf32>
    %348 = arith.select %345, %343, %347 : vector<2x128xi1>, vector<2x128xf32>
    %c0_140 = arith.constant 0 : index
    %c0_141 = arith.constant 0 : index
    %349 = vector.load %arg16[%c0_140, %c0_141] : memref<128x2xf32, #tpu.memory_space<vmem>>, vector<128x2xf32>
    %cst_142 = arith.constant dense<0.000000e+00> : vector<2x2xf32>
    %350 = tpu.matmul %348, %349, %cst_142 {dimension_numbers = #tpu.dot_dimension_numbers<[1], [0], [0], [1], [0, 0, 1, 1], [], []>} : vector<2x128xf32>, vector<128x2xf32>, vector<2x2xf32> -> vector<2x2xf32>
    %c0_143 = arith.constant 0 : index
    %c0_144 = arith.constant 0 : index
    %351 = vector.load %arg17[%c0_143, %c0_144] : memref<1x2xf32, #tpu.memory_space<vmem>>, vector<1x2xf32>
    %352 = vector.broadcast %351 : vector<1x2xf32> to vector<2x2xf32>
    %353 = arith.addf %350, %352 : vector<2x2xf32>
    %cst_145 = arith.constant dense<0xFF800000> : vector<2xf32>
    %354 = vector.multi_reduction <maximumf>, %353, %cst_145 [1] : vector<2x2xf32> to vector<2xf32>
    %355 = vector.shape_cast %354 : vector<2xf32> to vector<2x1xf32>
    %356 = vector.broadcast %355 : vector<2x1xf32> to vector<2x2xf32>
    %357 = arith.subf %353, %356 : vector<2x2xf32>
    %358 = math.exp %357 : vector<2x2xf32>
    %cst_146 = arith.constant dense<0.000000e+00> : vector<2xf32>
    %359 = vector.multi_reduction <add>, %358, %cst_146 [1] : vector<2x2xf32> to vector<2xf32>
    %360 = vector.shape_cast %359 : vector<2xf32> to vector<2x1xf32>
    %361 = vector.broadcast %360 : vector<2x1xf32> to vector<2x2xf32>
    %362 = arith.divf %358, %361 : vector<2x2xf32>
    %cst_147 = arith.constant 0.000000e+00 : f32
    %363 = vector.broadcast %cst_147 : f32 to vector<2x128xf32>
    %c0_148 = arith.constant 0 : index
    %c0_149 = arith.constant 0 : index
    %364 = vector.load %arg21[%c0_148, %c0_149] : memref<2x128xf32, #tpu.memory_space<vmem>>, vector<2x128xf32>
    tpu.vector_store %arg21[%c0_148, %c0_149], %363 {strides = array<i32>} : memref<2x128xf32, #tpu.memory_space<vmem>>, vector<2x128xf32>,
    %365 = tpu.concatenate %338, %362 in 1 : vector<2x1xf32>, vector<2x2xf32> -> vector<2x3xf32>
    %c0_150 = arith.constant 0 : index
    %c0_151 = arith.constant 0 : index
    %366 = vector.load %arg21[%c0_150, %c0_151] : memref<2x128xf32, #tpu.memory_space<vmem>>, vector<2x3xf32>
    tpu.vector_store %arg21[%c0_150, %c0_151], %365 {strides = array<i32>} : memref<2x128xf32, #tpu.memory_space<vmem>>, vector<2x3xf32>,
    return
  }
  func.func @transform_0(%arg0: i32) -> (i32, i32) {
    %c0_i32 = arith.constant 0 : i32
    %c0_i32_0 = arith.constant 0 : i32
    return %arg0, %c0_i32 : i32, i32
  }
  func.func @transform_1(%arg0: i32) -> (i32, i32) {
    %c0_i32 = arith.constant 0 : i32
    %c0_i32_0 = arith.constant 0 : i32
    %c0_i32_1 = arith.constant 0 : i32
    return %c0_i32, %c0_i32_0 : i32, i32
  }
  func.func @transform_2(%arg0: i32) -> (i32, i32) {
    %c0_i32 = arith.constant 0 : i32
    %c0_i32_0 = arith.constant 0 : i32
    %c0_i32_1 = arith.constant 0 : i32
    return %c0_i32, %c0_i32_0 : i32, i32
  }
  func.func @transform_3(%arg0: i32) -> (i32, i32) {
    %c0_i32 = arith.constant 0 : i32
    %c0_i32_0 = arith.constant 0 : i32
    %c0_i32_1 = arith.constant 0 : i32
    return %c0_i32, %c0_i32_0 : i32, i32
  }
  func.func @transform_4(%arg0: i32) -> (i32, i32) {
    %c0_i32 = arith.constant 0 : i32
    %c0_i32_0 = arith.constant 0 : i32
    %c0_i32_1 = arith.constant 0 : i32
    return %c0_i32, %c0_i32_0 : i32, i32
  }
  func.func @transform_5(%arg0: i32) -> (i32, i32) {
    %c0_i32 = arith.constant 0 : i32
    %c0_i32_0 = arith.constant 0 : i32
    %c0_i32_1 = arith.constant 0 : i32
    return %c0_i32, %c0_i32_0 : i32, i32
  }
  func.func @transform_6(%arg0: i32) -> (i32, i32) {
    %c0_i32 = arith.constant 0 : i32
    %c0_i32_0 = arith.constant 0 : i32
    %c0_i32_1 = arith.constant 0 : i32
    return %c0_i32, %c0_i32_0 : i32, i32
  }
  func.func @transform_7(%arg0: i32) -> (i32, i32) {
    %c0_i32 = arith.constant 0 : i32
    %c0_i32_0 = arith.constant 0 : i32
    %c0_i32_1 = arith.constant 0 : i32
    return %c0_i32, %c0_i32_0 : i32, i32
  }
  func.func @transform_8(%arg0: i32) -> (i32, i32) {
    %c0_i32 = arith.constant 0 : i32
    %c0_i32_0 = arith.constant 0 : i32
    %c0_i32_1 = arith.constant 0 : i32
    return %c0_i32, %c0_i32_0 : i32, i32
  }
  func.func @transform_9(%arg0: i32) -> (i32, i32) {
    %c0_i32 = arith.constant 0 : i32
    %c0_i32_0 = arith.constant 0 : i32
    %c0_i32_1 = arith.constant 0 : i32
    return %c0_i32, %c0_i32_0 : i32, i32
  }
  func.func @transform_10(%arg0: i32) -> (i32, i32) {
    %c0_i32 = arith.constant 0 : i32
    %c0_i32_0 = arith.constant 0 : i32
    %c0_i32_1 = arith.constant 0 : i32
    return %c0_i32, %c0_i32_0 : i32, i32
  }
  func.func @transform_11(%arg0: i32) -> (i32, i32) {
    %c0_i32 = arith.constant 0 : i32
    %c0_i32_0 = arith.constant 0 : i32
    %c0_i32_1 = arith.constant 0 : i32
    return %c0_i32, %c0_i32_0 : i32, i32
  }
  func.func @transform_12(%arg0: i32) -> (i32, i32) {
    %c0_i32 = arith.constant 0 : i32
    %c0_i32_0 = arith.constant 0 : i32
    %c0_i32_1 = arith.constant 0 : i32
    return %c0_i32, %c0_i32_0 : i32, i32
  }
  func.func @transform_13(%arg0: i32) -> (i32, i32) {
    %c0_i32 = arith.constant 0 : i32
    %c0_i32_0 = arith.constant 0 : i32
    %c0_i32_1 = arith.constant 0 : i32
    return %c0_i32, %c0_i32_0 : i32, i32
  }
  func.func @transform_14(%arg0: i32) -> (i32, i32) {
    %c0_i32 = arith.constant 0 : i32
    %c0_i32_0 = arith.constant 0 : i32
    %c0_i32_1 = arith.constant 0 : i32
    return %c0_i32, %c0_i32_0 : i32, i32
  }
  func.func @transform_15(%arg0: i32) -> (i32, i32) {
    %c0_i32 = arith.constant 0 : i32
    %c0_i32_0 = arith.constant 0 : i32
    %c0_i32_1 = arith.constant 0 : i32
    return %c0_i32, %c0_i32_0 : i32, i32
  }
  func.func @transform_16(%arg0: i32) -> (i32, i32) {
    %c0_i32 = arith.constant 0 : i32
    %c0_i32_0 = arith.constant 0 : i32
    %c0_i32_1 = arith.constant 0 : i32
    return %c0_i32, %c0_i32_0 : i32, i32
  }
  func.func @transform_17(%arg0: i32) -> (i32, i32) {
    %c0_i32 = arith.constant 0 : i32
    %c0_i32_0 = arith.constant 0 : i32
    return %arg0, %c0_i32 : i32, i32
  }
  func.func @transform_18(%arg0: i32) -> (i32, i32) {
    %c0_i32 = arith.constant 0 : i32
    %c0_i32_0 = arith.constant 0 : i32
    return %arg0, %c0_i32 : i32, i32
  }
  func.func @transform_19(%arg0: i32) -> (i32, i32) {
    %c0_i32 = arith.constant 0 : i32
    %c0_i32_0 = arith.constant 0 : i32
    return %arg0, %c0_i32 : i32, i32
  }
  func.func @transform_20(%arg0: i32) -> (i32, i32) {
    %c0_i32 = arith.constant 0 : i32
    %c0_i32_0 = arith.constant 0 : i32
    return %arg0, %c0_i32 : i32, i32
  }
}

</mosaic_0001>

<llo_original>
// kernel: decoder_rnn_forward.1
$region0: #{decoder_rnn_forward.1}
  #allocation0 [shape = 'u32[]', space=smem, size = 0x4, offset = 0x4, fixed_abs, tag = 'smem constant byte address 0x4 - core index']
  #allocation1 [shape = 'u32[72,128]{1,0:T(1,128)}', space=vmem, size = 0x9000, scoped, tag = 'internal scratch']
  #allocation2 [shape = 'f32[1,1]{1,0:T(1,128)S(1)}', space=vmem, size = 0x200, scoped, tag = 'scoped memory for decoder_rnn_forward.1']
  %s0 = inlined_call_operand.vmem [shape: f32[2,8], index: 0, kind: input, shape index: {}]
  %s1 = inlined_call_operand.vmem [shape: f32[1,16], index: 1, kind: input, shape index: {}]
  %s2 = inlined_call_operand.vmem [shape: f32[16,128], index: 2, kind: input, shape index: {}]
  %s3 = inlined_call_operand.vmem [shape: f32[1,128], index: 3, kind: input, shape index: {}]
  %s4 = inlined_call_operand.vmem [shape: f32[8,512], index: 4, kind: input, shape index: {}]
  %s5 = inlined_call_operand.vmem [shape: f32[1,512], index: 5, kind: input, shape index: {}]
  %s6 = inlined_call_operand.vmem [shape: f32[128,512], index: 6, kind: input, shape index: {}]
  %s7 = inlined_call_operand.vmem [shape: f32[128,512], index: 7, kind: input, shape index: {}]
  %s8 = inlined_call_operand.vmem [shape: f32[1,512], index: 8, kind: input, shape index: {}]
  %s9 = inlined_call_operand.vmem [shape: f32[1024,128], index: 9, kind: input, shape index: {}]
  %s10 = inlined_call_operand.vmem [shape: f32[1,128], index: 10, kind: input, shape index: {}]
  %s11 = inlined_call_operand.vmem [shape: f32[128,1], index: 11, kind: input, shape index: {}]
  %s12 = inlined_call_operand.<no memory space> [shape: f32[1,1], index: 12, kind: input, shape index: {}]
  %s13 = inlined_call_operand.vmem [shape: f32[128,128], index: 13, kind: input, shape index: {}]
  %s14 = inlined_call_operand.vmem [shape: f32[1,128], index: 14, kind: input, shape index: {}]
  %s15 = inlined_call_operand.vmem [shape: f32[128,2], index: 15, kind: input, shape index: {}]
  %s16 = inlined_call_operand.vmem [shape: f32[1,2], index: 16, kind: input, shape index: {}]
  %s17 = inlined_call_operand.vmem [shape: f32[2,128], index: 17, kind: output, shape index: {0}]
  %s18 = inlined_call_operand.vmem [shape: f32[2,128], index: 18, kind: output, shape index: {1}]
  %s19 = inlined_call_operand.vmem [shape: f32[2,128], index: 19, kind: output, shape index: {2}]
  %s20 = inlined_call_operand.vmem [shape: f32[2,128], index: 20, kind: output, shape index: {3}]
  %21 = xla_tuple %s17, %s18, %s19, %s20
  %s22 = sld [smem:[#allocation0]]
  $region102: #{decoder_rnn_forward.1} parent=0
    _
  %s24 = ssub.s32 1, %s22
  %s25 = scalar_select 0, %s24, %s22
  %v26 = vstv %s12
  %27 = vst [vmem:[#allocation2] sm:$0x1] %v26
  // Predicated region
  $region2: #{decoder_rnn_forward.1} parent=0 // pred_check
    _
  $region3: #{decoder_rnn_forward.1} parent=0 // pred_check_branch
    %29 = sbr.rel (0) target = $region5
  $region4: #{decoder_rnn_forward.1} parent=0 // pred_region
    _
  $region5: #{decoder_rnn_forward.1} parent=0 // pred_fallthru
    _
  // Predicated region
  $region6: #{decoder_rnn_forward.1} parent=0 // pred_check
    _
  $region7: #{decoder_rnn_forward.1} parent=0 // pred_check_branch
    %31 = sbr.rel (0) target = $region9
  $region8: #{decoder_rnn_forward.1} parent=0 // pred_region
    _
  $region9: #{decoder_rnn_forward.1} parent=0 // pred_fallthru
    _
  // Predicated region
  $region10: #{decoder_rnn_forward.1} parent=0 // pred_check
    _
  $region11: #{decoder_rnn_forward.1} parent=0 // pred_check_branch
    %33 = sbr.rel (0) target = $region13
  $region12: #{decoder_rnn_forward.1} parent=0 // pred_region
    _
  $region13: #{decoder_rnn_forward.1} parent=0 // pred_fallthru
    _
  // Predicated region
  $region14: #{decoder_rnn_forward.1} parent=0 // pred_check
    _
  $region15: #{decoder_rnn_forward.1} parent=0 // pred_check_branch
    %35 = sbr.rel (0) target = $region17
  $region16: #{decoder_rnn_forward.1} parent=0 // pred_region
    _
  $region17: #{decoder_rnn_forward.1} parent=0 // pred_fallthru
    _
  // Predicated region
  $region18: #{decoder_rnn_forward.1} parent=0 // pred_check
    _
  $region19: #{decoder_rnn_forward.1} parent=0 // pred_check_branch
    %37 = sbr.rel (0) target = $region21
  $region20: #{decoder_rnn_forward.1} parent=0 // pred_region
    _
  $region21: #{decoder_rnn_forward.1} parent=0 // pred_fallthru
    _
  // Predicated region
  $region22: #{decoder_rnn_forward.1} parent=0 // pred_check
    _
  $region23: #{decoder_rnn_forward.1} parent=0 // pred_check_branch
    %39 = sbr.rel (0) target = $region25
  $region24: #{decoder_rnn_forward.1} parent=0 // pred_region
    _
  $region25: #{decoder_rnn_forward.1} parent=0 // pred_fallthru
    _
  // Predicated region
  $region26: #{decoder_rnn_forward.1} parent=0 // pred_check
    _
  $region27: #{decoder_rnn_forward.1} parent=0 // pred_check_branch
    %41 = sbr.rel (0) target = $region29
  $region28: #{decoder_rnn_forward.1} parent=0 // pred_region
    _
  $region29: #{decoder_rnn_forward.1} parent=0 // pred_fallthru
    _
  // Predicated region
  $region30: #{decoder_rnn_forward.1} parent=0 // pred_check
    _
  $region31: #{decoder_rnn_forward.1} parent=0 // pred_check_branch
    %43 = sbr.rel (0) target = $region33
  $region32: #{decoder_rnn_forward.1} parent=0 // pred_region
    _
  $region33: #{decoder_rnn_forward.1} parent=0 // pred_fallthru
    _
  // Predicated region
  $region34: #{decoder_rnn_forward.1} parent=0 // pred_check
    _
  $region35: #{decoder_rnn_forward.1} parent=0 // pred_check_branch
    %45 = sbr.rel (0) target = $region37
  $region36: #{decoder_rnn_forward.1} parent=0 // pred_region
    _
  $region37: #{decoder_rnn_forward.1} parent=0 // pred_fallthru
    _
  // Predicated region
  $region38: #{decoder_rnn_forward.1} parent=0 // pred_check
    _
  $region39: #{decoder_rnn_forward.1} parent=0 // pred_check_branch
    %47 = sbr.rel (0) target = $region41
  $region40: #{decoder_rnn_forward.1} parent=0 // pred_region
    _
  $region41: #{decoder_rnn_forward.1} parent=0 // pred_fallthru
    _
  // Predicated region
  $region42: #{decoder_rnn_forward.1} parent=0 // pred_check
    _
  $region43: #{decoder_rnn_forward.1} parent=0 // pred_check_branch
    %49 = sbr.rel (0) target = $region45
  $region44: #{decoder_rnn_forward.1} parent=0 // pred_region
    _
  $region45: #{decoder_rnn_forward.1} parent=0 // pred_fallthru
    _
  // Predicated region
  $region46: #{decoder_rnn_forward.1} parent=0 // pred_check
    _
  $region47: #{decoder_rnn_forward.1} parent=0 // pred_check_branch
    %51 = sbr.rel (0) target = $region49
  $region48: #{decoder_rnn_forward.1} parent=0 // pred_region
    _
  $region49: #{decoder_rnn_forward.1} parent=0 // pred_fallthru
    _
  // Predicated region
  $region50: #{decoder_rnn_forward.1} parent=0 // pred_check
    _
  $region51: #{decoder_rnn_forward.1} parent=0 // pred_check_branch
    %53 = sbr.rel (0) target = $region53
  $region52: #{decoder_rnn_forward.1} parent=0 // pred_region
    _
  $region53: #{decoder_rnn_forward.1} parent=0 // pred_fallthru
    _
  // Predicated region
  $region54: #{decoder_rnn_forward.1} parent=0 // pred_check
    _
  $region55: #{decoder_rnn_forward.1} parent=0 // pred_check_branch
    %55 = sbr.rel (0) target = $region57
  $region56: #{decoder_rnn_forward.1} parent=0 // pred_region
    _
  $region57: #{decoder_rnn_forward.1} parent=0 // pred_fallthru
    _
  // Predicated region
  $region58: #{decoder_rnn_forward.1} parent=0 // pred_check
    _
  $region59: #{decoder_rnn_forward.1} parent=0 // pred_check_branch
    %57 = sbr.rel (0) target = $region61
  $region60: #{decoder_rnn_forward.1} parent=0 // pred_region
    _
  $region61: #{decoder_rnn_forward.1} parent=0 // pred_fallthru
    _
  // Predicated region
  $region62: #{decoder_rnn_forward.1} parent=0 // pred_check
    _
  $region63: #{decoder_rnn_forward.1} parent=0 // pred_check_branch
    %59 = sbr.rel (0) target = $region65
  $region64: #{decoder_rnn_forward.1} parent=0 // pred_region
    _
  $region65: #{decoder_rnn_forward.1} parent=0 // pred_fallthru
    _
  // Predicated region
  $region66: #{decoder_rnn_forward.1} parent=0 // pred_check
    _
  $region67: #{decoder_rnn_forward.1} parent=0 // pred_check_branch
    %61 = sbr.rel (0) target = $region69
  $region68: #{decoder_rnn_forward.1} parent=0 // pred_region
    _
  $region69: #{decoder_rnn_forward.1} parent=0 // pred_fallthru
    _
  %v62 = vld [vmem:[%s0] sm:$0x3]
  %v63 = vld [vmem:[%s4] sm:$0xff]
  %v64 = vld [vmem:[%s4 + $0x8] sm:$0xff]
  %v65 = vld [vmem:[%s4 + $0x10] sm:$0xff]
  %v66 = vld [vmem:[%s4 + $0x18] sm:$0xff]
  %v67 = vld [vmem:[%s5] sm:$0xf]
  %v69 = vperm.slane %v67, 0
  %v70 = vperm.slane %v67, 1
  %v71 = vperm.slane %v67, 2
  %v72 = vperm.slane %v67, 3
  %vm77 = vcmask 64512
  %v79 = vsel %vm77, %v62, 0
  %81 = vmatpush.msra.mxu0 0.0
  %82 = vmatpush.msra.mxu0 0.0
  %83 = vmatpush.msra.mxu0 0.0
  %84 = vmatpush.msra.mxu0 0.0
  %85 = vmatpush.msra.mxu0 0.0
  %86 = vmatpush.msra.mxu0 0.0
  %87 = vmatpush.msra.mxu0 0.0
  %88 = vmatpush.msra.mxu0 0.0
  %89 = vmatpush.msra.mxu0 0.0
  %90 = vmatpush.msra.mxu0 0.0
  %91 = vmatpush.msra.mxu0 0.0
  %92 = vmatpush.msra.mxu0 0.0
  %93 = vmatpush.msra.mxu0 0.0
  %94 = vmatpush.msra.mxu0 0.0
  %95 = vmatpush.msra.mxu0 0.0
  %96 = vmatpush.msra.mxu0 %v63
  %97 = vmatmul.f32.gmra.mxu0 %v79
  %v98 = vpop.f32.mrf.mxu0
  %v99 = vadd.f32 %v69, %v98
  %100 = vdwg.mxu0
  %101 = vmatpush.msra.mxu0 0.0
  %102 = vmatpush.msra.mxu0 0.0
  %103 = vmatpush.msra.mxu0 0.0
  %104 = vmatpush.msra.mxu0 0.0
  %105 = vmatpush.msra.mxu0 0.0
  %106 = vmatpush.msra.mxu0 0.0
  %107 = vmatpush.msra.mxu0 0.0
  %108 = vmatpush.msra.mxu0 0.0
  %109 = vmatpush.msra.mxu0 0.0
  %110 = vmatpush.msra.mxu0 0.0
  %111 = vmatpush.msra.mxu0 0.0
  %112 = vmatpush.msra.mxu0 0.0
  %113 = vmatpush.msra.mxu0 0.0
  %114 = vmatpush.msra.mxu0 0.0
  %115 = vmatpush.msra.mxu0 0.0
  %116 = vmatpush.msra.mxu0 %v64
  %117 = vmatmul.f32.gmra.mxu0 %v79
  %v118 = vpop.f32.mrf.mxu0
  %v119 = vadd.f32 %v70, %v118
  %120 = vdwg.mxu0
  %121 = vmatpush.msra.mxu0 0.0
  %122 = vmatpush.msra.mxu0 0.0
  %123 = vmatpush.msra.mxu0 0.0
  %124 = vmatpush.msra.mxu0 0.0
  %125 = vmatpush.msra.mxu0 0.0
  %126 = vmatpush.msra.mxu0 0.0
  %127 = vmatpush.msra.mxu0 0.0
  %128 = vmatpush.msra.mxu0 0.0
  %129 = vmatpush.msra.mxu0 0.0
  %130 = vmatpush.msra.mxu0 0.0
  %131 = vmatpush.msra.mxu0 0.0
  %132 = vmatpush.msra.mxu0 0.0
  %133 = vmatpush.msra.mxu0 0.0
  %134 = vmatpush.msra.mxu0 0.0
  %135 = vmatpush.msra.mxu0 0.0
  %136 = vmatpush.msra.mxu0 %v65
  %137 = vmatmul.f32.gmra.mxu0 %v79
  %v138 = vpop.f32.mrf.mxu0
  %v139 = vadd.f32 %v71, %v138
  %140 = vdwg.mxu0
  %141 = vmatpush.msra.mxu0 0.0
  %142 = vmatpush.msra.mxu0 0.0
  %143 = vmatpush.msra.mxu0 0.0
  %144 = vmatpush.msra.mxu0 0.0
  %145 = vmatpush.msra.mxu0 0.0
  %146 = vmatpush.msra.mxu0 0.0
  %147 = vmatpush.msra.mxu0 0.0
  %148 = vmatpush.msra.mxu0 0.0
  %149 = vmatpush.msra.mxu0 0.0
  %150 = vmatpush.msra.mxu0 0.0
  %151 = vmatpush.msra.mxu0 0.0
  %152 = vmatpush.msra.mxu0 0.0
  %153 = vmatpush.msra.mxu0 0.0
  %154 = vmatpush.msra.mxu0 0.0
  %155 = vmatpush.msra.mxu0 0.0
  %156 = vmatpush.msra.mxu0 %v66
  %157 = vmatmul.f32.gmra.mxu0 %v79
  %v158 = vpop.f32.mrf.mxu0
  %v159 = vadd.f32 %v72, %v158
  %160 = vdwg.mxu0
  %vm161 = vcmp.gt.f32.partialorder %v99, 0.0
  %vm162 = vcmp.gt.f32.partialorder %v119, 0.0
  %vm163 = vcmp.gt.f32.partialorder %v139, 0.0
  %vm164 = vcmp.gt.f32.partialorder %v159, 0.0
  %v165 = vmul.f32 %v99, 0.01
  %v166 = vmul.f32 %v119, 0.01
  %v167 = vmul.f32 %v139, 0.01
  %v168 = vmul.f32 %v159, 0.01
  %v169 = vsel %vm161, %v99, %v165
  %v170 = vsel %vm162, %v119, %v166
  %v171 = vsel %vm163, %v139, %v167
  %v172 = vsel %vm164, %v159, %v168
  %v173 = vld [vmem:[%s1] sm:$0x1]
  %v174 = vld [vmem:[%s2] sm:$0xff]
  %v175 = vld [vmem:[%s2 + $0x8] sm:$0xff]
  %v176 = vld [vmem:[%s3] sm:$0x1]
  %vm177 = vcmask 130048
  %v179 = vsel %vm177, %v173, 0
  %181 = vmatpush.msra.mxu0 0.0
  %182 = vmatpush.msra.mxu0 0.0
  %183 = vmatpush.msra.mxu0 0.0
  %184 = vmatpush.msra.mxu0 0.0
  %185 = vmatpush.msra.mxu0 0.0
  %186 = vmatpush.msra.mxu0 0.0
  %187 = vmatpush.msra.mxu0 0.0
  %188 = vmatpush.msra.mxu0 0.0
  %189 = vmatpush.msra.mxu0 0.0
  %190 = vmatpush.msra.mxu0 0.0
  %191 = vmatpush.msra.mxu0 0.0
  %192 = vmatpush.msra.mxu0 0.0
  %193 = vmatpush.msra.mxu0 0.0
  %194 = vmatpush.msra.mxu0 0.0
  %195 = vmatpush.msra.mxu0 %v175
  %196 = vmatpush.msra.mxu0 %v174
  %197 = vmatmul.f32.gmra.mxu0 %v179
  %v198 = vpop.f32.mrf.mxu0
  %v199 = vadd.f32 %v176, %v198
  %200 = vdwg.mxu0
  %v201 = vperm.slane %v199, 0
  %v202 = vld [vmem:[%s6] sm:$0xff]
  %v203 = vld [vmem:[%s6 + $0x8] sm:$0xff]
  %v204 = vld [vmem:[%s6 + $0x10] sm:$0xff]
  %v205 = vld [vmem:[%s6 + $0x18] sm:$0xff]
  %v206 = vld [vmem:[%s6 + $0x20] sm:$0xff]
  %v207 = vld [vmem:[%s6 + $0x28] sm:$0xff]
  %v208 = vld [vmem:[%s6 + $0x30] sm:$0xff]
  %v209 = vld [vmem:[%s6 + $0x38] sm:$0xff]
  %v210 = vld [vmem:[%s6 + $0x40] sm:$0xff]
  %v211 = vld [vmem:[%s6 + $0x48] sm:$0xff]
  %v212 = vld [vmem:[%s6 + $0x50] sm:$0xff]
  %v213 = vld [vmem:[%s6 + $0x58] sm:$0xff]
  %v214 = vld [vmem:[%s6 + $0x60] sm:$0xff]
  %v215 = vld [vmem:[%s6 + $0x68] sm:$0xff]
  %v216 = vld [vmem:[%s6 + $0x70] sm:$0xff]
  %v217 = vld [vmem:[%s6 + $0x78] sm:$0xff]
  %v218 = vld [vmem:[%s6 + $0x80] sm:$0xff]
  %v219 = vld [vmem:[%s6 + $0x88] sm:$0xff]
  %v220 = vld [vmem:[%s6 + $0x90] sm:$0xff]
  %v221 = vld [vmem:[%s6 + $0x98] sm:$0xff]
  %v222 = vld [vmem:[%s6 + $0xa0] sm:$0xff]
  %v223 = vld [vmem:[%s6 + $0xa8] sm:$0xff]
  %v224 = vld [vmem:[%s6 + $0xb0] sm:$0xff]
  %v225 = vld [vmem:[%s6 + $0xb8] sm:$0xff]
  %v226 = vld [vmem:[%s6 + $0xc0] sm:$0xff]
  %v227 = vld [vmem:[%s6 + $0xc8] sm:$0xff]
  %v228 = vld [vmem:[%s6 + $0xd0] sm:$0xff]
  %v229 = vld [vmem:[%s6 + $0xd8] sm:$0xff]
  %v230 = vld [vmem:[%s6 + $0xe0] sm:$0xff]
  %v231 = vld [vmem:[%s6 + $0xe8] sm:$0xff]
  %v232 = vld [vmem:[%s6 + $0xf0] sm:$0xff]
  %v233 = vld [vmem:[%s6 + $0xf8] sm:$0xff]
  %v234 = vld [vmem:[%s6 + $0x100] sm:$0xff]
  %v235 = vld [vmem:[%s6 + $0x108] sm:$0xff]
  %v236 = vld [vmem:[%s6 + $0x110] sm:$0xff]
  %v237 = vld [vmem:[%s6 + $0x118] sm:$0xff]
  %v238 = vld [vmem:[%s6 + $0x120] sm:$0xff]
  %v239 = vld [vmem:[%s6 + $0x128] sm:$0xff]
  %v240 = vld [vmem:[%s6 + $0x130] sm:$0xff]
  %v241 = vld [vmem:[%s6 + $0x138] sm:$0xff]
  %v242 = vld [vmem:[%s6 + $0x140] sm:$0xff]
  %v243 = vld [vmem:[%s6 + $0x148] sm:$0xff]
  %v244 = vld [vmem:[%s6 + $0x150] sm:$0xff]
  %v245 = vld [vmem:[%s6 + $0x158] sm:$0xff]
  %v246 = vld [vmem:[%s6 + $0x160] sm:$0xff]
  %v247 = vld [vmem:[%s6 + $0x168] sm:$0xff]
  %v248 = vld [vmem:[%s6 + $0x170] sm:$0xff]
  %v249 = vld [vmem:[%s6 + $0x178] sm:$0xff]
  %v250 = vld [vmem:[%s6 + $0x180] sm:$0xff]
  %v251 = vld [vmem:[%s6 + $0x188] sm:$0xff]
  %v252 = vld [vmem:[%s6 + $0x190] sm:$0xff]
  %v253 = vld [vmem:[%s6 + $0x198] sm:$0xff]
  %v254 = vld [vmem:[%s6 + $0x1a0] sm:$0xff]
  %v255 = vld [vmem:[%s6 + $0x1a8] sm:$0xff]
  %v256 = vld [vmem:[%s6 + $0x1b0] sm:$0xff]
  %v257 = vld [vmem:[%s6 + $0x1b8] sm:$0xff]
  %v258 = vld [vmem:[%s6 + $0x1c0] sm:$0xff]
  %v259 = vld [vmem:[%s6 + $0x1c8] sm:$0xff]
  %v260 = vld [vmem:[%s6 + $0x1d0] sm:$0xff]
  %v261 = vld [vmem:[%s6 + $0x1d8] sm:$0xff]
  %v262 = vld [vmem:[%s6 + $0x1e0] sm:$0xff]
  %v263 = vld [vmem:[%s6 + $0x1e8] sm:$0xff]
  %v264 = vld [vmem:[%s6 + $0x1f0] sm:$0xff]
  %v265 = vld [vmem:[%s6 + $0x1f8] sm:$0xff]
  %v266 = vld [vmem:[%s7] sm:$0xff]
  %v267 = vld [vmem:[%s7 + $0x8] sm:$0xff]
  %v268 = vld [vmem:[%s7 + $0x10] sm:$0xff]
  %v269 = vld [vmem:[%s7 + $0x18] sm:$0xff]
  %v270 = vld [vmem:[%s7 + $0x20] sm:$0xff]
  %v271 = vld [vmem:[%s7 + $0x28] sm:$0xff]
  %v272 = vld [vmem:[%s7 + $0x30] sm:$0xff]
  %v273 = vld [vmem:[%s7 + $0x38] sm:$0xff]
  %v274 = vld [vmem:[%s7 + $0x40] sm:$0xff]
  %v275 = vld [vmem:[%s7 + $0x48] sm:$0xff]
  %v276 = vld [vmem:[%s7 + $0x50] sm:$0xff]
  %v277 = vld [vmem:[%s7 + $0x58] sm:$0xff]
  %v278 = vld [vmem:[%s7 + $0x60] sm:$0xff]
  %v279 = vld [vmem:[%s7 + $0x68] sm:$0xff]
  %v280 = vld [vmem:[%s7 + $0x70] sm:$0xff]
  %v281 = vld [vmem:[%s7 + $0x78] sm:$0xff]
  %v282 = vld [vmem:[%s7 + $0x80] sm:$0xff]
  %v283 = vld [vmem:[%s7 + $0x88] sm:$0xff]
  %v284 = vld [vmem:[%s7 + $0x90] sm:$0xff]
  %v285 = vld [vmem:[%s7 + $0x98] sm:$0xff]
  %v286 = vld [vmem:[%s7 + $0xa0] sm:$0xff]
  %v287 = vld [vmem:[%s7 + $0xa8] sm:$0xff]
  %v288 = vld [vmem:[%s7 + $0xb0] sm:$0xff]
  %v289 = vld [vmem:[%s7 + $0xb8] sm:$0xff]
  %v290 = vld [vmem:[%s7 + $0xc0] sm:$0xff]
  %v291 = vld [vmem:[%s7 + $0xc8] sm:$0xff]
  %v292 = vld [vmem:[%s7 + $0xd0] sm:$0xff]
  %v293 = vld [vmem:[%s7 + $0xd8] sm:$0xff]
  %v294 = vld [vmem:[%s7 + $0xe0] sm:$0xff]
  %v295 = vld [vmem:[%s7 + $0xe8] sm:$0xff]
  %v296 = vld [vmem:[%s7 + $0xf0] sm:$0xff]
  %v297 = vld [vmem:[%s7 + $0xf8] sm:$0xff]
  %v298 = vld [vmem:[%s7 + $0x100] sm:$0xff]
  %v299 = vld [vmem:[%s7 + $0x108] sm:$0xff]
  %v300 = vld [vmem:[%s7 + $0x110] sm:$0xff]
  %v301 = vld [vmem:[%s7 + $0x118] sm:$0xff]
  %v302 = vld [vmem:[%s7 + $0x120] sm:$0xff]
  %v303 = vld [vmem:[%s7 + $0x128] sm:$0xff]
  %v304 = vld [vmem:[%s7 + $0x130] sm:$0xff]
  %v305 = vld [vmem:[%s7 + $0x138] sm:$0xff]
  %v306 = vld [vmem:[%s7 + $0x140] sm:$0xff]
  %v307 = vld [vmem:[%s7 + $0x148] sm:$0xff]
  %v308 = vld [vmem:[%s7 + $0x150] sm:$0xff]
  %v309 = vld [vmem:[%s7 + $0x158] sm:$0xff]
  %v310 = vld [vmem:[%s7 + $0x160] sm:$0xff]
  %v311 = vld [vmem:[%s7 + $0x168] sm:$0xff]
  %v312 = vld [vmem:[%s7 + $0x170] sm:$0xff]
  %v313 = vld [vmem:[%s7 + $0x178] sm:$0xff]
  %v314 = vld [vmem:[%s7 + $0x180] sm:$0xff]
  %v315 = vld [vmem:[%s7 + $0x188] sm:$0xff]
  %v316 = vld [vmem:[%s7 + $0x190] sm:$0xff]
  %v317 = vld [vmem:[%s7 + $0x198] sm:$0xff]
  %v318 = vld [vmem:[%s7 + $0x1a0] sm:$0xff]
  %v319 = vld [vmem:[%s7 + $0x1a8] sm:$0xff]
  %v320 = vld [vmem:[%s7 + $0x1b0] sm:$0xff]
  %v321 = vld [vmem:[%s7 + $0x1b8] sm:$0xff]
  %v322 = vld [vmem:[%s7 + $0x1c0] sm:$0xff]
  %v323 = vld [vmem:[%s7 + $0x1c8] sm:$0xff]
  %v324 = vld [vmem:[%s7 + $0x1d0] sm:$0xff]
  %v325 = vld [vmem:[%s7 + $0x1d8] sm:$0xff]
  %v326 = vld [vmem:[%s7 + $0x1e0] sm:$0xff]
  %v327 = vld [vmem:[%s7 + $0x1e8] sm:$0xff]
  %v328 = vld [vmem:[%s7 + $0x1f0] sm:$0xff]
  %v329 = vld [vmem:[%s7 + $0x1f8] sm:$0xff]
  %v330 = vld [vmem:[%s8] sm:$0xf]
  %v332 = vperm.slane %v330, 0
  %v333 = vperm.slane %v330, 1
  %v334 = vperm.slane %v330, 2
  %v335 = vperm.slane %v330, 3
  %v340 = vmax.f32 %v201, 0.0
  %341 = vmatpush.msra.mxu0 %v326
  %342 = vmatpush.msra.mxu0 %v322
  %343 = vmatpush.msra.mxu0 %v318
  %344 = vmatpush.msra.mxu0 %v314
  %345 = vmatpush.msra.mxu0 %v310
  %346 = vmatpush.msra.mxu0 %v306
  %347 = vmatpush.msra.mxu0 %v302
  %348 = vmatpush.msra.mxu0 %v298
  %349 = vmatpush.msra.mxu0 %v294
  %350 = vmatpush.msra.mxu0 %v290
  %351 = vmatpush.msra.mxu0 %v286
  %352 = vmatpush.msra.mxu0 %v282
  %353 = vmatpush.msra.mxu0 %v278
  %354 = vmatpush.msra.mxu0 %v274
  %355 = vmatpush.msra.mxu0 %v270
  %356 = vmatpush.msra.mxu0 %v266
  %357 = vmatmul.f32.gmra.mxu0 %v169
  %v358 = vpop.f32.mrf.mxu0
  %v359 = vadd.f32 0.0, %v358
  %360 = vdwg.mxu0
  %361 = vmatpush.msra.mxu0 %v327
  %362 = vmatpush.msra.mxu0 %v323
  %363 = vmatpush.msra.mxu0 %v319
  %364 = vmatpush.msra.mxu0 %v315
  %365 = vmatpush.msra.mxu0 %v311
  %366 = vmatpush.msra.mxu0 %v307
  %367 = vmatpush.msra.mxu0 %v303
  %368 = vmatpush.msra.mxu0 %v299
  %369 = vmatpush.msra.mxu0 %v295
  %370 = vmatpush.msra.mxu0 %v291
  %371 = vmatpush.msra.mxu0 %v287
  %372 = vmatpush.msra.mxu0 %v283
  %373 = vmatpush.msra.mxu0 %v279
  %374 = vmatpush.msra.mxu0 %v275
  %375 = vmatpush.msra.mxu0 %v271
  %376 = vmatpush.msra.mxu0 %v267
  %377 = vmatmul.f32.gmra.mxu0 %v169
  %v378 = vpop.f32.mrf.mxu0
  %v379 = vadd.f32 0.0, %v378
  %380 = vdwg.mxu0
  %381 = vmatpush.msra.mxu0 %v328
  %382 = vmatpush.msra.mxu0 %v324
  %383 = vmatpush.msra.mxu0 %v320
  %384 = vmatpush.msra.mxu0 %v316
  %385 = vmatpush.msra.mxu0 %v312
  %386 = vmatpush.msra.mxu0 %v308
  %387 = vmatpush.msra.mxu0 %v304
  %388 = vmatpush.msra.mxu0 %v300
  %389 = vmatpush.msra.mxu0 %v296
  %390 = vmatpush.msra.mxu0 %v292
  %391 = vmatpush.msra.mxu0 %v288
  %392 = vmatpush.msra.mxu0 %v284
  %393 = vmatpush.msra.mxu0 %v280
  %394 = vmatpush.msra.mxu0 %v276
  %395 = vmatpush.msra.mxu0 %v272
  %396 = vmatpush.msra.mxu0 %v268
  %397 = vmatmul.f32.gmra.mxu0 %v169
  %v398 = vpop.f32.mrf.mxu0
  %v399 = vadd.f32 0.0, %v398
  %400 = vdwg.mxu0
  %401 = vmatpush.msra.mxu0 %v329
  %402 = vmatpush.msra.mxu0 %v325
  %403 = vmatpush.msra.mxu0 %v321
  %404 = vmatpush.msra.mxu0 %v317
  %405 = vmatpush.msra.mxu0 %v313
  %406 = vmatpush.msra.mxu0 %v309
  %407 = vmatpush.msra.mxu0 %v305
  %408 = vmatpush.msra.mxu0 %v301
  %409 = vmatpush.msra.mxu0 %v297
  %410 = vmatpush.msra.mxu0 %v293
  %411 = vmatpush.msra.mxu0 %v289
  %412 = vmatpush.msra.mxu0 %v285
  %413 = vmatpush.msra.mxu0 %v281
  %414 = vmatpush.msra.mxu0 %v277
  %415 = vmatpush.msra.mxu0 %v273
  %416 = vmatpush.msra.mxu0 %v269
  %417 = vmatmul.f32.gmra.mxu0 %v169
  %v418 = vpop.f32.mrf.mxu0
  %v419 = vadd.f32 0.0, %v418
  %420 = vdwg.mxu0
  %421 = vmatpush.msra.mxu0 %v262
  %422 = vmatpush.msra.mxu0 %v258
  %423 = vmatpush.msra.mxu0 %v254
  %424 = vmatpush.msra.mxu0 %v250
  %425 = vmatpush.msra.mxu0 %v246
  %426 = vmatpush.msra.mxu0 %v242
  %427 = vmatpush.msra.mxu0 %v238
  %428 = vmatpush.msra.mxu0 %v234
  %429 = vmatpush.msra.mxu0 %v230
  %430 = vmatpush.msra.mxu0 %v226
  %431 = vmatpush.msra.mxu0 %v222
  %432 = vmatpush.msra.mxu0 %v218
  %433 = vmatpush.msra.mxu0 %v214
  %434 = vmatpush.msra.mxu0 %v210
  %435 = vmatpush.msra.mxu0 %v206
  %436 = vmatpush.msra.mxu0 %v202
  %437 = vmatmul.f32.gmra.mxu0 %v340
  %v438 = vpop.f32.mrf.mxu0
  %v439 = vadd.f32 %v359, %v438
  %440 = vdwg.mxu0
  %441 = vmatpush.msra.mxu0 %v263
  %442 = vmatpush.msra.mxu0 %v259
  %443 = vmatpush.msra.mxu0 %v255
  %444 = vmatpush.msra.mxu0 %v251
  %445 = vmatpush.msra.mxu0 %v247
  %446 = vmatpush.msra.mxu0 %v243
  %447 = vmatpush.msra.mxu0 %v239
  %448 = vmatpush.msra.mxu0 %v235
  %449 = vmatpush.msra.mxu0 %v231
  %450 = vmatpush.msra.mxu0 %v227
  %451 = vmatpush.msra.mxu0 %v223
  %452 = vmatpush.msra.mxu0 %v219
  %453 = vmatpush.msra.mxu0 %v215
  %454 = vmatpush.msra.mxu0 %v211
  %455 = vmatpush.msra.mxu0 %v207
  %456 = vmatpush.msra.mxu0 %v203
  %457 = vmatmul.f32.gmra.mxu0 %v340
  %v458 = vpop.f32.mrf.mxu0
  %v459 = vadd.f32 %v379, %v458
  %460 = vdwg.mxu0
  %461 = vmatpush.msra.mxu0 %v264
  %462 = vmatpush.msra.mxu0 %v260
  %463 = vmatpush.msra.mxu0 %v256
  %464 = vmatpush.msra.mxu0 %v252
  %465 = vmatpush.msra.mxu0 %v248
  %466 = vmatpush.msra.mxu0 %v244
  %467 = vmatpush.msra.mxu0 %v240
  %468 = vmatpush.msra.mxu0 %v236
  %469 = vmatpush.msra.mxu0 %v232
  %470 = vmatpush.msra.mxu0 %v228
  %471 = vmatpush.msra.mxu0 %v224
  %472 = vmatpush.msra.mxu0 %v220
  %473 = vmatpush.msra.mxu0 %v216
  %474 = vmatpush.msra.mxu0 %v212
  %475 = vmatpush.msra.mxu0 %v208
  %476 = vmatpush.msra.mxu0 %v204
  %477 = vmatmul.f32.gmra.mxu0 %v340
  %v478 = vpop.f32.mrf.mxu0
  %v479 = vadd.f32 %v399, %v478
  %480 = vdwg.mxu0
  %481 = vmatpush.msra.mxu0 %v265
  %482 = vmatpush.msra.mxu0 %v261
  %483 = vmatpush.msra.mxu0 %v257
  %484 = vmatpush.msra.mxu0 %v253
  %485 = vmatpush.msra.mxu0 %v249
  %486 = vmatpush.msra.mxu0 %v245
  %487 = vmatpush.msra.mxu0 %v241
  %488 = vmatpush.msra.mxu0 %v237
  %489 = vmatpush.msra.mxu0 %v233
  %490 = vmatpush.msra.mxu0 %v229
  %491 = vmatpush.msra.mxu0 %v225
  %492 = vmatpush.msra.mxu0 %v221
  %493 = vmatpush.msra.mxu0 %v217
  %494 = vmatpush.msra.mxu0 %v213
  %495 = vmatpush.msra.mxu0 %v209
  %496 = vmatpush.msra.mxu0 %v205
  %497 = vmatmul.f32.gmra.mxu0 %v340
  %v498 = vpop.f32.mrf.mxu0
  %v499 = vadd.f32 %v419, %v498
  %500 = vdwg.mxu0
  %v501 = vadd.f32 %v439, %v332
  %v502 = vadd.f32 %v459, %v333
  %v503 = vadd.f32 %v479, %v334
  %v504 = vadd.f32 %v499, %v335
  %v505 = vmul.f32 %v501, 0.5
  %v506 = vtanh.pop %v505
  %v507 = vmul.f32 %v506, 0.5
  %v508 = vadd.f32 %v507, 0.5
  %v509 = vmul.f32 %v502, 0.5
  %v510 = vtanh.pop %v509
  %v511 = vmul.f32 %v510, 0.5
  %v512 = vadd.f32 %v511, 0.5
  %v513 = vtanh.pop %v503
  %v514 = vmul.f32 %v504, 0.5
  %v515 = vtanh.pop %v514
  %v516 = vmul.f32 %v515, 0.5
  %v517 = vadd.f32 %v516, 0.5
  %v518 = vmul.f32 %v512, %v170
  %v519 = vmul.f32 %v508, %v513
  %v520 = vadd.f32 %v518, %v519
  %v521 = vtanh.pop %v520
  %v522 = vmul.f32 %v517, %v521
  %v523 = vmax.f32 %v522, 0.0
  %524 = vmatpush.msra.mxu0 %v326
  %525 = vmatpush.msra.mxu0 %v322
  %526 = vmatpush.msra.mxu0 %v318
  %527 = vmatpush.msra.mxu0 %v314
  %528 = vmatpush.msra.mxu0 %v310
  %529 = vmatpush.msra.mxu0 %v306
  %530 = vmatpush.msra.mxu0 %v302
  %531 = vmatpush.msra.mxu0 %v298
  %532 = vmatpush.msra.mxu0 %v294
  %533 = vmatpush.msra.mxu0 %v290
  %534 = vmatpush.msra.mxu0 %v286
  %535 = vmatpush.msra.mxu0 %v282
  %536 = vmatpush.msra.mxu0 %v278
  %537 = vmatpush.msra.mxu0 %v274
  %538 = vmatpush.msra.mxu0 %v270
  %539 = vmatpush.msra.mxu0 %v266
  %540 = vmatmul.f32.gmra.mxu0 %v522
  %v541 = vpop.f32.mrf.mxu0
  %v542 = vadd.f32 0.0, %v541
  %543 = vdwg.mxu0
  %544 = vmatpush.msra.mxu0 %v327
  %545 = vmatpush.msra.mxu0 %v323
  %546 = vmatpush.msra.mxu0 %v319
  %547 = vmatpush.msra.mxu0 %v315
  %548 = vmatpush.msra.mxu0 %v311
  %549 = vmatpush.msra.mxu0 %v307
  %550 = vmatpush.msra.mxu0 %v303
  %551 = vmatpush.msra.mxu0 %v299
  %552 = vmatpush.msra.mxu0 %v295
  %553 = vmatpush.msra.mxu0 %v291
  %554 = vmatpush.msra.mxu0 %v287
  %555 = vmatpush.msra.mxu0 %v283
  %556 = vmatpush.msra.mxu0 %v279
  %557 = vmatpush.msra.mxu0 %v275
  %558 = vmatpush.msra.mxu0 %v271
  %559 = vmatpush.msra.mxu0 %v267
  %560 = vmatmul.f32.gmra.mxu0 %v522
  %v561 = vpop.f32.mrf.mxu0
  %v562 = vadd.f32 0.0, %v561
  %563 = vdwg.mxu0
  %564 = vmatpush.msra.mxu0 %v328
  %565 = vmatpush.msra.mxu0 %v324
  %566 = vmatpush.msra.mxu0 %v320
  %567 = vmatpush.msra.mxu0 %v316
  %568 = vmatpush.msra.mxu0 %v312
  %569 = vmatpush.msra.mxu0 %v308
  %570 = vmatpush.msra.mxu0 %v304
  %571 = vmatpush.msra.mxu0 %v300
  %572 = vmatpush.msra.mxu0 %v296
  %573 = vmatpush.msra.mxu0 %v292
  %574 = vmatpush.msra.mxu0 %v288
  %575 = vmatpush.msra.mxu0 %v284
  %576 = vmatpush.msra.mxu0 %v280
  %577 = vmatpush.msra.mxu0 %v276
  %578 = vmatpush.msra.mxu0 %v272
  %579 = vmatpush.msra.mxu0 %v268
  %580 = vmatmul.f32.gmra.mxu0 %v522
  %v581 = vpop.f32.mrf.mxu0
  %v582 = vadd.f32 0.0, %v581
  %583 = vdwg.mxu0
  %584 = vmatpush.msra.mxu0 %v329
  %585 = vmatpush.msra.mxu0 %v325
  %586 = vmatpush.msra.mxu0 %v321
  %587 = vmatpush.msra.mxu0 %v317
  %588 = vmatpush.msra.mxu0 %v313
  %589 = vmatpush.msra.mxu0 %v309
  %590 = vmatpush.msra.mxu0 %v305
  %591 = vmatpush.msra.mxu0 %v301
  %592 = vmatpush.msra.mxu0 %v297
  %593 = vmatpush.msra.mxu0 %v293
  %594 = vmatpush.msra.mxu0 %v289
  %595 = vmatpush.msra.mxu0 %v285
  %596 = vmatpush.msra.mxu0 %v281
  %597 = vmatpush.msra.mxu0 %v277
  %598 = vmatpush.msra.mxu0 %v273
  %599 = vmatpush.msra.mxu0 %v269
  %600 = vmatmul.f32.gmra.mxu0 %v522
  %v601 = vpop.f32.mrf.mxu0
  %v602 = vadd.f32 0.0, %v601
  %603 = vdwg.mxu0
  %604 = vmatpush.msra.mxu0 %v262
  %605 = vmatpush.msra.mxu0 %v258
  %606 = vmatpush.msra.mxu0 %v254
  %607 = vmatpush.msra.mxu0 %v250
  %608 = vmatpush.msra.mxu0 %v246
  %609 = vmatpush.msra.mxu0 %v242
  %610 = vmatpush.msra.mxu0 %v238
  %611 = vmatpush.msra.mxu0 %v234
  %612 = vmatpush.msra.mxu0 %v230
  %613 = vmatpush.msra.mxu0 %v226
  %614 = vmatpush.msra.mxu0 %v222
  %615 = vmatpush.msra.mxu0 %v218
  %616 = vmatpush.msra.mxu0 %v214
  %617 = vmatpush.msra.mxu0 %v210
  %618 = vmatpush.msra.mxu0 %v206
  %619 = vmatpush.msra.mxu0 %v202
  %620 = vmatmul.f32.gmra.mxu0 %v523
  %v621 = vpop.f32.mrf.mxu0
  %v622 = vadd.f32 %v542, %v621
  %623 = vdwg.mxu0
  %624 = vmatpush.msra.mxu0 %v263
  %625 = vmatpush.msra.mxu0 %v259
  %626 = vmatpush.msra.mxu0 %v255
  %627 = vmatpush.msra.mxu0 %v251
  %628 = vmatpush.msra.mxu0 %v247
  %629 = vmatpush.msra.mxu0 %v243
  %630 = vmatpush.msra.mxu0 %v239
  %631 = vmatpush.msra.mxu0 %v235
  %632 = vmatpush.msra.mxu0 %v231
  %633 = vmatpush.msra.mxu0 %v227
  %634 = vmatpush.msra.mxu0 %v223
  %635 = vmatpush.msra.mxu0 %v219
  %636 = vmatpush.msra.mxu0 %v215
  %637 = vmatpush.msra.mxu0 %v211
  %638 = vmatpush.msra.mxu0 %v207
  %639 = vmatpush.msra.mxu0 %v203
  %640 = vmatmul.f32.gmra.mxu0 %v523
  %v641 = vpop.f32.mrf.mxu0
  %v642 = vadd.f32 %v562, %v641
  %643 = vdwg.mxu0
  %644 = vmatpush.msra.mxu0 %v264
  %645 = vmatpush.msra.mxu0 %v260
  %646 = vmatpush.msra.mxu0 %v256
  %647 = vmatpush.msra.mxu0 %v252
  %648 = vmatpush.msra.mxu0 %v248
  %649 = vmatpush.msra.mxu0 %v244
  %650 = vmatpush.msra.mxu0 %v240
  %651 = vmatpush.msra.mxu0 %v236
  %652 = vmatpush.msra.mxu0 %v232
  %653 = vmatpush.msra.mxu0 %v228
  %654 = vmatpush.msra.mxu0 %v224
  %655 = vmatpush.msra.mxu0 %v220
  %656 = vmatpush.msra.mxu0 %v216
  %657 = vmatpush.msra.mxu0 %v212
  %658 = vmatpush.msra.mxu0 %v208
  %659 = vmatpush.msra.mxu0 %v204
  %660 = vmatmul.f32.gmra.mxu0 %v523
  %v661 = vpop.f32.mrf.mxu0
  %v662 = vadd.f32 %v582, %v661
  %663 = vdwg.mxu0
  %664 = vmatpush.msra.mxu0 %v265
  %665 = vmatpush.msra.mxu0 %v261
  %666 = vmatpush.msra.mxu0 %v257
  %667 = vmatpush.msra.mxu0 %v253
  %668 = vmatpush.msra.mxu0 %v249
  %669 = vmatpush.msra.mxu0 %v245
  %670 = vmatpush.msra.mxu0 %v241
  %671 = vmatpush.msra.mxu0 %v237
  %672 = vmatpush.msra.mxu0 %v233
  %673 = vmatpush.msra.mxu0 %v229
  %674 = vmatpush.msra.mxu0 %v225
  %675 = vmatpush.msra.mxu0 %v221
  %676 = vmatpush.msra.mxu0 %v217
  %677 = vmatpush.msra.mxu0 %v213
  %678 = vmatpush.msra.mxu0 %v209
  %679 = vmatpush.msra.mxu0 %v205
  %680 = vmatmul.f32.gmra.mxu0 %v523
  %v681 = vpop.f32.mrf.mxu0
  %v682 = vadd.f32 %v602, %v681
  %683 = vdwg.mxu0
  %v684 = vadd.f32 %v622, %v332
  %v685 = vadd.f32 %v642, %v333
  %v686 = vadd.f32 %v662, %v334
  %v687 = vadd.f32 %v682, %v335
  %v688 = vmul.f32 %v684, 0.5
  %v689 = vtanh.pop %v688
  %v690 = vmul.f32 %v689, 0.5
  %v691 = vadd.f32 %v690, 0.5
  %v692 = vmul.f32 %v685, 0.5
  %v693 = vtanh.pop %v692
  %v694 = vmul.f32 %v693, 0.5
  %v695 = vadd.f32 %v694, 0.5
  %v696 = vtanh.pop %v686
  %v697 = vmul.f32 %v687, 0.5
  %v698 = vtanh.pop %v697
  %v699 = vmul.f32 %v698, 0.5
  %v700 = vadd.f32 %v699, 0.5
  %v701 = vmul.f32 %v695, %v520
  %v702 = vmul.f32 %v691, %v696
  %v703 = vadd.f32 %v701, %v702
  %v704 = vtanh.pop %v703
  %v705 = vmul.f32 %v700, %v704
  %v706 = vmax.f32 %v705, 0.0
  %707 = vmatpush.msra.mxu0 %v326
  %708 = vmatpush.msra.mxu0 %v322
  %709 = vmatpush.msra.mxu0 %v318
  %710 = vmatpush.msra.mxu0 %v314
  %711 = vmatpush.msra.mxu0 %v310
  %712 = vmatpush.msra.mxu0 %v306
  %713 = vmatpush.msra.mxu0 %v302
  %714 = vmatpush.msra.mxu0 %v298
  %715 = vmatpush.msra.mxu0 %v294
  %716 = vmatpush.msra.mxu0 %v290
  %717 = vmatpush.msra.mxu0 %v286
  %718 = vmatpush.msra.mxu0 %v282
  %719 = vmatpush.msra.mxu0 %v278
  %720 = vmatpush.msra.mxu0 %v274
  %721 = vmatpush.msra.mxu0 %v270
  %722 = vmatpush.msra.mxu0 %v266
  %723 = vmatmul.f32.gmra.mxu0 %v705
  %v724 = vpop.f32.mrf.mxu0
  %v725 = vadd.f32 0.0, %v724
  %726 = vdwg.mxu0
  %727 = vmatpush.msra.mxu0 %v327
  %728 = vmatpush.msra.mxu0 %v323
  %729 = vmatpush.msra.mxu0 %v319
  %730 = vmatpush.msra.mxu0 %v315
  %731 = vmatpush.msra.mxu0 %v311
  %732 = vmatpush.msra.mxu0 %v307
  %733 = vmatpush.msra.mxu0 %v303
  %734 = vmatpush.msra.mxu0 %v299
  %735 = vmatpush.msra.mxu0 %v295
  %736 = vmatpush.msra.mxu0 %v291
  %737 = vmatpush.msra.mxu0 %v287
  %738 = vmatpush.msra.mxu0 %v283
  %739 = vmatpush.msra.mxu0 %v279
  %740 = vmatpush.msra.mxu0 %v275
  %741 = vmatpush.msra.mxu0 %v271
  %742 = vmatpush.msra.mxu0 %v267
  %743 = vmatmul.f32.gmra.mxu0 %v705
  %v744 = vpop.f32.mrf.mxu0
  %v745 = vadd.f32 0.0, %v744
  %746 = vdwg.mxu0
  %747 = vmatpush.msra.mxu0 %v328
  %748 = vmatpush.msra.mxu0 %v324
  %749 = vmatpush.msra.mxu0 %v320
  %750 = vmatpush.msra.mxu0 %v316
  %751 = vmatpush.msra.mxu0 %v312
  %752 = vmatpush.msra.mxu0 %v308
  %753 = vmatpush.msra.mxu0 %v304
  %754 = vmatpush.msra.mxu0 %v300
  %755 = vmatpush.msra.mxu0 %v296
  %756 = vmatpush.msra.mxu0 %v292
  %757 = vmatpush.msra.mxu0 %v288
  %758 = vmatpush.msra.mxu0 %v284
  %759 = vmatpush.msra.mxu0 %v280
  %760 = vmatpush.msra.mxu0 %v276
  %761 = vmatpush.msra.mxu0 %v272
  %762 = vmatpush.msra.mxu0 %v268
  %763 = vmatmul.f32.gmra.mxu0 %v705
  %v764 = vpop.f32.mrf.mxu0
  %v765 = vadd.f32 0.0, %v764
  %766 = vdwg.mxu0
  %767 = vmatpush.msra.mxu0 %v329
  %768 = vmatpush.msra.mxu0 %v325
  %769 = vmatpush.msra.mxu0 %v321
  %770 = vmatpush.msra.mxu0 %v317
  %771 = vmatpush.msra.mxu0 %v313
  %772 = vmatpush.msra.mxu0 %v309
  %773 = vmatpush.msra.mxu0 %v305
  %774 = vmatpush.msra.mxu0 %v301
  %775 = vmatpush.msra.mxu0 %v297
  %776 = vmatpush.msra.mxu0 %v293
  %777 = vmatpush.msra.mxu0 %v289
  %778 = vmatpush.msra.mxu0 %v285
  %779 = vmatpush.msra.mxu0 %v281
  %780 = vmatpush.msra.mxu0 %v277
  %781 = vmatpush.msra.mxu0 %v273
  %782 = vmatpush.msra.mxu0 %v269
  %783 = vmatmul.f32.gmra.mxu0 %v705
  %v784 = vpop.f32.mrf.mxu0
  %v785 = vadd.f32 0.0, %v784
  %786 = vdwg.mxu0
  %787 = vmatpush.msra.mxu0 %v262
  %788 = vmatpush.msra.mxu0 %v258
  %789 = vmatpush.msra.mxu0 %v254
  %790 = vmatpush.msra.mxu0 %v250
  %791 = vmatpush.msra.mxu0 %v246
  %792 = vmatpush.msra.mxu0 %v242
  %793 = vmatpush.msra.mxu0 %v238
  %794 = vmatpush.msra.mxu0 %v234
  %795 = vmatpush.msra.mxu0 %v230
  %796 = vmatpush.msra.mxu0 %v226
  %797 = vmatpush.msra.mxu0 %v222
  %798 = vmatpush.msra.mxu0 %v218
  %799 = vmatpush.msra.mxu0 %v214
  %800 = vmatpush.msra.mxu0 %v210
  %801 = vmatpush.msra.mxu0 %v206
  %802 = vmatpush.msra.mxu0 %v202
  %803 = vmatmul.f32.gmra.mxu0 %v706
  %v804 = vpop.f32.mrf.mxu0
  %v805 = vadd.f32 %v725, %v804
  %806 = vdwg.mxu0
  %807 = vmatpush.msra.mxu0 %v263
  %808 = vmatpush.msra.mxu0 %v259
  %809 = vmatpush.msra.mxu0 %v255
  %810 = vmatpush.msra.mxu0 %v251
  %811 = vmatpush.msra.mxu0 %v247
  %812 = vmatpush.msra.mxu0 %v243
  %813 = vmatpush.msra.mxu0 %v239
  %814 = vmatpush.msra.mxu0 %v235
  %815 = vmatpush.msra.mxu0 %v231
  %816 = vmatpush.msra.mxu0 %v227
  %817 = vmatpush.msra.mxu0 %v223
  %818 = vmatpush.msra.mxu0 %v219
  %819 = vmatpush.msra.mxu0 %v215
  %820 = vmatpush.msra.mxu0 %v211
  %821 = vmatpush.msra.mxu0 %v207
  %822 = vmatpush.msra.mxu0 %v203
  %823 = vmatmul.f32.gmra.mxu0 %v706
  %v824 = vpop.f32.mrf.mxu0
  %v825 = vadd.f32 %v745, %v824
  %826 = vdwg.mxu0
  %827 = vmatpush.msra.mxu0 %v264
  %828 = vmatpush.msra.mxu0 %v260
  %829 = vmatpush.msra.mxu0 %v256
  %830 = vmatpush.msra.mxu0 %v252
  %831 = vmatpush.msra.mxu0 %v248
  %832 = vmatpush.msra.mxu0 %v244
  %833 = vmatpush.msra.mxu0 %v240
  %834 = vmatpush.msra.mxu0 %v236
  %835 = vmatpush.msra.mxu0 %v232
  %836 = vmatpush.msra.mxu0 %v228
  %837 = vmatpush.msra.mxu0 %v224
  %838 = vmatpush.msra.mxu0 %v220
  %839 = vmatpush.msra.mxu0 %v216
  %840 = vmatpush.msra.mxu0 %v212
  %841 = vmatpush.msra.mxu0 %v208
  %842 = vmatpush.msra.mxu0 %v204
  %843 = vmatmul.f32.gmra.mxu0 %v706
  %v844 = vpop.f32.mrf.mxu0
  %v845 = vadd.f32 %v765, %v844
  %846 = vdwg.mxu0
  %847 = vmatpush.msra.mxu0 %v265
  %848 = vmatpush.msra.mxu0 %v261
  %849 = vmatpush.msra.mxu0 %v257
  %850 = vmatpush.msra.mxu0 %v253
  %851 = vmatpush.msra.mxu0 %v249
  %852 = vmatpush.msra.mxu0 %v245
  %853 = vmatpush.msra.mxu0 %v241
  %854 = vmatpush.msra.mxu0 %v237
  %855 = vmatpush.msra.mxu0 %v233
  %856 = vmatpush.msra.mxu0 %v229
  %857 = vmatpush.msra.mxu0 %v225
  %858 = vmatpush.msra.mxu0 %v221
  %859 = vmatpush.msra.mxu0 %v217
  %860 = vmatpush.msra.mxu0 %v213
  %861 = vmatpush.msra.mxu0 %v209
  %862 = vmatpush.msra.mxu0 %v205
  %863 = vmatmul.f32.gmra.mxu0 %v706
  %v864 = vpop.f32.mrf.mxu0
  %v865 = vadd.f32 %v785, %v864
  %866 = vdwg.mxu0
  %v867 = vadd.f32 %v805, %v332
  %v868 = vadd.f32 %v825, %v333
  %v869 = vadd.f32 %v845, %v334
  %v870 = vadd.f32 %v865, %v335
  %v871 = vmul.f32 %v867, 0.5
  %v872 = vtanh.pop %v871
  %v873 = vmul.f32 %v872, 0.5
  %v874 = vadd.f32 %v873, 0.5
  %v875 = vmul.f32 %v868, 0.5
  %v876 = vtanh.pop %v875
  %v877 = vmul.f32 %v876, 0.5
  %v878 = vadd.f32 %v877, 0.5
  %v879 = vtanh.pop %v869
  %v880 = vmul.f32 %v870, 0.5
  %v881 = vtanh.pop %v880
  %v882 = vmul.f32 %v881, 0.5
  %v883 = vadd.f32 %v882, 0.5
  %v884 = vmul.f32 %v878, %v703
  %v885 = vmul.f32 %v874, %v879
  %v886 = vadd.f32 %v884, %v885
  %v887 = vtanh.pop %v886
  %v888 = vmul.f32 %v883, %v887
  %v889 = vmax.f32 %v888, 0.0
  %890 = vmatpush.msra.mxu0 %v326
  %891 = vmatpush.msra.mxu0 %v322
  %892 = vmatpush.msra.mxu0 %v318
  %893 = vmatpush.msra.mxu0 %v314
  %894 = vmatpush.msra.mxu0 %v310
  %895 = vmatpush.msra.mxu0 %v306
  %896 = vmatpush.msra.mxu0 %v302
  %897 = vmatpush.msra.mxu0 %v298
  %898 = vmatpush.msra.mxu0 %v294
  %899 = vmatpush.msra.mxu0 %v290
  %900 = vmatpush.msra.mxu0 %v286
  %901 = vmatpush.msra.mxu0 %v282
  %902 = vmatpush.msra.mxu0 %v278
  %903 = vmatpush.msra.mxu0 %v274
  %904 = vmatpush.msra.mxu0 %v270
  %905 = vmatpush.msra.mxu0 %v266
  %906 = vmatmul.f32.gmra.mxu0 %v888
  %v907 = vpop.f32.mrf.mxu0
  %v908 = vadd.f32 0.0, %v907
  %909 = vdwg.mxu0
  %910 = vmatpush.msra.mxu0 %v327
  %911 = vmatpush.msra.mxu0 %v323
  %912 = vmatpush.msra.mxu0 %v319
  %913 = vmatpush.msra.mxu0 %v315
  %914 = vmatpush.msra.mxu0 %v311
  %915 = vmatpush.msra.mxu0 %v307
  %916 = vmatpush.msra.mxu0 %v303
  %917 = vmatpush.msra.mxu0 %v299
  %918 = vmatpush.msra.mxu0 %v295
  %919 = vmatpush.msra.mxu0 %v291
  %920 = vmatpush.msra.mxu0 %v287
  %921 = vmatpush.msra.mxu0 %v283
  %922 = vmatpush.msra.mxu0 %v279
  %923 = vmatpush.msra.mxu0 %v275
  %924 = vmatpush.msra.mxu0 %v271
  %925 = vmatpush.msra.mxu0 %v267
  %926 = vmatmul.f32.gmra.mxu0 %v888
  %v927 = vpop.f32.mrf.mxu0
  %v928 = vadd.f32 0.0, %v927
  %929 = vdwg.mxu0
  %930 = vmatpush.msra.mxu0 %v328
  %931 = vmatpush.msra.mxu0 %v324
  %932 = vmatpush.msra.mxu0 %v320
  %933 = vmatpush.msra.mxu0 %v316
  %934 = vmatpush.msra.mxu0 %v312
  %935 = vmatpush.msra.mxu0 %v308
  %936 = vmatpush.msra.mxu0 %v304
  %937 = vmatpush.msra.mxu0 %v300
  %938 = vmatpush.msra.mxu0 %v296
  %939 = vmatpush.msra.mxu0 %v292
  %940 = vmatpush.msra.mxu0 %v288
  %941 = vmatpush.msra.mxu0 %v284
  %942 = vmatpush.msra.mxu0 %v280
  %943 = vmatpush.msra.mxu0 %v276
  %944 = vmatpush.msra.mxu0 %v272
  %945 = vmatpush.msra.mxu0 %v268
  %946 = vmatmul.f32.gmra.mxu0 %v888
  %v947 = vpop.f32.mrf.mxu0
  %v948 = vadd.f32 0.0, %v947
  %949 = vdwg.mxu0
  %950 = vmatpush.msra.mxu0 %v329
  %951 = vmatpush.msra.mxu0 %v325
  %952 = vmatpush.msra.mxu0 %v321
  %953 = vmatpush.msra.mxu0 %v317
  %954 = vmatpush.msra.mxu0 %v313
  %955 = vmatpush.msra.mxu0 %v309
  %956 = vmatpush.msra.mxu0 %v305
  %957 = vmatpush.msra.mxu0 %v301
  %958 = vmatpush.msra.mxu0 %v297
  %959 = vmatpush.msra.mxu0 %v293
  %960 = vmatpush.msra.mxu0 %v289
  %961 = vmatpush.msra.mxu0 %v285
  %962 = vmatpush.msra.mxu0 %v281
  %963 = vmatpush.msra.mxu0 %v277
  %964 = vmatpush.msra.mxu0 %v273
  %965 = vmatpush.msra.mxu0 %v269
  %966 = vmatmul.f32.gmra.mxu0 %v888
  %v967 = vpop.f32.mrf.mxu0
  %v968 = vadd.f32 0.0, %v967
  %969 = vdwg.mxu0
  %970 = vmatpush.msra.mxu0 %v262
  %971 = vmatpush.msra.mxu0 %v258
  %972 = vmatpush.msra.mxu0 %v254
  %973 = vmatpush.msra.mxu0 %v250
  %974 = vmatpush.msra.mxu0 %v246
  %975 = vmatpush.msra.mxu0 %v242
  %976 = vmatpush.msra.mxu0 %v238
  %977 = vmatpush.msra.mxu0 %v234
  %978 = vmatpush.msra.mxu0 %v230
  %979 = vmatpush.msra.mxu0 %v226
  %980 = vmatpush.msra.mxu0 %v222
  %981 = vmatpush.msra.mxu0 %v218
  %982 = vmatpush.msra.mxu0 %v214
  %983 = vmatpush.msra.mxu0 %v210
  %984 = vmatpush.msra.mxu0 %v206
  %985 = vmatpush.msra.mxu0 %v202
  %986 = vmatmul.f32.gmra.mxu0 %v889
  %v987 = vpop.f32.mrf.mxu0
  %v988 = vadd.f32 %v908, %v987
  %989 = vdwg.mxu0
  %990 = vmatpush.msra.mxu0 %v263
  %991 = vmatpush.msra.mxu0 %v259
  %992 = vmatpush.msra.mxu0 %v255
  %993 = vmatpush.msra.mxu0 %v251
  %994 = vmatpush.msra.mxu0 %v247
  %995 = vmatpush.msra.mxu0 %v243
  %996 = vmatpush.msra.mxu0 %v239
  %997 = vmatpush.msra.mxu0 %v235
  %998 = vmatpush.msra.mxu0 %v231
  %999 = vmatpush.msra.mxu0 %v227
  %1000 = vmatpush.msra.mxu0 %v223
  %1001 = vmatpush.msra.mxu0 %v219
  %1002 = vmatpush.msra.mxu0 %v215
  %1003 = vmatpush.msra.mxu0 %v211
  %1004 = vmatpush.msra.mxu0 %v207
  %1005 = vmatpush.msra.mxu0 %v203
  %1006 = vmatmul.f32.gmra.mxu0 %v889
  %v1007 = vpop.f32.mrf.mxu0
  %v1008 = vadd.f32 %v928, %v1007
  %1009 = vdwg.mxu0
  %1010 = vmatpush.msra.mxu0 %v264
  %1011 = vmatpush.msra.mxu0 %v260
  %1012 = vmatpush.msra.mxu0 %v256
  %1013 = vmatpush.msra.mxu0 %v252
  %1014 = vmatpush.msra.mxu0 %v248
  %1015 = vmatpush.msra.mxu0 %v244
  %1016 = vmatpush.msra.mxu0 %v240
  %1017 = vmatpush.msra.mxu0 %v236
  %1018 = vmatpush.msra.mxu0 %v232
  %1019 = vmatpush.msra.mxu0 %v228
  %1020 = vmatpush.msra.mxu0 %v224
  %1021 = vmatpush.msra.mxu0 %v220
  %1022 = vmatpush.msra.mxu0 %v216
  %1023 = vmatpush.msra.mxu0 %v212
  %1024 = vmatpush.msra.mxu0 %v208
  %1025 = vmatpush.msra.mxu0 %v204
  %1026 = vmatmul.f32.gmra.mxu0 %v889
  %v1027 = vpop.f32.mrf.mxu0
  %v1028 = vadd.f32 %v948, %v1027
  %1029 = vdwg.mxu0
  %1030 = vmatpush.msra.mxu0 %v265
  %1031 = vmatpush.msra.mxu0 %v261
  %1032 = vmatpush.msra.mxu0 %v257
  %1033 = vmatpush.msra.mxu0 %v253
  %1034 = vmatpush.msra.mxu0 %v249
  %1035 = vmatpush.msra.mxu0 %v245
  %1036 = vmatpush.msra.mxu0 %v241
  %1037 = vmatpush.msra.mxu0 %v237
  %1038 = vmatpush.msra.mxu0 %v233
  %1039 = vmatpush.msra.mxu0 %v229
  %1040 = vmatpush.msra.mxu0 %v225
  %1041 = vmatpush.msra.mxu0 %v221
  %1042 = vmatpush.msra.mxu0 %v217
  %1043 = vmatpush.msra.mxu0 %v213
  %1044 = vmatpush.msra.mxu0 %v209
  %1045 = vmatpush.msra.mxu0 %v205
  %1046 = vmatmul.f32.gmra.mxu0 %v889
  %v1047 = vpop.f32.mrf.mxu0
  %v1048 = vadd.f32 %v968, %v1047
  %1049 = vdwg.mxu0
  %v1050 = vadd.f32 %v988, %v332
  %v1051 = vadd.f32 %v1008, %v333
  %v1052 = vadd.f32 %v1028, %v334
  %v1053 = vadd.f32 %v1048, %v335
  %v1054 = vmul.f32 %v1050, 0.5
  %v1055 = vtanh.pop %v1054
  %v1056 = vmul.f32 %v1055, 0.5
  %v1057 = vadd.f32 %v1056, 0.5
  %v1058 = vmul.f32 %v1051, 0.5
  %v1059 = vtanh.pop %v1058
  %v1060 = vmul.f32 %v1059, 0.5
  %v1061 = vadd.f32 %v1060, 0.5
  %v1062 = vtanh.pop %v1052
  %v1063 = vmul.f32 %v1053, 0.5
  %v1064 = vtanh.pop %v1063
  %v1065 = vmul.f32 %v1064, 0.5
  %v1066 = vadd.f32 %v1065, 0.5
  %v1067 = vmul.f32 %v1061, %v886
  %v1068 = vmul.f32 %v1057, %v1062
  %v1069 = vadd.f32 %v1067, %v1068
  %v1070 = vtanh.pop %v1069
  %v1071 = vmul.f32 %v1066, %v1070
  %v1072 = vmax.f32 %v1071, 0.0
  %1073 = vmatpush.msra.mxu0 %v326
  %1074 = vmatpush.msra.mxu0 %v322
  %1075 = vmatpush.msra.mxu0 %v318
  %1076 = vmatpush.msra.mxu0 %v314
  %1077 = vmatpush.msra.mxu0 %v310
  %1078 = vmatpush.msra.mxu0 %v306
  %1079 = vmatpush.msra.mxu0 %v302
  %1080 = vmatpush.msra.mxu0 %v298
  %1081 = vmatpush.msra.mxu0 %v294
  %1082 = vmatpush.msra.mxu0 %v290
  %1083 = vmatpush.msra.mxu0 %v286
  %1084 = vmatpush.msra.mxu0 %v282
  %1085 = vmatpush.msra.mxu0 %v278
  %1086 = vmatpush.msra.mxu0 %v274
  %1087 = vmatpush.msra.mxu0 %v270
  %1088 = vmatpush.msra.mxu0 %v266
  %1089 = vmatmul.f32.gmra.mxu0 %v1071
  %v1090 = vpop.f32.mrf.mxu0
  %v1091 = vadd.f32 0.0, %v1090
  %1092 = vdwg.mxu0
  %1093 = vmatpush.msra.mxu0 %v327
  %1094 = vmatpush.msra.mxu0 %v323
  %1095 = vmatpush.msra.mxu0 %v319
  %1096 = vmatpush.msra.mxu0 %v315
  %1097 = vmatpush.msra.mxu0 %v311
  %1098 = vmatpush.msra.mxu0 %v307
  %1099 = vmatpush.msra.mxu0 %v303
  %1100 = vmatpush.msra.mxu0 %v299
  %1101 = vmatpush.msra.mxu0 %v295
  %1102 = vmatpush.msra.mxu0 %v291
  %1103 = vmatpush.msra.mxu0 %v287
  %1104 = vmatpush.msra.mxu0 %v283
  %1105 = vmatpush.msra.mxu0 %v279
  %1106 = vmatpush.msra.mxu0 %v275
  %1107 = vmatpush.msra.mxu0 %v271
  %1108 = vmatpush.msra.mxu0 %v267
  %1109 = vmatmul.f32.gmra.mxu0 %v1071
  %v1110 = vpop.f32.mrf.mxu0
  %v1111 = vadd.f32 0.0, %v1110
  %1112 = vdwg.mxu0
  %1113 = vmatpush.msra.mxu0 %v328
  %1114 = vmatpush.msra.mxu0 %v324
  %1115 = vmatpush.msra.mxu0 %v320
  %1116 = vmatpush.msra.mxu0 %v316
  %1117 = vmatpush.msra.mxu0 %v312
  %1118 = vmatpush.msra.mxu0 %v308
  %1119 = vmatpush.msra.mxu0 %v304
  %1120 = vmatpush.msra.mxu0 %v300
  %1121 = vmatpush.msra.mxu0 %v296
  %1122 = vmatpush.msra.mxu0 %v292
  %1123 = vmatpush.msra.mxu0 %v288
  %1124 = vmatpush.msra.mxu0 %v284
  %1125 = vmatpush.msra.mxu0 %v280
  %1126 = vmatpush.msra.mxu0 %v276
  %1127 = vmatpush.msra.mxu0 %v272
  %1128 = vmatpush.msra.mxu0 %v268
  %1129 = vmatmul.f32.gmra.mxu0 %v1071
  %v1130 = vpop.f32.mrf.mxu0
  %v1131 = vadd.f32 0.0, %v1130
  %1132 = vdwg.mxu0
  %1133 = vmatpush.msra.mxu0 %v329
  %1134 = vmatpush.msra.mxu0 %v325
  %1135 = vmatpush.msra.mxu0 %v321
  %1136 = vmatpush.msra.mxu0 %v317
  %1137 = vmatpush.msra.mxu0 %v313
  %1138 = vmatpush.msra.mxu0 %v309
  %1139 = vmatpush.msra.mxu0 %v305
  %1140 = vmatpush.msra.mxu0 %v301
  %1141 = vmatpush.msra.mxu0 %v297
  %1142 = vmatpush.msra.mxu0 %v293
  %1143 = vmatpush.msra.mxu0 %v289
  %1144 = vmatpush.msra.mxu0 %v285
  %1145 = vmatpush.msra.mxu0 %v281
  %1146 = vmatpush.msra.mxu0 %v277
  %1147 = vmatpush.msra.mxu0 %v273
  %1148 = vmatpush.msra.mxu0 %v269
  %1149 = vmatmul.f32.gmra.mxu0 %v1071
  %v1150 = vpop.f32.mrf.mxu0
  %v1151 = vadd.f32 0.0, %v1150
  %1152 = vdwg.mxu0
  %1153 = vmatpush.msra.mxu0 %v262
  %1154 = vmatpush.msra.mxu0 %v258
  %1155 = vmatpush.msra.mxu0 %v254
  %1156 = vmatpush.msra.mxu0 %v250
  %1157 = vmatpush.msra.mxu0 %v246
  %1158 = vmatpush.msra.mxu0 %v242
  %1159 = vmatpush.msra.mxu0 %v238
  %1160 = vmatpush.msra.mxu0 %v234
  %1161 = vmatpush.msra.mxu0 %v230
  %1162 = vmatpush.msra.mxu0 %v226
  %1163 = vmatpush.msra.mxu0 %v222
  %1164 = vmatpush.msra.mxu0 %v218
  %1165 = vmatpush.msra.mxu0 %v214
  %1166 = vmatpush.msra.mxu0 %v210
  %1167 = vmatpush.msra.mxu0 %v206
  %1168 = vmatpush.msra.mxu0 %v202
  %1169 = vmatmul.f32.gmra.mxu0 %v1072
  %v1170 = vpop.f32.mrf.mxu0
  %v1171 = vadd.f32 %v1091, %v1170
  %1172 = vdwg.mxu0
  %1173 = vmatpush.msra.mxu0 %v263
  %1174 = vmatpush.msra.mxu0 %v259
  %1175 = vmatpush.msra.mxu0 %v255
  %1176 = vmatpush.msra.mxu0 %v251
  %1177 = vmatpush.msra.mxu0 %v247
  %1178 = vmatpush.msra.mxu0 %v243
  %1179 = vmatpush.msra.mxu0 %v239
  %1180 = vmatpush.msra.mxu0 %v235
  %1181 = vmatpush.msra.mxu0 %v231
  %1182 = vmatpush.msra.mxu0 %v227
  %1183 = vmatpush.msra.mxu0 %v223
  %1184 = vmatpush.msra.mxu0 %v219
  %1185 = vmatpush.msra.mxu0 %v215
  %1186 = vmatpush.msra.mxu0 %v211
  %1187 = vmatpush.msra.mxu0 %v207
  %1188 = vmatpush.msra.mxu0 %v203
  %1189 = vmatmul.f32.gmra.mxu0 %v1072
  %v1190 = vpop.f32.mrf.mxu0
  %v1191 = vadd.f32 %v1111, %v1190
  %1192 = vdwg.mxu0
  %1193 = vmatpush.msra.mxu0 %v264
  %1194 = vmatpush.msra.mxu0 %v260
  %1195 = vmatpush.msra.mxu0 %v256
  %1196 = vmatpush.msra.mxu0 %v252
  %1197 = vmatpush.msra.mxu0 %v248
  %1198 = vmatpush.msra.mxu0 %v244
  %1199 = vmatpush.msra.mxu0 %v240
  %1200 = vmatpush.msra.mxu0 %v236
  %1201 = vmatpush.msra.mxu0 %v232
  %1202 = vmatpush.msra.mxu0 %v228
  %1203 = vmatpush.msra.mxu0 %v224
  %1204 = vmatpush.msra.mxu0 %v220
  %1205 = vmatpush.msra.mxu0 %v216
  %1206 = vmatpush.msra.mxu0 %v212
  %1207 = vmatpush.msra.mxu0 %v208
  %1208 = vmatpush.msra.mxu0 %v204
  %1209 = vmatmul.f32.gmra.mxu0 %v1072
  %v1210 = vpop.f32.mrf.mxu0
  %v1211 = vadd.f32 %v1131, %v1210
  %1212 = vdwg.mxu0
  %1213 = vmatpush.msra.mxu0 %v265
  %1214 = vmatpush.msra.mxu0 %v261
  %1215 = vmatpush.msra.mxu0 %v257
  %1216 = vmatpush.msra.mxu0 %v253
  %1217 = vmatpush.msra.mxu0 %v249
  %1218 = vmatpush.msra.mxu0 %v245
  %1219 = vmatpush.msra.mxu0 %v241
  %1220 = vmatpush.msra.mxu0 %v237
  %1221 = vmatpush.msra.mxu0 %v233
  %1222 = vmatpush.msra.mxu0 %v229
  %1223 = vmatpush.msra.mxu0 %v225
  %1224 = vmatpush.msra.mxu0 %v221
  %1225 = vmatpush.msra.mxu0 %v217
  %1226 = vmatpush.msra.mxu0 %v213
  %1227 = vmatpush.msra.mxu0 %v209
  %1228 = vmatpush.msra.mxu0 %v205
  %1229 = vmatmul.f32.gmra.mxu0 %v1072
  %v1230 = vpop.f32.mrf.mxu0
  %v1231 = vadd.f32 %v1151, %v1230
  %1232 = vdwg.mxu0
  %v1233 = vadd.f32 %v1171, %v332
  %v1234 = vadd.f32 %v1191, %v333
  %v1235 = vadd.f32 %v1211, %v334
  %v1236 = vadd.f32 %v1231, %v335
  %v1237 = vmul.f32 %v1233, 0.5
  %v1238 = vtanh.pop %v1237
  %v1239 = vmul.f32 %v1238, 0.5
  %v1240 = vadd.f32 %v1239, 0.5
  %v1241 = vmul.f32 %v1234, 0.5
  %v1242 = vtanh.pop %v1241
  %v1243 = vmul.f32 %v1242, 0.5
  %v1244 = vadd.f32 %v1243, 0.5
  %v1245 = vtanh.pop %v1235
  %v1246 = vmul.f32 %v1236, 0.5
  %v1247 = vtanh.pop %v1246
  %v1248 = vmul.f32 %v1247, 0.5
  %v1249 = vadd.f32 %v1248, 0.5
  %v1250 = vmul.f32 %v1244, %v1069
  %v1251 = vmul.f32 %v1240, %v1245
  %v1252 = vadd.f32 %v1250, %v1251
  %v1253 = vtanh.pop %v1252
  %v1254 = vmul.f32 %v1249, %v1253
  %v1255 = vmax.f32 %v1254, 0.0
  %1256 = vmatpush.msra.mxu0 %v326
  %1257 = vmatpush.msra.mxu0 %v322
  %1258 = vmatpush.msra.mxu0 %v318
  %1259 = vmatpush.msra.mxu0 %v314
  %1260 = vmatpush.msra.mxu0 %v310
  %1261 = vmatpush.msra.mxu0 %v306
  %1262 = vmatpush.msra.mxu0 %v302
  %1263 = vmatpush.msra.mxu0 %v298
  %1264 = vmatpush.msra.mxu0 %v294
  %1265 = vmatpush.msra.mxu0 %v290
  %1266 = vmatpush.msra.mxu0 %v286
  %1267 = vmatpush.msra.mxu0 %v282
  %1268 = vmatpush.msra.mxu0 %v278
  %1269 = vmatpush.msra.mxu0 %v274
  %1270 = vmatpush.msra.mxu0 %v270
  %1271 = vmatpush.msra.mxu0 %v266
  %1272 = vmatmul.f32.gmra.mxu0 %v1254
  %v1273 = vpop.f32.mrf.mxu0
  %v1274 = vadd.f32 0.0, %v1273
  %1275 = vdwg.mxu0
  %1276 = vmatpush.msra.mxu0 %v327
  %1277 = vmatpush.msra.mxu0 %v323
  %1278 = vmatpush.msra.mxu0 %v319
  %1279 = vmatpush.msra.mxu0 %v315
  %1280 = vmatpush.msra.mxu0 %v311
  %1281 = vmatpush.msra.mxu0 %v307
  %1282 = vmatpush.msra.mxu0 %v303
  %1283 = vmatpush.msra.mxu0 %v299
  %1284 = vmatpush.msra.mxu0 %v295
  %1285 = vmatpush.msra.mxu0 %v291
  %1286 = vmatpush.msra.mxu0 %v287
  %1287 = vmatpush.msra.mxu0 %v283
  %1288 = vmatpush.msra.mxu0 %v279
  %1289 = vmatpush.msra.mxu0 %v275
  %1290 = vmatpush.msra.mxu0 %v271
  %1291 = vmatpush.msra.mxu0 %v267
  %1292 = vmatmul.f32.gmra.mxu0 %v1254
  %v1293 = vpop.f32.mrf.mxu0
  %v1294 = vadd.f32 0.0, %v1293
  %1295 = vdwg.mxu0
  %1296 = vmatpush.msra.mxu0 %v328
  %1297 = vmatpush.msra.mxu0 %v324
  %1298 = vmatpush.msra.mxu0 %v320
  %1299 = vmatpush.msra.mxu0 %v316
  %1300 = vmatpush.msra.mxu0 %v312
  %1301 = vmatpush.msra.mxu0 %v308
  %1302 = vmatpush.msra.mxu0 %v304
  %1303 = vmatpush.msra.mxu0 %v300
  %1304 = vmatpush.msra.mxu0 %v296
  %1305 = vmatpush.msra.mxu0 %v292
  %1306 = vmatpush.msra.mxu0 %v288
  %1307 = vmatpush.msra.mxu0 %v284
  %1308 = vmatpush.msra.mxu0 %v280
  %1309 = vmatpush.msra.mxu0 %v276
  %1310 = vmatpush.msra.mxu0 %v272
  %1311 = vmatpush.msra.mxu0 %v268
  %1312 = vmatmul.f32.gmra.mxu0 %v1254
  %v1313 = vpop.f32.mrf.mxu0
  %v1314 = vadd.f32 0.0, %v1313
  %1315 = vdwg.mxu0
  %1316 = vmatpush.msra.mxu0 %v329
  %1317 = vmatpush.msra.mxu0 %v325
  %1318 = vmatpush.msra.mxu0 %v321
  %1319 = vmatpush.msra.mxu0 %v317
  %1320 = vmatpush.msra.mxu0 %v313
  %1321 = vmatpush.msra.mxu0 %v309
  %1322 = vmatpush.msra.mxu0 %v305
  %1323 = vmatpush.msra.mxu0 %v301
  %1324 = vmatpush.msra.mxu0 %v297
  %1325 = vmatpush.msra.mxu0 %v293
  %1326 = vmatpush.msra.mxu0 %v289
  %1327 = vmatpush.msra.mxu0 %v285
  %1328 = vmatpush.msra.mxu0 %v281
  %1329 = vmatpush.msra.mxu0 %v277
  %1330 = vmatpush.msra.mxu0 %v273
  %1331 = vmatpush.msra.mxu0 %v269
  %1332 = vmatmul.f32.gmra.mxu0 %v1254
  %v1333 = vpop.f32.mrf.mxu0
  %v1334 = vadd.f32 0.0, %v1333
  %1335 = vdwg.mxu0
  %1336 = vmatpush.msra.mxu0 %v262
  %1337 = vmatpush.msra.mxu0 %v258
  %1338 = vmatpush.msra.mxu0 %v254
  %1339 = vmatpush.msra.mxu0 %v250
  %1340 = vmatpush.msra.mxu0 %v246
  %1341 = vmatpush.msra.mxu0 %v242
  %1342 = vmatpush.msra.mxu0 %v238
  %1343 = vmatpush.msra.mxu0 %v234
  %1344 = vmatpush.msra.mxu0 %v230
  %1345 = vmatpush.msra.mxu0 %v226
  %1346 = vmatpush.msra.mxu0 %v222
  %1347 = vmatpush.msra.mxu0 %v218
  %1348 = vmatpush.msra.mxu0 %v214
  %1349 = vmatpush.msra.mxu0 %v210
  %1350 = vmatpush.msra.mxu0 %v206
  %1351 = vmatpush.msra.mxu0 %v202
  %1352 = vmatmul.f32.gmra.mxu0 %v1255
  %v1353 = vpop.f32.mrf.mxu0
  %v1354 = vadd.f32 %v1274, %v1353
  %1355 = vdwg.mxu0
  %1356 = vmatpush.msra.mxu0 %v263
  %1357 = vmatpush.msra.mxu0 %v259
  %1358 = vmatpush.msra.mxu0 %v255
  %1359 = vmatpush.msra.mxu0 %v251
  %1360 = vmatpush.msra.mxu0 %v247
  %1361 = vmatpush.msra.mxu0 %v243
  %1362 = vmatpush.msra.mxu0 %v239
  %1363 = vmatpush.msra.mxu0 %v235
  %1364 = vmatpush.msra.mxu0 %v231
  %1365 = vmatpush.msra.mxu0 %v227
  %1366 = vmatpush.msra.mxu0 %v223
  %1367 = vmatpush.msra.mxu0 %v219
  %1368 = vmatpush.msra.mxu0 %v215
  %1369 = vmatpush.msra.mxu0 %v211
  %1370 = vmatpush.msra.mxu0 %v207
  %1371 = vmatpush.msra.mxu0 %v203
  %1372 = vmatmul.f32.gmra.mxu0 %v1255
  %v1373 = vpop.f32.mrf.mxu0
  %v1374 = vadd.f32 %v1294, %v1373
  %1375 = vdwg.mxu0
  %1376 = vmatpush.msra.mxu0 %v264
  %1377 = vmatpush.msra.mxu0 %v260
  %1378 = vmatpush.msra.mxu0 %v256
  %1379 = vmatpush.msra.mxu0 %v252
  %1380 = vmatpush.msra.mxu0 %v248
  %1381 = vmatpush.msra.mxu0 %v244
  %1382 = vmatpush.msra.mxu0 %v240
  %1383 = vmatpush.msra.mxu0 %v236
  %1384 = vmatpush.msra.mxu0 %v232
  %1385 = vmatpush.msra.mxu0 %v228
  %1386 = vmatpush.msra.mxu0 %v224
  %1387 = vmatpush.msra.mxu0 %v220
  %1388 = vmatpush.msra.mxu0 %v216
  %1389 = vmatpush.msra.mxu0 %v212
  %1390 = vmatpush.msra.mxu0 %v208
  %1391 = vmatpush.msra.mxu0 %v204
  %1392 = vmatmul.f32.gmra.mxu0 %v1255
  %v1393 = vpop.f32.mrf.mxu0
  %v1394 = vadd.f32 %v1314, %v1393
  %1395 = vdwg.mxu0
  %1396 = vmatpush.msra.mxu0 %v265
  %1397 = vmatpush.msra.mxu0 %v261
  %1398 = vmatpush.msra.mxu0 %v257
  %1399 = vmatpush.msra.mxu0 %v253
  %1400 = vmatpush.msra.mxu0 %v249
  %1401 = vmatpush.msra.mxu0 %v245
  %1402 = vmatpush.msra.mxu0 %v241
  %1403 = vmatpush.msra.mxu0 %v237
  %1404 = vmatpush.msra.mxu0 %v233
  %1405 = vmatpush.msra.mxu0 %v229
  %1406 = vmatpush.msra.mxu0 %v225
  %1407 = vmatpush.msra.mxu0 %v221
  %1408 = vmatpush.msra.mxu0 %v217
  %1409 = vmatpush.msra.mxu0 %v213
  %1410 = vmatpush.msra.mxu0 %v209
  %1411 = vmatpush.msra.mxu0 %v205
  %1412 = vmatmul.f32.gmra.mxu0 %v1255
  %v1413 = vpop.f32.mrf.mxu0
  %v1414 = vadd.f32 %v1334, %v1413
  %1415 = vdwg.mxu0
  %v1416 = vadd.f32 %v1354, %v332
  %v1417 = vadd.f32 %v1374, %v333
  %v1418 = vadd.f32 %v1394, %v334
  %v1419 = vadd.f32 %v1414, %v335
  %v1420 = vmul.f32 %v1416, 0.5
  %v1421 = vtanh.pop %v1420
  %v1422 = vmul.f32 %v1421, 0.5
  %v1423 = vadd.f32 %v1422, 0.5
  %v1424 = vmul.f32 %v1417, 0.5
  %v1425 = vtanh.pop %v1424
  %v1426 = vmul.f32 %v1425, 0.5
  %v1427 = vadd.f32 %v1426, 0.5
  %v1428 = vtanh.pop %v1418
  %v1429 = vmul.f32 %v1419, 0.5
  %v1430 = vtanh.pop %v1429
  %v1431 = vmul.f32 %v1430, 0.5
  %v1432 = vadd.f32 %v1431, 0.5
  %v1433 = vmul.f32 %v1427, %v1252
  %v1434 = vmul.f32 %v1423, %v1428
  %v1435 = vadd.f32 %v1433, %v1434
  %v1436 = vtanh.pop %v1435
  %v1437 = vmul.f32 %v1432, %v1436
  %v1438 = vmax.f32 %v1437, 0.0
  %1439 = vmatpush.msra.mxu0 %v326
  %1440 = vmatpush.msra.mxu0 %v322
  %1441 = vmatpush.msra.mxu0 %v318
  %1442 = vmatpush.msra.mxu0 %v314
  %1443 = vmatpush.msra.mxu0 %v310
  %1444 = vmatpush.msra.mxu0 %v306
  %1445 = vmatpush.msra.mxu0 %v302
  %1446 = vmatpush.msra.mxu0 %v298
  %1447 = vmatpush.msra.mxu0 %v294
  %1448 = vmatpush.msra.mxu0 %v290
  %1449 = vmatpush.msra.mxu0 %v286
  %1450 = vmatpush.msra.mxu0 %v282
  %1451 = vmatpush.msra.mxu0 %v278
  %1452 = vmatpush.msra.mxu0 %v274
  %1453 = vmatpush.msra.mxu0 %v270
  %1454 = vmatpush.msra.mxu0 %v266
  %1455 = vmatmul.f32.gmra.mxu0 %v1437
  %v1456 = vpop.f32.mrf.mxu0
  %v1457 = vadd.f32 0.0, %v1456
  %1458 = vdwg.mxu0
  %1459 = vmatpush.msra.mxu0 %v327
  %1460 = vmatpush.msra.mxu0 %v323
  %1461 = vmatpush.msra.mxu0 %v319
  %1462 = vmatpush.msra.mxu0 %v315
  %1463 = vmatpush.msra.mxu0 %v311
  %1464 = vmatpush.msra.mxu0 %v307
  %1465 = vmatpush.msra.mxu0 %v303
  %1466 = vmatpush.msra.mxu0 %v299
  %1467 = vmatpush.msra.mxu0 %v295
  %1468 = vmatpush.msra.mxu0 %v291
  %1469 = vmatpush.msra.mxu0 %v287
  %1470 = vmatpush.msra.mxu0 %v283
  %1471 = vmatpush.msra.mxu0 %v279
  %1472 = vmatpush.msra.mxu0 %v275
  %1473 = vmatpush.msra.mxu0 %v271
  %1474 = vmatpush.msra.mxu0 %v267
  %1475 = vmatmul.f32.gmra.mxu0 %v1437
  %v1476 = vpop.f32.mrf.mxu0
  %v1477 = vadd.f32 0.0, %v1476
  %1478 = vdwg.mxu0
  %1479 = vmatpush.msra.mxu0 %v328
  %1480 = vmatpush.msra.mxu0 %v324
  %1481 = vmatpush.msra.mxu0 %v320
  %1482 = vmatpush.msra.mxu0 %v316
  %1483 = vmatpush.msra.mxu0 %v312
  %1484 = vmatpush.msra.mxu0 %v308
  %1485 = vmatpush.msra.mxu0 %v304
  %1486 = vmatpush.msra.mxu0 %v300
  %1487 = vmatpush.msra.mxu0 %v296
  %1488 = vmatpush.msra.mxu0 %v292
  %1489 = vmatpush.msra.mxu0 %v288
  %1490 = vmatpush.msra.mxu0 %v284
  %1491 = vmatpush.msra.mxu0 %v280
  %1492 = vmatpush.msra.mxu0 %v276
  %1493 = vmatpush.msra.mxu0 %v272
  %1494 = vmatpush.msra.mxu0 %v268
  %1495 = vmatmul.f32.gmra.mxu0 %v1437
  %v1496 = vpop.f32.mrf.mxu0
  %v1497 = vadd.f32 0.0, %v1496
  %1498 = vdwg.mxu0
  %1499 = vmatpush.msra.mxu0 %v329
  %1500 = vmatpush.msra.mxu0 %v325
  %1501 = vmatpush.msra.mxu0 %v321
  %1502 = vmatpush.msra.mxu0 %v317
  %1503 = vmatpush.msra.mxu0 %v313
  %1504 = vmatpush.msra.mxu0 %v309
  %1505 = vmatpush.msra.mxu0 %v305
  %1506 = vmatpush.msra.mxu0 %v301
  %1507 = vmatpush.msra.mxu0 %v297
  %1508 = vmatpush.msra.mxu0 %v293
  %1509 = vmatpush.msra.mxu0 %v289
  %1510 = vmatpush.msra.mxu0 %v285
  %1511 = vmatpush.msra.mxu0 %v281
  %1512 = vmatpush.msra.mxu0 %v277
  %1513 = vmatpush.msra.mxu0 %v273
  %1514 = vmatpush.msra.mxu0 %v269
  %1515 = vmatmul.f32.gmra.mxu0 %v1437
  %v1516 = vpop.f32.mrf.mxu0
  %v1517 = vadd.f32 0.0, %v1516
  %1518 = vdwg.mxu0
  %1519 = vmatpush.msra.mxu0 %v262
  %1520 = vmatpush.msra.mxu0 %v258
  %1521 = vmatpush.msra.mxu0 %v254
  %1522 = vmatpush.msra.mxu0 %v250
  %1523 = vmatpush.msra.mxu0 %v246
  %1524 = vmatpush.msra.mxu0 %v242
  %1525 = vmatpush.msra.mxu0 %v238
  %1526 = vmatpush.msra.mxu0 %v234
  %1527 = vmatpush.msra.mxu0 %v230
  %1528 = vmatpush.msra.mxu0 %v226
  %1529 = vmatpush.msra.mxu0 %v222
  %1530 = vmatpush.msra.mxu0 %v218
  %1531 = vmatpush.msra.mxu0 %v214
  %1532 = vmatpush.msra.mxu0 %v210
  %1533 = vmatpush.msra.mxu0 %v206
  %1534 = vmatpush.msra.mxu0 %v202
  %1535 = vmatmul.f32.gmra.mxu0 %v1438
  %v1536 = vpop.f32.mrf.mxu0
  %v1537 = vadd.f32 %v1457, %v1536
  %1538 = vdwg.mxu0
  %1539 = vmatpush.msra.mxu0 %v263
  %1540 = vmatpush.msra.mxu0 %v259
  %1541 = vmatpush.msra.mxu0 %v255
  %1542 = vmatpush.msra.mxu0 %v251
  %1543 = vmatpush.msra.mxu0 %v247
  %1544 = vmatpush.msra.mxu0 %v243
  %1545 = vmatpush.msra.mxu0 %v239
  %1546 = vmatpush.msra.mxu0 %v235
  %1547 = vmatpush.msra.mxu0 %v231
  %1548 = vmatpush.msra.mxu0 %v227
  %1549 = vmatpush.msra.mxu0 %v223
  %1550 = vmatpush.msra.mxu0 %v219
  %1551 = vmatpush.msra.mxu0 %v215
  %1552 = vmatpush.msra.mxu0 %v211
  %1553 = vmatpush.msra.mxu0 %v207
  %1554 = vmatpush.msra.mxu0 %v203
  %1555 = vmatmul.f32.gmra.mxu0 %v1438
  %v1556 = vpop.f32.mrf.mxu0
  %v1557 = vadd.f32 %v1477, %v1556
  %1558 = vdwg.mxu0
  %1559 = vmatpush.msra.mxu0 %v264
  %1560 = vmatpush.msra.mxu0 %v260
  %1561 = vmatpush.msra.mxu0 %v256
  %1562 = vmatpush.msra.mxu0 %v252
  %1563 = vmatpush.msra.mxu0 %v248
  %1564 = vmatpush.msra.mxu0 %v244
  %1565 = vmatpush.msra.mxu0 %v240
  %1566 = vmatpush.msra.mxu0 %v236
  %1567 = vmatpush.msra.mxu0 %v232
  %1568 = vmatpush.msra.mxu0 %v228
  %1569 = vmatpush.msra.mxu0 %v224
  %1570 = vmatpush.msra.mxu0 %v220
  %1571 = vmatpush.msra.mxu0 %v216
  %1572 = vmatpush.msra.mxu0 %v212
  %1573 = vmatpush.msra.mxu0 %v208
  %1574 = vmatpush.msra.mxu0 %v204
  %1575 = vmatmul.f32.gmra.mxu0 %v1438
  %v1576 = vpop.f32.mrf.mxu0
  %v1577 = vadd.f32 %v1497, %v1576
  %1578 = vdwg.mxu0
  %1579 = vmatpush.msra.mxu0 %v265
  %1580 = vmatpush.msra.mxu0 %v261
  %1581 = vmatpush.msra.mxu0 %v257
  %1582 = vmatpush.msra.mxu0 %v253
  %1583 = vmatpush.msra.mxu0 %v249
  %1584 = vmatpush.msra.mxu0 %v245
  %1585 = vmatpush.msra.mxu0 %v241
  %1586 = vmatpush.msra.mxu0 %v237
  %1587 = vmatpush.msra.mxu0 %v233
  %1588 = vmatpush.msra.mxu0 %v229
  %1589 = vmatpush.msra.mxu0 %v225
  %1590 = vmatpush.msra.mxu0 %v221
  %1591 = vmatpush.msra.mxu0 %v217
  %1592 = vmatpush.msra.mxu0 %v213
  %1593 = vmatpush.msra.mxu0 %v209
  %1594 = vmatpush.msra.mxu0 %v205
  %1595 = vmatmul.f32.gmra.mxu0 %v1438
  %v1596 = vpop.f32.mrf.mxu0
  %v1597 = vadd.f32 %v1517, %v1596
  %1598 = vdwg.mxu0
  %v1599 = vadd.f32 %v1537, %v332
  %v1600 = vadd.f32 %v1557, %v333
  %v1601 = vadd.f32 %v1577, %v334
  %v1602 = vadd.f32 %v1597, %v335
  %v1603 = vmul.f32 %v1599, 0.5
  %v1604 = vtanh.pop %v1603
  %v1605 = vmul.f32 %v1604, 0.5
  %v1606 = vadd.f32 %v1605, 0.5
  %v1607 = vmul.f32 %v1600, 0.5
  %v1608 = vtanh.pop %v1607
  %v1609 = vmul.f32 %v1608, 0.5
  %v1610 = vadd.f32 %v1609, 0.5
  %v1611 = vtanh.pop %v1601
  %v1612 = vmul.f32 %v1602, 0.5
  %v1613 = vtanh.pop %v1612
  %v1614 = vmul.f32 %v1613, 0.5
  %v1615 = vadd.f32 %v1614, 0.5
  %v1616 = vmul.f32 %v1610, %v1435
  %v1617 = vmul.f32 %v1606, %v1611
  %v1618 = vadd.f32 %v1616, %v1617
  %v1619 = vtanh.pop %v1618
  %v1620 = vmul.f32 %v1615, %v1619
  %v1621 = vmax.f32 %v1620, 0.0
  %1622 = vmatpush.msra.mxu0 %v326
  %1623 = vmatpush.msra.mxu0 %v322
  %1624 = vmatpush.msra.mxu0 %v318
  %1625 = vmatpush.msra.mxu0 %v314
  %1626 = vmatpush.msra.mxu0 %v310
  %1627 = vmatpush.msra.mxu0 %v306
  %1628 = vmatpush.msra.mxu0 %v302
  %1629 = vmatpush.msra.mxu0 %v298
  %1630 = vmatpush.msra.mxu0 %v294
  %1631 = vmatpush.msra.mxu0 %v290
  %1632 = vmatpush.msra.mxu0 %v286
  %1633 = vmatpush.msra.mxu0 %v282
  %1634 = vmatpush.msra.mxu0 %v278
  %1635 = vmatpush.msra.mxu0 %v274
  %1636 = vmatpush.msra.mxu0 %v270
  %1637 = vmatpush.msra.mxu0 %v266
  %1638 = vmatmul.f32.gmra.mxu0 %v1620
  %v1639 = vpop.f32.mrf.mxu0
  %v1640 = vadd.f32 0.0, %v1639
  %1641 = vdwg.mxu0
  %1642 = vmatpush.msra.mxu0 %v327
  %1643 = vmatpush.msra.mxu0 %v323
  %1644 = vmatpush.msra.mxu0 %v319
  %1645 = vmatpush.msra.mxu0 %v315
  %1646 = vmatpush.msra.mxu0 %v311
  %1647 = vmatpush.msra.mxu0 %v307
  %1648 = vmatpush.msra.mxu0 %v303
  %1649 = vmatpush.msra.mxu0 %v299
  %1650 = vmatpush.msra.mxu0 %v295
  %1651 = vmatpush.msra.mxu0 %v291
  %1652 = vmatpush.msra.mxu0 %v287
  %1653 = vmatpush.msra.mxu0 %v283
  %1654 = vmatpush.msra.mxu0 %v279
  %1655 = vmatpush.msra.mxu0 %v275
  %1656 = vmatpush.msra.mxu0 %v271
  %1657 = vmatpush.msra.mxu0 %v267
  %1658 = vmatmul.f32.gmra.mxu0 %v1620
  %v1659 = vpop.f32.mrf.mxu0
  %v1660 = vadd.f32 0.0, %v1659
  %1661 = vdwg.mxu0
  %1662 = vmatpush.msra.mxu0 %v328
  %1663 = vmatpush.msra.mxu0 %v324
  %1664 = vmatpush.msra.mxu0 %v320
  %1665 = vmatpush.msra.mxu0 %v316
  %1666 = vmatpush.msra.mxu0 %v312
  %1667 = vmatpush.msra.mxu0 %v308
  %1668 = vmatpush.msra.mxu0 %v304
  %1669 = vmatpush.msra.mxu0 %v300
  %1670 = vmatpush.msra.mxu0 %v296
  %1671 = vmatpush.msra.mxu0 %v292
  %1672 = vmatpush.msra.mxu0 %v288
  %1673 = vmatpush.msra.mxu0 %v284
  %1674 = vmatpush.msra.mxu0 %v280
  %1675 = vmatpush.msra.mxu0 %v276
  %1676 = vmatpush.msra.mxu0 %v272
  %1677 = vmatpush.msra.mxu0 %v268
  %1678 = vmatmul.f32.gmra.mxu0 %v1620
  %v1679 = vpop.f32.mrf.mxu0
  %v1680 = vadd.f32 0.0, %v1679
  %1681 = vdwg.mxu0
  %1682 = vmatpush.msra.mxu0 %v329
  %1683 = vmatpush.msra.mxu0 %v325
  %1684 = vmatpush.msra.mxu0 %v321
  %1685 = vmatpush.msra.mxu0 %v317
  %1686 = vmatpush.msra.mxu0 %v313
  %1687 = vmatpush.msra.mxu0 %v309
  %1688 = vmatpush.msra.mxu0 %v305
  %1689 = vmatpush.msra.mxu0 %v301
  %1690 = vmatpush.msra.mxu0 %v297
  %1691 = vmatpush.msra.mxu0 %v293
  %1692 = vmatpush.msra.mxu0 %v289
  %1693 = vmatpush.msra.mxu0 %v285
  %1694 = vmatpush.msra.mxu0 %v281
  %1695 = vmatpush.msra.mxu0 %v277
  %1696 = vmatpush.msra.mxu0 %v273
  %1697 = vmatpush.msra.mxu0 %v269
  %1698 = vmatmul.f32.gmra.mxu0 %v1620
  %v1699 = vpop.f32.mrf.mxu0
  %v1700 = vadd.f32 0.0, %v1699
  %1701 = vdwg.mxu0
  %1702 = vmatpush.msra.mxu0 %v262
  %1703 = vmatpush.msra.mxu0 %v258
  %1704 = vmatpush.msra.mxu0 %v254
  %1705 = vmatpush.msra.mxu0 %v250
  %1706 = vmatpush.msra.mxu0 %v246
  %1707 = vmatpush.msra.mxu0 %v242
  %1708 = vmatpush.msra.mxu0 %v238
  %1709 = vmatpush.msra.mxu0 %v234
  %1710 = vmatpush.msra.mxu0 %v230
  %1711 = vmatpush.msra.mxu0 %v226
  %1712 = vmatpush.msra.mxu0 %v222
  %1713 = vmatpush.msra.mxu0 %v218
  %1714 = vmatpush.msra.mxu0 %v214
  %1715 = vmatpush.msra.mxu0 %v210
  %1716 = vmatpush.msra.mxu0 %v206
  %1717 = vmatpush.msra.mxu0 %v202
  %1718 = vmatmul.f32.gmra.mxu0 %v1621
  %v1719 = vpop.f32.mrf.mxu0
  %v1720 = vadd.f32 %v1640, %v1719
  %1721 = vdwg.mxu0
  %1722 = vmatpush.msra.mxu0 %v263
  %1723 = vmatpush.msra.mxu0 %v259
  %1724 = vmatpush.msra.mxu0 %v255
  %1725 = vmatpush.msra.mxu0 %v251
  %1726 = vmatpush.msra.mxu0 %v247
  %1727 = vmatpush.msra.mxu0 %v243
  %1728 = vmatpush.msra.mxu0 %v239
  %1729 = vmatpush.msra.mxu0 %v235
  %1730 = vmatpush.msra.mxu0 %v231
  %1731 = vmatpush.msra.mxu0 %v227
  %1732 = vmatpush.msra.mxu0 %v223
  %1733 = vmatpush.msra.mxu0 %v219
  %1734 = vmatpush.msra.mxu0 %v215
  %1735 = vmatpush.msra.mxu0 %v211
  %1736 = vmatpush.msra.mxu0 %v207
  %1737 = vmatpush.msra.mxu0 %v203
  %1738 = vmatmul.f32.gmra.mxu0 %v1621
  %v1739 = vpop.f32.mrf.mxu0
  %v1740 = vadd.f32 %v1660, %v1739
  %1741 = vdwg.mxu0
  %1742 = vmatpush.msra.mxu0 %v264
  %1743 = vmatpush.msra.mxu0 %v260
  %1744 = vmatpush.msra.mxu0 %v256
  %1745 = vmatpush.msra.mxu0 %v252
  %1746 = vmatpush.msra.mxu0 %v248
  %1747 = vmatpush.msra.mxu0 %v244
  %1748 = vmatpush.msra.mxu0 %v240
  %1749 = vmatpush.msra.mxu0 %v236
  %1750 = vmatpush.msra.mxu0 %v232
  %1751 = vmatpush.msra.mxu0 %v228
  %1752 = vmatpush.msra.mxu0 %v224
  %1753 = vmatpush.msra.mxu0 %v220
  %1754 = vmatpush.msra.mxu0 %v216
  %1755 = vmatpush.msra.mxu0 %v212
  %1756 = vmatpush.msra.mxu0 %v208
  %1757 = vmatpush.msra.mxu0 %v204
  %1758 = vmatmul.f32.gmra.mxu0 %v1621
  %v1759 = vpop.f32.mrf.mxu0
  %v1760 = vadd.f32 %v1680, %v1759
  %1761 = vdwg.mxu0
  %1762 = vmatpush.msra.mxu0 %v265
  %1763 = vmatpush.msra.mxu0 %v261
  %1764 = vmatpush.msra.mxu0 %v257
  %1765 = vmatpush.msra.mxu0 %v253
  %1766 = vmatpush.msra.mxu0 %v249
  %1767 = vmatpush.msra.mxu0 %v245
  %1768 = vmatpush.msra.mxu0 %v241
  %1769 = vmatpush.msra.mxu0 %v237
  %1770 = vmatpush.msra.mxu0 %v233
  %1771 = vmatpush.msra.mxu0 %v229
  %1772 = vmatpush.msra.mxu0 %v225
  %1773 = vmatpush.msra.mxu0 %v221
  %1774 = vmatpush.msra.mxu0 %v217
  %1775 = vmatpush.msra.mxu0 %v213
  %1776 = vmatpush.msra.mxu0 %v209
  %1777 = vmatpush.msra.mxu0 %v205
  %1778 = vmatmul.f32.gmra.mxu0 %v1621
  %v1779 = vpop.f32.mrf.mxu0
  %v1780 = vadd.f32 %v1700, %v1779
  %1781 = vdwg.mxu0
  %v1782 = vadd.f32 %v1720, %v332
  %v1783 = vadd.f32 %v1740, %v333
  %v1784 = vadd.f32 %v1760, %v334
  %v1785 = vadd.f32 %v1780, %v335
  %v1786 = vmul.f32 %v1782, 0.5
  %v1787 = vtanh.pop %v1786
  %v1788 = vmul.f32 %v1787, 0.5
  %v1789 = vadd.f32 %v1788, 0.5
  %v1790 = vmul.f32 %v1783, 0.5
  %v1791 = vtanh.pop %v1790
  %v1792 = vmul.f32 %v1791, 0.5
  %v1793 = vadd.f32 %v1792, 0.5
  %v1794 = vtanh.pop %v1784
  %v1795 = vmul.f32 %v1785, 0.5
  %v1796 = vtanh.pop %v1795
  %v1797 = vmul.f32 %v1796, 0.5
  %v1798 = vadd.f32 %v1797, 0.5
  %v1799 = vmul.f32 %v1793, %v1618
  %v1800 = vmul.f32 %v1789, %v1794
  %v1801 = vadd.f32 %v1799, %v1800
  %v1802 = vtanh.pop %v1801
  %v1803 = vmul.f32 %v1798, %v1802
  %v1804 = vld [vmem:[%s9] sm:$0xff]
  %v1805 = vld [vmem:[%s9 + $0x8] sm:$0xff]
  %v1806 = vld [vmem:[%s9 + $0x10] sm:$0xff]
  %v1807 = vld [vmem:[%s9 + $0x18] sm:$0xff]
  %v1808 = vld [vmem:[%s9 + $0x20] sm:$0xff]
  %v1809 = vld [vmem:[%s9 + $0x28] sm:$0xff]
  %v1810 = vld [vmem:[%s9 + $0x30] sm:$0xff]
  %v1811 = vld [vmem:[%s9 + $0x38] sm:$0xff]
  %v1812 = vld [vmem:[%s9 + $0x40] sm:$0xff]
  %v1813 = vld [vmem:[%s9 + $0x48] sm:$0xff]
  %v1814 = vld [vmem:[%s9 + $0x50] sm:$0xff]
  %v1815 = vld [vmem:[%s9 + $0x58] sm:$0xff]
  %v1816 = vld [vmem:[%s9 + $0x60] sm:$0xff]
  %v1817 = vld [vmem:[%s9 + $0x68] sm:$0xff]
  %v1818 = vld [vmem:[%s9 + $0x70] sm:$0xff]
  %v1819 = vld [vmem:[%s9 + $0x78] sm:$0xff]
  %v1820 = vld [vmem:[%s9 + $0x80] sm:$0xff]
  %v1821 = vld [vmem:[%s9 + $0x88] sm:$0xff]
  %v1822 = vld [vmem:[%s9 + $0x90] sm:$0xff]
  %v1823 = vld [vmem:[%s9 + $0x98] sm:$0xff]
  %v1824 = vld [vmem:[%s9 + $0xa0] sm:$0xff]
  %v1825 = vld [vmem:[%s9 + $0xa8] sm:$0xff]
  %v1826 = vld [vmem:[%s9 + $0xb0] sm:$0xff]
  %v1827 = vld [vmem:[%s9 + $0xb8] sm:$0xff]
  %v1828 = vld [vmem:[%s9 + $0xc0] sm:$0xff]
  %v1829 = vld [vmem:[%s9 + $0xc8] sm:$0xff]
  %v1830 = vld [vmem:[%s9 + $0xd0] sm:$0xff]
  %v1831 = vld [vmem:[%s9 + $0xd8] sm:$0xff]
  %v1832 = vld [vmem:[%s9 + $0xe0] sm:$0xff]
  %v1833 = vld [vmem:[%s9 + $0xe8] sm:$0xff]
  %v1834 = vld [vmem:[%s9 + $0xf0] sm:$0xff]
  %v1835 = vld [vmem:[%s9 + $0xf8] sm:$0xff]
  %v1836 = vld [vmem:[%s9 + $0x100] sm:$0xff]
  %v1837 = vld [vmem:[%s9 + $0x108] sm:$0xff]
  %v1838 = vld [vmem:[%s9 + $0x110] sm:$0xff]
  %v1839 = vld [vmem:[%s9 + $0x118] sm:$0xff]
  %v1840 = vld [vmem:[%s9 + $0x120] sm:$0xff]
  %v1841 = vld [vmem:[%s9 + $0x128] sm:$0xff]
  %v1842 = vld [vmem:[%s9 + $0x130] sm:$0xff]
  %v1843 = vld [vmem:[%s9 + $0x138] sm:$0xff]
  %v1844 = vld [vmem:[%s9 + $0x140] sm:$0xff]
  %v1845 = vld [vmem:[%s9 + $0x148] sm:$0xff]
  %v1846 = vld [vmem:[%s9 + $0x150] sm:$0xff]
  %v1847 = vld [vmem:[%s9 + $0x158] sm:$0xff]
  %v1848 = vld [vmem:[%s9 + $0x160] sm:$0xff]
  %v1849 = vld [vmem:[%s9 + $0x168] sm:$0xff]
  %v1850 = vld [vmem:[%s9 + $0x170] sm:$0xff]
  %v1851 = vld [vmem:[%s9 + $0x178] sm:$0xff]
  %v1852 = vld [vmem:[%s9 + $0x180] sm:$0xff]
  %v1853 = vld [vmem:[%s9 + $0x188] sm:$0xff]
  %v1854 = vld [vmem:[%s9 + $0x190] sm:$0xff]
  %v1855 = vld [vmem:[%s9 + $0x198] sm:$0xff]
  %v1856 = vld [vmem:[%s9 + $0x1a0] sm:$0xff]
  %v1857 = vld [vmem:[%s9 + $0x1a8] sm:$0xff]
  %v1858 = vld [vmem:[%s9 + $0x1b0] sm:$0xff]
  %v1859 = vld [vmem:[%s9 + $0x1b8] sm:$0xff]
  %v1860 = vld [vmem:[%s9 + $0x1c0] sm:$0xff]
  %v1861 = vld [vmem:[%s9 + $0x1c8] sm:$0xff]
  %v1862 = vld [vmem:[%s9 + $0x1d0] sm:$0xff]
  %v1863 = vld [vmem:[%s9 + $0x1d8] sm:$0xff]
  %v1864 = vld [vmem:[%s9 + $0x1e0] sm:$0xff]
  %v1865 = vld [vmem:[%s9 + $0x1e8] sm:$0xff]
  %v1866 = vld [vmem:[%s9 + $0x1f0] sm:$0xff]
  %v1867 = vld [vmem:[%s9 + $0x1f8] sm:$0xff]
  %v1868 = vld [vmem:[%s9 + $0x200] sm:$0xff]
  %v1869 = vld [vmem:[%s9 + $0x208] sm:$0xff]
  %v1870 = vld [vmem:[%s9 + $0x210] sm:$0xff]
  %v1871 = vld [vmem:[%s9 + $0x218] sm:$0xff]
  %v1872 = vld [vmem:[%s9 + $0x220] sm:$0xff]
  %v1873 = vld [vmem:[%s9 + $0x228] sm:$0xff]
  %v1874 = vld [vmem:[%s9 + $0x230] sm:$0xff]
  %v1875 = vld [vmem:[%s9 + $0x238] sm:$0xff]
  %v1876 = vld [vmem:[%s9 + $0x240] sm:$0xff]
  %v1877 = vld [vmem:[%s9 + $0x248] sm:$0xff]
  %v1878 = vld [vmem:[%s9 + $0x250] sm:$0xff]
  %v1879 = vld [vmem:[%s9 + $0x258] sm:$0xff]
  %v1880 = vld [vmem:[%s9 + $0x260] sm:$0xff]
  %v1881 = vld [vmem:[%s9 + $0x268] sm:$0xff]
  %v1882 = vld [vmem:[%s9 + $0x270] sm:$0xff]
  %v1883 = vld [vmem:[%s9 + $0x278] sm:$0xff]
  %v1884 = vld [vmem:[%s9 + $0x280] sm:$0xff]
  %v1885 = vld [vmem:[%s9 + $0x288] sm:$0xff]
  %v1886 = vld [vmem:[%s9 + $0x290] sm:$0xff]
  %v1887 = vld [vmem:[%s9 + $0x298] sm:$0xff]
  %v1888 = vld [vmem:[%s9 + $0x2a0] sm:$0xff]
  %v1889 = vld [vmem:[%s9 + $0x2a8] sm:$0xff]
  %v1890 = vld [vmem:[%s9 + $0x2b0] sm:$0xff]
  %v1891 = vld [vmem:[%s9 + $0x2b8] sm:$0xff]
  %v1892 = vld [vmem:[%s9 + $0x2c0] sm:$0xff]
  %v1893 = vld [vmem:[%s9 + $0x2c8] sm:$0xff]
  %v1894 = vld [vmem:[%s9 + $0x2d0] sm:$0xff]
  %v1895 = vld [vmem:[%s9 + $0x2d8] sm:$0xff]
  %v1896 = vld [vmem:[%s9 + $0x2e0] sm:$0xff]
  %v1897 = vld [vmem:[%s9 + $0x2e8] sm:$0xff]
  %v1898 = vld [vmem:[%s9 + $0x2f0] sm:$0xff]
  %v1899 = vld [vmem:[%s9 + $0x2f8] sm:$0xff]
  %v1900 = vld [vmem:[%s9 + $0x300] sm:$0xff]
  %v1901 = vld [vmem:[%s9 + $0x308] sm:$0xff]
  %v1902 = vld [vmem:[%s9 + $0x310] sm:$0xff]
  %v1903 = vld [vmem:[%s9 + $0x318] sm:$0xff]
  %v1904 = vld [vmem:[%s9 + $0x320] sm:$0xff]
  %v1905 = vld [vmem:[%s9 + $0x328] sm:$0xff]
  %v1906 = vld [vmem:[%s9 + $0x330] sm:$0xff]
  %v1907 = vld [vmem:[%s9 + $0x338] sm:$0xff]
  %v1908 = vld [vmem:[%s9 + $0x340] sm:$0xff]
  %v1909 = vld [vmem:[%s9 + $0x348] sm:$0xff]
  %v1910 = vld [vmem:[%s9 + $0x350] sm:$0xff]
  %v1911 = vld [vmem:[%s9 + $0x358] sm:$0xff]
  %v1912 = vld [vmem:[%s9 + $0x360] sm:$0xff]
  %v1913 = vld [vmem:[%s9 + $0x368] sm:$0xff]
  %v1914 = vld [vmem:[%s9 + $0x370] sm:$0xff]
  %v1915 = vld [vmem:[%s9 + $0x378] sm:$0xff]
  %v1916 = vld [vmem:[%s9 + $0x380] sm:$0xff]
  %v1917 = vld [vmem:[%s9 + $0x388] sm:$0xff]
  %v1918 = vld [vmem:[%s9 + $0x390] sm:$0xff]
  %v1919 = vld [vmem:[%s9 + $0x398] sm:$0xff]
  %v1920 = vld [vmem:[%s9 + $0x3a0] sm:$0xff]
  %v1921 = vld [vmem:[%s9 + $0x3a8] sm:$0xff]
  %v1922 = vld [vmem:[%s9 + $0x3b0] sm:$0xff]
  %v1923 = vld [vmem:[%s9 + $0x3b8] sm:$0xff]
  %v1924 = vld [vmem:[%s9 + $0x3c0] sm:$0xff]
  %v1925 = vld [vmem:[%s9 + $0x3c8] sm:$0xff]
  %v1926 = vld [vmem:[%s9 + $0x3d0] sm:$0xff]
  %v1927 = vld [vmem:[%s9 + $0x3d8] sm:$0xff]
  %v1928 = vld [vmem:[%s9 + $0x3e0] sm:$0xff]
  %v1929 = vld [vmem:[%s9 + $0x3e8] sm:$0xff]
  %v1930 = vld [vmem:[%s9 + $0x3f0] sm:$0xff]
  %v1931 = vld [vmem:[%s9 + $0x3f8] sm:$0xff]
  %v1932 = vld [vmem:[%s10] sm:$0x1]
  %v1934 = vperm.slane %v1932, 0
  %1936 = vmatpush.msra.mxu0 %v1819
  %1937 = vmatpush.msra.mxu0 %v1818
  %1938 = vmatpush.msra.mxu0 %v1817
  %1939 = vmatpush.msra.mxu0 %v1816
  %1940 = vmatpush.msra.mxu0 %v1815
  %1941 = vmatpush.msra.mxu0 %v1814
  %1942 = vmatpush.msra.mxu0 %v1813
  %1943 = vmatpush.msra.mxu0 %v1812
  %1944 = vmatpush.msra.mxu0 %v1811
  %1945 = vmatpush.msra.mxu0 %v1810
  %1946 = vmatpush.msra.mxu0 %v1809
  %1947 = vmatpush.msra.mxu0 %v1808
  %1948 = vmatpush.msra.mxu0 %v1807
  %1949 = vmatpush.msra.mxu0 %v1806
  %1950 = vmatpush.msra.mxu0 %v1805
  %1951 = vmatpush.msra.mxu0 %v1804
  %1952 = vmatmul.f32.gmra.mxu0 %v522
  %v1953 = vpop.f32.mrf.mxu0
  %v1954 = vadd.f32 %v1934, %v1953
  %1955 = vdwg.mxu0
  %1956 = vmatpush.msra.mxu0 %v1835
  %1957 = vmatpush.msra.mxu0 %v1834
  %1958 = vmatpush.msra.mxu0 %v1833
  %1959 = vmatpush.msra.mxu0 %v1832
  %1960 = vmatpush.msra.mxu0 %v1831
  %1961 = vmatpush.msra.mxu0 %v1830
  %1962 = vmatpush.msra.mxu0 %v1829
  %1963 = vmatpush.msra.mxu0 %v1828
  %1964 = vmatpush.msra.mxu0 %v1827
  %1965 = vmatpush.msra.mxu0 %v1826
  %1966 = vmatpush.msra.mxu0 %v1825
  %1967 = vmatpush.msra.mxu0 %v1824
  %1968 = vmatpush.msra.mxu0 %v1823
  %1969 = vmatpush.msra.mxu0 %v1822
  %1970 = vmatpush.msra.mxu0 %v1821
  %1971 = vmatpush.msra.mxu0 %v1820
  %1972 = vmatmul.f32.gmra.mxu0 %v705
  %v1973 = vpop.f32.mrf.mxu0
  %v1974 = vadd.f32 %v1954, %v1973
  %1975 = vdwg.mxu0
  %1976 = vmatpush.msra.mxu0 %v1851
  %1977 = vmatpush.msra.mxu0 %v1850
  %1978 = vmatpush.msra.mxu0 %v1849
  %1979 = vmatpush.msra.mxu0 %v1848
  %1980 = vmatpush.msra.mxu0 %v1847
  %1981 = vmatpush.msra.mxu0 %v1846
  %1982 = vmatpush.msra.mxu0 %v1845
  %1983 = vmatpush.msra.mxu0 %v1844
  %1984 = vmatpush.msra.mxu0 %v1843
  %1985 = vmatpush.msra.mxu0 %v1842
  %1986 = vmatpush.msra.mxu0 %v1841
  %1987 = vmatpush.msra.mxu0 %v1840
  %1988 = vmatpush.msra.mxu0 %v1839
  %1989 = vmatpush.msra.mxu0 %v1838
  %1990 = vmatpush.msra.mxu0 %v1837
  %1991 = vmatpush.msra.mxu0 %v1836
  %1992 = vmatmul.f32.gmra.mxu0 %v888
  %v1993 = vpop.f32.mrf.mxu0
  %v1994 = vadd.f32 %v1974, %v1993
  %1995 = vdwg.mxu0
  %1996 = vmatpush.msra.mxu0 %v1867
  %1997 = vmatpush.msra.mxu0 %v1866
  %1998 = vmatpush.msra.mxu0 %v1865
  %1999 = vmatpush.msra.mxu0 %v1864
  %2000 = vmatpush.msra.mxu0 %v1863
  %2001 = vmatpush.msra.mxu0 %v1862
  %2002 = vmatpush.msra.mxu0 %v1861
  %2003 = vmatpush.msra.mxu0 %v1860
  %2004 = vmatpush.msra.mxu0 %v1859
  %2005 = vmatpush.msra.mxu0 %v1858
  %2006 = vmatpush.msra.mxu0 %v1857
  %2007 = vmatpush.msra.mxu0 %v1856
  %2008 = vmatpush.msra.mxu0 %v1855
  %2009 = vmatpush.msra.mxu0 %v1854
  %2010 = vmatpush.msra.mxu0 %v1853
  %2011 = vmatpush.msra.mxu0 %v1852
  %2012 = vmatmul.f32.gmra.mxu0 %v1071
  %v2013 = vpop.f32.mrf.mxu0
  %v2014 = vadd.f32 %v1994, %v2013
  %2015 = vdwg.mxu0
  %2016 = vmatpush.msra.mxu0 %v1883
  %2017 = vmatpush.msra.mxu0 %v1882
  %2018 = vmatpush.msra.mxu0 %v1881
  %2019 = vmatpush.msra.mxu0 %v1880
  %2020 = vmatpush.msra.mxu0 %v1879
  %2021 = vmatpush.msra.mxu0 %v1878
  %2022 = vmatpush.msra.mxu0 %v1877
  %2023 = vmatpush.msra.mxu0 %v1876
  %2024 = vmatpush.msra.mxu0 %v1875
  %2025 = vmatpush.msra.mxu0 %v1874
  %2026 = vmatpush.msra.mxu0 %v1873
  %2027 = vmatpush.msra.mxu0 %v1872
  %2028 = vmatpush.msra.mxu0 %v1871
  %2029 = vmatpush.msra.mxu0 %v1870
  %2030 = vmatpush.msra.mxu0 %v1869
  %2031 = vmatpush.msra.mxu0 %v1868
  %2032 = vmatmul.f32.gmra.mxu0 %v1254
  %v2033 = vpop.f32.mrf.mxu0
  %v2034 = vadd.f32 %v2014, %v2033
  %2035 = vdwg.mxu0
  %2036 = vmatpush.msra.mxu0 %v1899
  %2037 = vmatpush.msra.mxu0 %v1898
  %2038 = vmatpush.msra.mxu0 %v1897
  %2039 = vmatpush.msra.mxu0 %v1896
  %2040 = vmatpush.msra.mxu0 %v1895
  %2041 = vmatpush.msra.mxu0 %v1894
  %2042 = vmatpush.msra.mxu0 %v1893
  %2043 = vmatpush.msra.mxu0 %v1892
  %2044 = vmatpush.msra.mxu0 %v1891
  %2045 = vmatpush.msra.mxu0 %v1890
  %2046 = vmatpush.msra.mxu0 %v1889
  %2047 = vmatpush.msra.mxu0 %v1888
  %2048 = vmatpush.msra.mxu0 %v1887
  %2049 = vmatpush.msra.mxu0 %v1886
  %2050 = vmatpush.msra.mxu0 %v1885
  %2051 = vmatpush.msra.mxu0 %v1884
  %2052 = vmatmul.f32.gmra.mxu0 %v1437
  %v2053 = vpop.f32.mrf.mxu0
  %v2054 = vadd.f32 %v2034, %v2053
  %2055 = vdwg.mxu0
  %2056 = vmatpush.msra.mxu0 %v1915
  %2057 = vmatpush.msra.mxu0 %v1914
  %2058 = vmatpush.msra.mxu0 %v1913
  %2059 = vmatpush.msra.mxu0 %v1912
  %2060 = vmatpush.msra.mxu0 %v1911
  %2061 = vmatpush.msra.mxu0 %v1910
  %2062 = vmatpush.msra.mxu0 %v1909
  %2063 = vmatpush.msra.mxu0 %v1908
  %2064 = vmatpush.msra.mxu0 %v1907
  %2065 = vmatpush.msra.mxu0 %v1906
  %2066 = vmatpush.msra.mxu0 %v1905
  %2067 = vmatpush.msra.mxu0 %v1904
  %2068 = vmatpush.msra.mxu0 %v1903
  %2069 = vmatpush.msra.mxu0 %v1902
  %2070 = vmatpush.msra.mxu0 %v1901
  %2071 = vmatpush.msra.mxu0 %v1900
  %2072 = vmatmul.f32.gmra.mxu0 %v1620
  %v2073 = vpop.f32.mrf.mxu0
  %v2074 = vadd.f32 %v2054, %v2073
  %2075 = vdwg.mxu0
  %2076 = vmatpush.msra.mxu0 %v1931
  %2077 = vmatpush.msra.mxu0 %v1930
  %2078 = vmatpush.msra.mxu0 %v1929
  %2079 = vmatpush.msra.mxu0 %v1928
  %2080 = vmatpush.msra.mxu0 %v1927
  %2081 = vmatpush.msra.mxu0 %v1926
  %2082 = vmatpush.msra.mxu0 %v1925
  %2083 = vmatpush.msra.mxu0 %v1924
  %2084 = vmatpush.msra.mxu0 %v1923
  %2085 = vmatpush.msra.mxu0 %v1922
  %2086 = vmatpush.msra.mxu0 %v1921
  %2087 = vmatpush.msra.mxu0 %v1920
  %2088 = vmatpush.msra.mxu0 %v1919
  %2089 = vmatpush.msra.mxu0 %v1918
  %2090 = vmatpush.msra.mxu0 %v1917
  %2091 = vmatpush.msra.mxu0 %v1916
  %2092 = vmatmul.f32.gmra.mxu0 %v1803
  %v2093 = vpop.f32.mrf.mxu0
  %v2094 = vadd.f32 %v2074, %v2093
  %2095 = vdwg.mxu0
  %2096 = vst [vmem:[%s17] sm:$0x3] %v2094
  %2097 = vst [vmem:[%s18] sm:$0x3] %v1803
  %2098 = vst [vmem:[%s19] sm:$0x3] %v1801
  %v2099 = vld [vmem:[%s11] sm:$0xff]
  %v2100 = vld [vmem:[%s11 + $0x8] sm:$0xff]
  %v2101 = vld [vmem:[%s11 + $0x10] sm:$0xff]
  %v2102 = vld [vmem:[%s11 + $0x18] sm:$0xff]
  %v2103 = vld [vmem:[%s11 + $0x20] sm:$0xff]
  %v2104 = vld [vmem:[%s11 + $0x28] sm:$0xff]
  %v2105 = vld [vmem:[%s11 + $0x30] sm:$0xff]
  %v2106 = vld [vmem:[%s11 + $0x38] sm:$0xff]
  %v2107 = vld [vmem:[%s11 + $0x40] sm:$0xff]
  %v2108 = vld [vmem:[%s11 + $0x48] sm:$0xff]
  %v2109 = vld [vmem:[%s11 + $0x50] sm:$0xff]
  %v2110 = vld [vmem:[%s11 + $0x58] sm:$0xff]
  %v2111 = vld [vmem:[%s11 + $0x60] sm:$0xff]
  %v2112 = vld [vmem:[%s11 + $0x68] sm:$0xff]
  %v2113 = vld [vmem:[%s11 + $0x70] sm:$0xff]
  %v2114 = vld [vmem:[%s11 + $0x78] sm:$0xff]
  %v2115 = vld [vmem:[#allocation2] sm:$0x1]
  %v2117 = vperm.slane %v2115, 0
  %2119 = vmatpush.msra.mxu0 %v2114
  %2120 = vmatpush.msra.mxu0 %v2113
  %2121 = vmatpush.msra.mxu0 %v2112
  %2122 = vmatpush.msra.mxu0 %v2111
  %2123 = vmatpush.msra.mxu0 %v2110
  %2124 = vmatpush.msra.mxu0 %v2109
  %2125 = vmatpush.msra.mxu0 %v2108
  %2126 = vmatpush.msra.mxu0 %v2107
  %2127 = vmatpush.msra.mxu0 %v2106
  %2128 = vmatpush.msra.mxu0 %v2105
  %2129 = vmatpush.msra.mxu0 %v2104
  %2130 = vmatpush.msra.mxu0 %v2103
  %2131 = vmatpush.msra.mxu0 %v2102
  %2132 = vmatpush.msra.mxu0 %v2101
  %2133 = vmatpush.msra.mxu0 %v2100
  %2134 = vmatpush.msra.mxu0 %v2099
  %2135 = vmatmul.f32.gmra.mxu0 %v171
  %v2136 = vpop.f32.mrf.mxu0
  %v2137 = vadd.f32 %v2117, %v2136
  %2138 = vdwg.mxu0
  %v2139 = vmax.f32 %v2137, 0.0
  %v2140 = vld [vmem:[%s13] sm:$0xff]
  %v2141 = vld [vmem:[%s13 + $0x8] sm:$0xff]
  %v2142 = vld [vmem:[%s13 + $0x10] sm:$0xff]
  %v2143 = vld [vmem:[%s13 + $0x18] sm:$0xff]
  %v2144 = vld [vmem:[%s13 + $0x20] sm:$0xff]
  %v2145 = vld [vmem:[%s13 + $0x28] sm:$0xff]
  %v2146 = vld [vmem:[%s13 + $0x30] sm:$0xff]
  %v2147 = vld [vmem:[%s13 + $0x38] sm:$0xff]
  %v2148 = vld [vmem:[%s13 + $0x40] sm:$0xff]
  %v2149 = vld [vmem:[%s13 + $0x48] sm:$0xff]
  %v2150 = vld [vmem:[%s13 + $0x50] sm:$0xff]
  %v2151 = vld [vmem:[%s13 + $0x58] sm:$0xff]
  %v2152 = vld [vmem:[%s13 + $0x60] sm:$0xff]
  %v2153 = vld [vmem:[%s13 + $0x68] sm:$0xff]
  %v2154 = vld [vmem:[%s13 + $0x70] sm:$0xff]
  %v2155 = vld [vmem:[%s13 + $0x78] sm:$0xff]
  %v2156 = vld [vmem:[%s14] sm:$0x1]
  %v2158 = vperm.slane %v2156, 0
  %2160 = vmatpush.msra.mxu0 %v2155
  %2161 = vmatpush.msra.mxu0 %v2154
  %2162 = vmatpush.msra.mxu0 %v2153
  %2163 = vmatpush.msra.mxu0 %v2152
  %2164 = vmatpush.msra.mxu0 %v2151
  %2165 = vmatpush.msra.mxu0 %v2150
  %2166 = vmatpush.msra.mxu0 %v2149
  %2167 = vmatpush.msra.mxu0 %v2148
  %2168 = vmatpush.msra.mxu0 %v2147
  %2169 = vmatpush.msra.mxu0 %v2146
  %2170 = vmatpush.msra.mxu0 %v2145
  %2171 = vmatpush.msra.mxu0 %v2144
  %2172 = vmatpush.msra.mxu0 %v2143
  %2173 = vmatpush.msra.mxu0 %v2142
  %2174 = vmatpush.msra.mxu0 %v2141
  %2175 = vmatpush.msra.mxu0 %v2140
  %2176 = vmatmul.f32.gmra.mxu0 %v172
  %v2177 = vpop.f32.mrf.mxu0
  %v2178 = vadd.f32 %v2158, %v2177
  %2179 = vdwg.mxu0
  %vm2180 = vcmp.gt.f32.partialorder %v2178, 0.0
  %v2181 = vmul.f32 %v2178, 0.01
  %v2182 = vsel %vm2180, %v2178, %v2181
  %v2183 = vld [vmem:[%s15] sm:$0xff]
  %v2184 = vld [vmem:[%s15 + $0x8] sm:$0xff]
  %v2185 = vld [vmem:[%s15 + $0x10] sm:$0xff]
  %v2186 = vld [vmem:[%s15 + $0x18] sm:$0xff]
  %v2187 = vld [vmem:[%s15 + $0x20] sm:$0xff]
  %v2188 = vld [vmem:[%s15 + $0x28] sm:$0xff]
  %v2189 = vld [vmem:[%s15 + $0x30] sm:$0xff]
  %v2190 = vld [vmem:[%s15 + $0x38] sm:$0xff]
  %v2191 = vld [vmem:[%s15 + $0x40] sm:$0xff]
  %v2192 = vld [vmem:[%s15 + $0x48] sm:$0xff]
  %v2193 = vld [vmem:[%s15 + $0x50] sm:$0xff]
  %v2194 = vld [vmem:[%s15 + $0x58] sm:$0xff]
  %v2195 = vld [vmem:[%s15 + $0x60] sm:$0xff]
  %v2196 = vld [vmem:[%s15 + $0x68] sm:$0xff]
  %v2197 = vld [vmem:[%s15 + $0x70] sm:$0xff]
  %v2198 = vld [vmem:[%s15 + $0x78] sm:$0xff]
  %v2199 = vld [vmem:[%s16] sm:$0x1]
  %v2201 = vperm.slane %v2199, 0
  %2203 = vmatpush.msra.mxu0 %v2198
  %2204 = vmatpush.msra.mxu0 %v2197
  %2205 = vmatpush.msra.mxu0 %v2196
  %2206 = vmatpush.msra.mxu0 %v2195
  %2207 = vmatpush.msra.mxu0 %v2194
  %2208 = vmatpush.msra.mxu0 %v2193
  %2209 = vmatpush.msra.mxu0 %v2192
  %2210 = vmatpush.msra.mxu0 %v2191
  %2211 = vmatpush.msra.mxu0 %v2190
  %2212 = vmatpush.msra.mxu0 %v2189
  %2213 = vmatpush.msra.mxu0 %v2188
  %2214 = vmatpush.msra.mxu0 %v2187
  %2215 = vmatpush.msra.mxu0 %v2186
  %2216 = vmatpush.msra.mxu0 %v2185
  %2217 = vmatpush.msra.mxu0 %v2184
  %2218 = vmatpush.msra.mxu0 %v2183
  %2219 = vmatmul.f32.gmra.mxu0 %v2182
  %v2220 = vpop.f32.mrf.mxu0
  %v2221 = vadd.f32 %v2201, %v2220
  %2222 = vdwg.mxu0
  %vm2223 = vcmask 9216
  %v2224 = vsel %vm2223, %v2221, -inf
  %2225 = vmax.xlane.f32.xlu0 %v2224
  %v2226 = vpop.xlane.xlu0 %2225
  %v2227 = vsub.f32 %v2221, %v2226
  %v2228 = vmul.f32 %v2227, 1.442695
  %v2229 = vpow.pop %v2228
  %v2230 = vsel %vm2223, %v2229, 0.0
  %2231 = vadd.xlane.f32.xlu0 %v2230
  %v2232 = vpop.xlane.xlu0 %2231
  %v2233 = vrcp.pop %v2232
  %v2234 = vmul.f32 %v2232, %v2233
  %v2235 = vsub.f32 1.0, %v2234
  %v2236 = vmul.f32 %v2233, %v2235
  %v2237 = vadd.f32 %v2233, %v2236
  %vm2238 = vweird.f32 %v2232
  %vm2239 = vweird.f32 %v2233
  %vm2240 = vmor %vm2238, %vm2239
  %v2241 = vsel %vm2240, %v2233, %v2237
  %v2242 = vand.u32 2147483647, %v2232
  %vm2243 = vcmp.eq.f32.partialorder %v2242, 8.507059e+37
  %v2244 = vand.u32 %v2232, 2147483648
  %v2245 = vor.u32 1.1754944e-38, %v2244
  %v2246 = vsel %vm2243, %v2245, %v2241
  %v2247 = vmul.f32 %v2229, %v2246
  %2248 = vst [vmem:[%s20] sm:$0x3] 0.0
  %2250 = vrot.lane.b32.xlu0 %v2247, 1
  %v2251 = vpop.permute.xlu0 %2250
  %vm2253 = vcmask 7168
  %v2254 = vsel %vm2253, %v2139, %v2251
  %vm2255 = vcmask 17408
  %2256 = vst.msk [vmem:[%s20] sm:$0x3] %vm2255, %v2254
  // Predicated region
  $region70: #{decoder_rnn_forward.1} parent=0 // pred_check
    _
  $region71: #{decoder_rnn_forward.1} parent=0 // pred_check_branch
    %2258 = sbr.rel (0) target = $region73
  $region72: #{decoder_rnn_forward.1} parent=0 // pred_region
    _
  $region73: #{decoder_rnn_forward.1} parent=0 // pred_fallthru
    _
  // Predicated region
  $region74: #{decoder_rnn_forward.1} parent=0 // pred_check
    _
  $region75: #{decoder_rnn_forward.1} parent=0 // pred_check_branch
    %2260 = sbr.rel (0) target = $region77
  $region76: #{decoder_rnn_forward.1} parent=0 // pred_region
    _
  $region77: #{decoder_rnn_forward.1} parent=0 // pred_fallthru
    _
  // Predicated region
  $region78: #{decoder_rnn_forward.1} parent=0 // pred_check
    _
  $region79: #{decoder_rnn_forward.1} parent=0 // pred_check_branch
    %2262 = sbr.rel (0) target = $region81
  $region80: #{decoder_rnn_forward.1} parent=0 // pred_region
    _
  $region81: #{decoder_rnn_forward.1} parent=0 // pred_fallthru
    _
  // Predicated region
  $region82: #{decoder_rnn_forward.1} parent=0 // pred_check
    _
  $region83: #{decoder_rnn_forward.1} parent=0 // pred_check_branch
    %2264 = sbr.rel (0) target = $region85
  $region84: #{decoder_rnn_forward.1} parent=0 // pred_region
    _
  $region85: #{decoder_rnn_forward.1} parent=0 // pred_fallthru
    _
  // Predicated region
  $region86: #{decoder_rnn_forward.1} parent=0 // pred_check
    _
  $region87: #{decoder_rnn_forward.1} parent=0 // pred_check_branch
    %2266 = sbr.rel (0) target = $region89
  $region88: #{decoder_rnn_forward.1} parent=0 // pred_region
    _
  $region89: #{decoder_rnn_forward.1} parent=0 // pred_fallthru
    _
  // Predicated region
  $region90: #{decoder_rnn_forward.1} parent=0 // pred_check
    _
  $region91: #{decoder_rnn_forward.1} parent=0 // pred_check_branch
    %2268 = sbr.rel (0) target = $region93
  $region92: #{decoder_rnn_forward.1} parent=0 // pred_region
    _
  $region93: #{decoder_rnn_forward.1} parent=0 // pred_fallthru
    _
  // Predicated region
  $region94: #{decoder_rnn_forward.1} parent=0 // pred_check
    _
  $region95: #{decoder_rnn_forward.1} parent=0 // pred_check_branch
    %2270 = sbr.rel (0) target = $region97
  $region96: #{decoder_rnn_forward.1} parent=0 // pred_region
    _
  $region97: #{decoder_rnn_forward.1} parent=0 // pred_fallthru
    _
  // Predicated region
  $region98: #{decoder_rnn_forward.1} parent=0 // pred_check
    _
  $region99: #{decoder_rnn_forward.1} parent=0 // pred_check_branch
    %2272 = sbr.rel (0) target = $region101
  $region100: #{decoder_rnn_forward.1} parent=0 // pred_region
    _
  $region101: #{decoder_rnn_forward.1} parent=0 // pred_fallthru
    _

</llo_original>
